<compile_context>
chip_gen: v6e
topology: v6e:2x2x1
jax: 0.10.0
libtpu: 0.0.40
codegen_flags: <defaults>
</compile_context>

<pallas_src>
import functools

import jax
import jax.numpy as jnp
from jax import lax
from jax.experimental import pallas as pl
from jax.experimental.pallas import tpu as pltpu

_EPS = 1e-5
_LANES = 128


def _round_up(x, m):
    return (x + m - 1) // m * m


def _vmem_limit_bytes():
    """~75% of physical VMEM: ~96 MiB on v5e/v6e (128 MiB), ~48 MiB on v7x (64 MiB)."""
    try:
        cap = int(pltpu.get_tpu_info().vmem_capacity_bytes)
    except Exception:
        cap = 64 * 1024 * 1024
    return cap * 3 // 4


def _maxpool2(x):
    """(H, W, C) -> (H//2, W//2, C), MaxPool2d(2).

    TODO(synk): W-direction pool via stride-2 sublane loads (pl.ds stride) would avoid
    the sublane-splitting reshape relayout; reshape kept for guaranteed lowering.
    """
    h, w, c = x.shape
    xh = jnp.max(x.reshape(h // 2, 2, w, c), axis=1)
    return jnp.max(xh.reshape(h // 2, w // 2, 2, c), axis=2)


def _im2col_3x3(x, k_pad):
    """(H, W, C) -> ((H-2)*(W-2), k_pad) patches for a valid 3x3 conv (stem path).

    (di, dj, c) ordering matches a row-major reshape of an HWIO (3,3,C,Co) weight to
    (9*C, Co); the K axis is zero-padded to k_pad (lane multiple) so the single fat
    MXU matmul is lane-dense without padding C itself (Cin << 128 stem conv).
    """
    h, w, c = x.shape
    ho, wo = h - 2, w - 2
    cols = [x[di:di + ho, dj:dj + wo, :] for di in range(3) for dj in range(3)]
    if k_pad > 9 * c:
        cols.append(jnp.zeros((ho, wo, k_pad - 9 * c), x.dtype))
    patches = jnp.concatenate(cols, axis=-1)           # (ho, wo, k_pad)
    return patches.reshape(ho * wo, k_pad)


def _conv3x3_taps(a, w_ref):
    """Valid 3x3 conv as 9 accumulated K=C matmuls (no 9x im2col buffer).

    a: (H, W, C) bf16 activation; w_ref: (9, C, Co) bf16 weight ref.
    Returns ((H-2)*(W-2), Co) float32.
    TODO(synk): for very large spatial tiles, switch to lax.fori_loop over taps with a
    VMEM f32 scratch accumulator + dynamic pl.ds starts to bound live ranges, and add
    a "parallel" spatial-row grid axis (4-pre-pool-row halo) with per-tile stats.
    """
    h, w, c = a.shape
    ho, wo = h - 2, w - 2
    acc = None
    for k in range(9):
        di, dj = k // 3, k % 3
        patch = a[di:di + ho, dj:dj + wo, :].reshape(ho * wo, c)
        term = jnp.dot(patch, w_ref[k], preferred_element_type=jnp.float32)
        acc = term if acc is None else acc + term
    return acc


def _fold_bn(s_ref, g_ref, be_ref, inv_m):
    """One-pass batch stats -> folded (scale, shift), both (1, C) float32."""
    mean = s_ref[0:1, :] * inv_m
    var = jnp.maximum(s_ref[1:2, :] * inv_m - mean * mean, 0.0)
    scale = g_ref[...] * lax.rsqrt(var + _EPS)         # rsqrt -> EUP (free slot)
    shift = be_ref[...] - mean * scale
    return scale, shift


def _pool_conv1_kernel(use_im2col, x_ref, w1_ref, y1_ref, s1_ref):
    """MaxPool2d(2) + conv1 (bf16 MXU) + per-batch BN1 partial sum / sum-of-squares."""
    x = x_ref[0]                                       # (H, W, Cin)
    xp = _maxpool2(x).astype(jnp.bfloat16)             # (H/2, W/2, Cin)
    if use_im2col:                                     # stem: K = round_up(9*Cin, 128)
        patches = _im2col_3x3(xp, w1_ref.shape[0])
        y1 = jnp.dot(patches, w1_ref[...], preferred_element_type=jnp.float32)
    else:                                              # lane-aligned Cin: 9-tap accumulation
        y1 = _conv3x3_taps(xp, w1_ref)
    ho, wo = xp.shape[0] - 2, xp.shape[1] - 2
    # Conv bias intentionally omitted: it cancels exactly against the training-mode
    # BatchNorm mean subtraction that follows.
    y1_ref[...] = y1.reshape(1, ho, wo, y1.shape[-1]).astype(y1_ref.dtype)
    s1_ref[0:1, 0:1, :] = jnp.sum(y1, axis=0, keepdims=True).reshape(1, 1, -1)
    s1_ref[0:1, 1:2, :] = jnp.sum(y1 * y1, axis=0, keepdims=True).reshape(1, 1, -1)


def _bn1_conv2_kernel(inv_m1, y1_ref, s1_ref, g1_ref, be1_ref, w2_ref, y2_ref, s2_ref):
    """Folded BN1 + ReLU + conv2 (9-tap bf16 MXU) + per-batch BN2 partial stats."""
    y1 = y1_ref[0].astype(jnp.float32)                 # (H1, W1, Cpo)
    scale, shift = _fold_bn(s1_ref, g1_ref, be1_ref, inv_m1)
    a1 = jnp.maximum(y1 * scale + shift, 0.0).astype(jnp.bfloat16)
    y2 = _conv3x3_taps(a1, w2_ref)                     # (H2*W2, Cpo) f32
    ho, wo = a1.shape[0] - 2, a1.shape[1] - 2
    y2_ref[...] = y2.reshape(1, ho, wo, y2.shape[-1]).astype(y2_ref.dtype)
    s2_ref[0:1, 0:1, :] = jnp.sum(y2, axis=0, keepdims=True).reshape(1, 1, -1)
    s2_ref[0:1, 1:2, :] = jnp.sum(y2 * y2, axis=0, keepdims=True).reshape(1, 1, -1)


def _bn2_kernel(inv_m2, y2_ref, s2_ref, g2_ref, be2_ref, o_ref):
    """Folded BN2 + ReLU; lane-dense (128-channel padded) output."""
    y2 = y2_ref[0].astype(jnp.float32)                 # (H2, W2, Cpo)
    scale, shift = _fold_bn(s2_ref, g2_ref, be2_ref, inv_m2)
    a2 = jnp.maximum(y2 * scale + shift, 0.0)
    o_ref[...] = a2.reshape(o_ref.shape).astype(o_ref.dtype)


def down_forward(x_nchw, params):
    """(N, Cin, H, W) -> (N, Cout, H//2 - 4, W//2 - 4), NCHW like PyTorch."""
    w1, _b1, g1, be1, w2, _b2, g2, be2 = params        # conv biases unused (BN cancels them)

    N, Cin, H, W = x_nchw.shape
    Cout = w2.shape[-1]
    assert H % 2 == 0 and W % 2 == 0                   # MaxPool2d(2) even-dim assumption
    H1, W1 = H // 2 - 2, W // 2 - 2
    H2, W2 = H1 - 2, W1 - 2
    Cpo = _round_up(Cout, _LANES)

    # NHWC so channels map to TPU lanes.
    # TODO(synk): keep activations NHWC + lane-padded across the whole UNet so the
    # transposes / channel pad+slice happen once per model, not per block.
    x = jnp.transpose(x_nchw, (0, 2, 3, 1))

    if Cin < _LANES:
        # Stem conv: pad the im2col K axis instead of Cin -> no ~9x zero MXU work.
        Cpi = Cin
        K1 = _round_up(9 * Cin, _LANES)
        w1f = jnp.pad(w1.reshape(9 * Cin, Cout),
                      ((0, K1 - 9 * Cin), (0, Cpo - Cout))).astype(jnp.bfloat16)
        w1_spec = pl.BlockSpec((K1, Cpo), lambda n: (0, 0))
        kernel1 = functools.partial(_pool_conv1_kernel, True)
    else:
        Cpi = _round_up(Cin, _LANES)
        x = jnp.pad(x, ((0, 0), (0, 0), (0, 0), (0, Cpi - Cin)))
        w1f = jnp.pad(w1, ((0, 0), (0, 0), (0, Cpi - Cin), (0, Cpo - Cout))
                      ).reshape(9, Cpi, Cpo).astype(jnp.bfloat16)
        w1_spec = pl.BlockSpec((9, Cpi, Cpo), lambda n: (0, 0, 0))
        kernel1 = functools.partial(_pool_conv1_kernel, False)

    w2f = jnp.pad(w2, ((0, 0), (0, 0), (0, Cpo - Cout), (0, Cpo - Cout))
                  ).reshape(9, Cpo, Cpo).astype(jnp.bfloat16)
    pad_c = lambda v: jnp.pad(v, (0, Cpo - Cout)).reshape(1, Cpo)
    g1p, be1p, g2p, be2p = pad_c(g1), pad_c(be1), pad_c(g2), pad_c(be2)

    # All passes are batch-parallel (BN stats are per-batch partials reduced below),
    # so the v7x megacore shards every pass across both TensorCores.
    cparams = pltpu.CompilerParams(
        dimension_semantics=("parallel",), vmem_limit_bytes=_vmem_limit_bytes())

    def full2(shape):                                  # whole 2-D array resident in VMEM
        return pl.BlockSpec(shape, lambda n: (0, 0))

    def batch_spec(shape):                             # one batch element per grid step
        nd = len(shape)
        return pl.BlockSpec((1,) + shape, lambda n: (n,) + (0,) * nd)

    # Pass 1: MaxPool2d(2) + conv1 (bf16 MXU) + per-batch BN1 partial statistics.
    y1_raw, s1p = pl.pallas_call(
        kernel1,
        grid=(N,),
        in_specs=[batch_spec((H, W, Cpi)), w1_spec],
        out_specs=(batch_spec((H1, W1, Cpo)), batch_spec((2, Cpo))),
        out_shape=(jax.ShapeDtypeStruct((N, H1, W1, Cpo), jnp.bfloat16),
                   jax.ShapeDtypeStruct((N, 2, Cpo), jnp.float32)),
        compiler_params=cparams,
    )(x, w1f)
    s1 = jnp.sum(s1p, axis=0)                          # exact batch stats; tiny reduction

    # Pass 2: folded BN1 + ReLU + conv2 (9-tap bf16 MXU) + per-batch BN2 partial stats.
    y2_raw, s2p = pl.pallas_call(
        functools.partial(_bn1_conv2_kernel, 1.0 / (N * H1 * W1)),
        grid=(N,),
        in_specs=[batch_spec((H1, W1, Cpo)), full2((2, Cpo)),
                  full2((1, Cpo)), full2((1, Cpo)),
                  pl.BlockSpec((9, Cpo, Cpo), lambda n: (0, 0, 0))],
        out_specs=(batch_spec((H2, W2, Cpo)), batch_spec((2, Cpo))),
        out_shape=(jax.ShapeDtypeStruct((N, H2, W2, Cpo), jnp.bfloat16),
                   jax.ShapeDtypeStruct((N, 2, Cpo), jnp.float32)),
        compiler_params=cparams,
    )(y1_raw, s1, g1p, be1p, w2f)
    s2 = jnp.sum(s2p, axis=0)

    # Pass 3: folded BN2 + ReLU (lane-dense 128-channel output; padding sliced below).
    out = pl.pallas_call(
        functools.partial(_bn2_kernel, 1.0 / (N * H2 * W2)),
        grid=(N,),
        in_specs=[batch_spec((H2, W2, Cpo)), full2((2, Cpo)),
                  full2((1, Cpo)), full2((1, Cpo))],
        out_specs=batch_spec((H2, W2, Cpo)),
        out_shape=jax.ShapeDtypeStruct((N, H2, W2, Cpo), x_nchw.dtype),
        compiler_params=cparams,
    )(y2_raw, s2, g2p, be2p)

    return jnp.transpose(out[..., :Cout], (0, 3, 1, 2))


def init_params(key, in_channels, out_channels):
    """Deterministic synthetic parameters (shapes as in the PyTorch module)."""
    k1, k2, k3, k4 = jax.random.split(key, 4)
    # conv weights stored HWIO (3, 3, Cin, Cout)
    w1 = jax.random.normal(k1, (3, 3, in_channels, out_channels),
                           jnp.float32) / jnp.sqrt(9.0 * in_channels)
    b1 = 0.1 * jax.random.normal(k2, (out_channels,), jnp.float32)
    g1 = jnp.ones((out_channels,), jnp.float32)    # BatchNorm weight init
    be1 = jnp.zeros((out_channels,), jnp.float32)  # BatchNorm bias init
    w2 = jax.random.normal(k3, (3, 3, out_channels, out_channels),
                           jnp.float32) / jnp.sqrt(9.0 * out_channels)
    b2 = 0.1 * jax.random.normal(k4, (out_channels,), jnp.float32)
    g2 = jnp.ones((out_channels,), jnp.float32)
    be2 = jnp.zeros((out_channels,), jnp.float32)
    return (w1, b1, g1, be1, w2, b2, g2, be2)


def down_reference(x_nchw, params):
    """Pure-JAX f32 reference (mirrors PyTorch forward, incl. conv biases)."""
    w1, b1, g1, be1, w2, b2, g2, be2 = params
    xp = lax.reduce_window(x_nchw, -jnp.inf, lax.max,
                           (1, 1, 2, 2), (1, 1, 2, 2), 'VALID')

    def conv_bn_relu(x, w, b, g, be):
        y = lax.conv_general_dilated(
            x, w, (1, 1), 'VALID',
            dimension_numbers=('NCHW', 'HWIO', 'NCHW'))
        y = y + b[None, :, None, None]
        mean = jnp.mean(y, axis=(0, 2, 3), keepdims=True)
        var = jnp.mean((y - mean) ** 2, axis=(0, 2, 3), keepdims=True)
        yn = (y - mean) / jnp.sqrt(var + _EPS)
        return jnp.maximum(yn * g[None, :, None, None] + be[None, :, None, None], 0.0)

    y = conv_bn_relu(xp, w1, b1, g1, be1)
    y = conv_bn_relu(y, w2, b2, g2, be2)
    return y


if __name__ == "__main__":
    key = jax.random.PRNGKey(0)
    kx, kp = jax.random.split(key)

    N, Cin, H, W = 2, 4, 16, 16
    Cout = 8
    x = jax.random.normal(kx, (N, Cin, H, W), jnp.float32)
    params = init_params(kp, Cin, Cout)

    out = jax.block_until_ready(jax.jit(down_forward)(x, params))
    ref = jax.block_until_ready(down_reference(x, params))

    assert out.shape == (N, Cout, H // 2 - 4, W // 2 - 4), out.shape
    err = jnp.abs(out - ref)
    max_err = float(jnp.max(err))
    mean_err = float(jnp.mean(err))
    # Tolerance relaxed vs. the f32 reference because conv operands and the inter-pass
    # activations are bfloat16 (per perf review); BN statistics remain f32.
    assert max_err < 1.5e-1, (max_err, mean_err)
    assert mean_err < 3e-2, (max_err, mean_err)

    print("KERNEL_OK")
</pallas_src>

<mosaic_0001>
module attributes {stable_mosaic.version = 11 : i64} {
  func.func @_pool_conv1_kernel(%arg0: i32, %arg1: memref<1x16x16x4xf32, #tpu.memory_space<vmem>>, %arg2: memref<128x128xbf16, #tpu.memory_space<vmem>>, %arg3: memref<1x6x6x128xbf16, #tpu.memory_space<vmem>>, %arg4: memref<1x2x128xf32, #tpu.memory_space<vmem>>) attributes {dimension_semantics = [#tpu.dimension_semantics<parallel>], iteration_bounds = array<i64: 2>, scalar_prefetch = 0 : i64, scratch_operands = 0 : i64, tpu.core_type = #tpu.core_type<tc>, window_params = [{transform_indices = @transform_0, window_bounds = array<i64: 1, 16, 16, 4>}, {pipeline_mode = #tpu.pipeline_mode<synchronous>, transform_indices = @transform_1, window_bounds = array<i64: 128, 128>}, {transform_indices = @transform_2, window_bounds = array<i64: 1, 6, 6, 128>}, {transform_indices = @transform_3, window_bounds = array<i64: 1, 2, 128>}]} {
    %c0 = arith.constant 0 : index
    %c0_0 = arith.constant 0 : index
    %c0_1 = arith.constant 0 : index
    %c0_2 = arith.constant 0 : index
    %0 = vector.load %arg1[%c0, %c0_0, %c0_1, %c0_2] : memref<1x16x16x4xf32, #tpu.memory_space<vmem>>, vector<1x16x16x4xf32>
    %1 = vector.shape_cast %0 : vector<1x16x16x4xf32> to vector<16x16x4xf32>
    %2 = vector.shape_cast %1 : vector<16x16x4xf32> to vector<8x2x16x4xf32>
    %cst = arith.constant dense<0xFF800000> : vector<8x16x4xf32>
    %3 = vector.multi_reduction <maximumf>, %2, %cst [1] : vector<8x2x16x4xf32> to vector<8x16x4xf32>
    %4 = vector.shape_cast %3 : vector<8x16x4xf32> to vector<8x8x2x4xf32>
    %cst_3 = arith.constant dense<0xFF800000> : vector<8x8x4xf32>
    %5 = vector.multi_reduction <maximumf>, %4, %cst_3 [2] : vector<8x8x2x4xf32> to vector<8x8x4xf32>
    %6 = arith.truncf %5 : vector<8x8x4xf32> to vector<8x8x4xbf16>
    %7 = vector.extract_strided_slice %6 {offsets = [0, 0, 0], sizes = [6, 6, 4], strides = [1, 1, 1]} : vector<8x8x4xbf16> to vector<6x6x4xbf16>
    %8 = vector.extract_strided_slice %6 {offsets = [0, 1, 0], sizes = [6, 6, 4], strides = [1, 1, 1]} : vector<8x8x4xbf16> to vector<6x6x4xbf16>
    %9 = vector.extract_strided_slice %6 {offsets = [0, 2, 0], sizes = [6, 6, 4], strides = [1, 1, 1]} : vector<8x8x4xbf16> to vector<6x6x4xbf16>
    %10 = vector.extract_strided_slice %6 {offsets = [1, 0, 0], sizes = [6, 6, 4], strides = [1, 1, 1]} : vector<8x8x4xbf16> to vector<6x6x4xbf16>
    %11 = vector.extract_strided_slice %6 {offsets = [1, 1, 0], sizes = [6, 6, 4], strides = [1, 1, 1]} : vector<8x8x4xbf16> to vector<6x6x4xbf16>
    %12 = vector.extract_strided_slice %6 {offsets = [1, 2, 0], sizes = [6, 6, 4], strides = [1, 1, 1]} : vector<8x8x4xbf16> to vector<6x6x4xbf16>
    %13 = vector.extract_strided_slice %6 {offsets = [2, 0, 0], sizes = [6, 6, 4], strides = [1, 1, 1]} : vector<8x8x4xbf16> to vector<6x6x4xbf16>
    %14 = vector.extract_strided_slice %6 {offsets = [2, 1, 0], sizes = [6, 6, 4], strides = [1, 1, 1]} : vector<8x8x4xbf16> to vector<6x6x4xbf16>
    %15 = vector.extract_strided_slice %6 {offsets = [2, 2, 0], sizes = [6, 6, 4], strides = [1, 1, 1]} : vector<8x8x4xbf16> to vector<6x6x4xbf16>
    %cst_4 = arith.constant 0.000000e+00 : bf16
    %16 = vector.broadcast %cst_4 : bf16 to vector<6x6x92xbf16>
    %17 = tpu.concatenate %7, %8, %9, %10, %11, %12, %13, %14, %15, %16 in 2 : vector<6x6x4xbf16>, vector<6x6x4xbf16>, vector<6x6x4xbf16>, vector<6x6x4xbf16>, vector<6x6x4xbf16>, vector<6x6x4xbf16>, vector<6x6x4xbf16>, vector<6x6x4xbf16>, vector<6x6x4xbf16>, vector<6x6x92xbf16> -> vector<6x6x128xbf16>
    %18 = vector.shape_cast %17 : vector<6x6x128xbf16> to vector<36x128xbf16>
    %c0_5 = arith.constant 0 : index
    %c0_6 = arith.constant 0 : index
    %19 = vector.load %arg2[%c0_5, %c0_6] : memref<128x128xbf16, #tpu.memory_space<vmem>>, vector<128x128xbf16>
    %cst_7 = arith.constant dense<0.000000e+00> : vector<36x128xf32>
    %20 = tpu.matmul %18, %19, %cst_7 {dimension_numbers = #tpu.dot_dimension_numbers<[1], [0], [0], [1], [0, 0, 1, 1], [], []>} : vector<36x128xbf16>, vector<128x128xbf16>, vector<36x128xf32> -> vector<36x128xf32>
    %21 = vector.shape_cast %20 : vector<36x128xf32> to vector<1x6x6x128xf32>
    %22 = arith.truncf %21 : vector<1x6x6x128xf32> to vector<1x6x6x128xbf16>
    %c0_8 = arith.constant 0 : index
    %c0_9 = arith.constant 0 : index
    %c0_10 = arith.constant 0 : index
    %c0_11 = arith.constant 0 : index
    %23 = vector.load %arg3[%c0_8, %c0_9, %c0_10, %c0_11] : memref<1x6x6x128xbf16, #tpu.memory_space<vmem>>, vector<1x6x6x128xbf16>
    tpu.vector_store %arg3[%c0_8, %c0_9, %c0_10, %c0_11], %22 {strides = array<i32>} : memref<1x6x6x128xbf16, #tpu.memory_space<vmem>>, vector<1x6x6x128xbf16>,
    %cst_12 = arith.constant dense<0.000000e+00> : vector<128xf32>
    %24 = vector.multi_reduction <add>, %20, %cst_12 [0] : vector<36x128xf32> to vector<128xf32>
    %25 = vector.shape_cast %24 : vector<128xf32> to vector<1x128xf32>
    %26 = vector.shape_cast %25 : vector<1x128xf32> to vector<1x1x128xf32>
    %c0_13 = arith.constant 0 : index
    %c0_14 = arith.constant 0 : index
    %c0_15 = arith.constant 0 : index
    %27 = vector.load %arg4[%c0_13, %c0_14, %c0_15] : memref<1x2x128xf32, #tpu.memory_space<vmem>>, vector<1x1x128xf32>
    tpu.vector_store %arg4[%c0_13, %c0_14, %c0_15], %26 {strides = array<i32>} : memref<1x2x128xf32, #tpu.memory_space<vmem>>, vector<1x1x128xf32>,
    %28 = arith.mulf %20, %20 : vector<36x128xf32>
    %cst_16 = arith.constant dense<0.000000e+00> : vector<128xf32>
    %29 = vector.multi_reduction <add>, %28, %cst_16 [0] : vector<36x128xf32> to vector<128xf32>
    %30 = vector.shape_cast %29 : vector<128xf32> to vector<1x128xf32>
    %31 = vector.shape_cast %30 : vector<1x128xf32> to vector<1x1x128xf32>
    %c0_17 = arith.constant 0 : index
    %c1 = arith.constant 1 : index
    %c0_18 = arith.constant 0 : index
    %32 = vector.load %arg4[%c0_17, %c1, %c0_18] : memref<1x2x128xf32, #tpu.memory_space<vmem>>, vector<1x1x128xf32>
    tpu.vector_store %arg4[%c0_17, %c1, %c0_18], %31 {strides = array<i32>} : memref<1x2x128xf32, #tpu.memory_space<vmem>>, vector<1x1x128xf32>,
    return
  }
  func.func @transform_0(%arg0: i32) -> (i32, i32, i32, i32) {
    %c0_i32 = arith.constant 0 : i32
    %c0_i32_0 = arith.constant 0 : i32
    %c0_i32_1 = arith.constant 0 : i32
    %c0_i32_2 = arith.constant 0 : i32
    return %arg0, %c0_i32, %c0_i32_0, %c0_i32_1 : i32, i32, i32, i32
  }
  func.func @transform_1(%arg0: i32) -> (i32, i32) {
    %c0_i32 = arith.constant 0 : i32
    %c0_i32_0 = arith.constant 0 : i32
    %c0_i32_1 = arith.constant 0 : i32
    return %c0_i32, %c0_i32_0 : i32, i32
  }
  func.func @transform_2(%arg0: i32) -> (i32, i32, i32, i32) {
    %c0_i32 = arith.constant 0 : i32
    %c0_i32_0 = arith.constant 0 : i32
    %c0_i32_1 = arith.constant 0 : i32
    %c0_i32_2 = arith.constant 0 : i32
    return %arg0, %c0_i32, %c0_i32_0, %c0_i32_1 : i32, i32, i32, i32
  }
  func.func @transform_3(%arg0: i32) -> (i32, i32, i32) {
    %c0_i32 = arith.constant 0 : i32
    %c0_i32_0 = arith.constant 0 : i32
    %c0_i32_1 = arith.constant 0 : i32
    return %arg0, %c0_i32, %c0_i32_0 : i32, i32, i32
  }
}

module attributes {stable_mosaic.version = 11 : i64} {
  func.func @_bn2_kernel(%arg0: i32, %arg1: memref<1x4x4x128xbf16, #tpu.memory_space<vmem>>, %arg2: memref<2x128xf32, #tpu.memory_space<vmem>>, %arg3: memref<1x128xf32, #tpu.memory_space<vmem>>, %arg4: memref<1x128xf32, #tpu.memory_space<vmem>>, %arg5: memref<1x4x4x128xf32, #tpu.memory_space<vmem>>) attributes {dimension_semantics = [#tpu.dimension_semantics<parallel>], iteration_bounds = array<i64: 2>, scalar_prefetch = 0 : i64, scratch_operands = 0 : i64, tpu.core_type = #tpu.core_type<tc>, window_params = [{transform_indices = @transform_0, window_bounds = array<i64: 1, 4, 4, 128>}, {pipeline_mode = #tpu.pipeline_mode<synchronous>, transform_indices = @transform_1, window_bounds = array<i64: 2, 128>}, {pipeline_mode = #tpu.pipeline_mode<synchronous>, transform_indices = @transform_2, window_bounds = array<i64: 1, 128>}, {pipeline_mode = #tpu.pipeline_mode<synchronous>, transform_indices = @transform_3, window_bounds = array<i64: 1, 128>}, {transform_indices = @transform_4, window_bounds = array<i64: 1, 4, 4, 128>}]} {
    %c0 = arith.constant 0 : index
    %c0_0 = arith.constant 0 : index
    %c0_1 = arith.constant 0 : index
    %c0_2 = arith.constant 0 : index
    %0 = vector.load %arg1[%c0, %c0_0, %c0_1, %c0_2] : memref<1x4x4x128xbf16, #tpu.memory_space<vmem>>, vector<1x4x4x128xbf16>
    %1 = vector.shape_cast %0 : vector<1x4x4x128xbf16> to vector<4x4x128xbf16>
    %2 = arith.extf %1 : vector<4x4x128xbf16> to vector<4x4x128xf32>
    %c0_3 = arith.constant 0 : index
    %c0_4 = arith.constant 0 : index
    %3 = vector.load %arg2[%c0_3, %c0_4] : memref<2x128xf32, #tpu.memory_space<vmem>>, vector<1x128xf32>
    %cst = arith.constant 3.125000e-02 : f32
    %4 = vector.broadcast %cst : f32 to vector<1x128xf32>
    %5 = arith.mulf %3, %4 : vector<1x128xf32>
    %c1 = arith.constant 1 : index
    %c0_5 = arith.constant 0 : index
    %6 = vector.load %arg2[%c1, %c0_5] : memref<2x128xf32, #tpu.memory_space<vmem>>, vector<1x128xf32>
    %cst_6 = arith.constant 3.125000e-02 : f32
    %7 = vector.broadcast %cst_6 : f32 to vector<1x128xf32>
    %8 = arith.mulf %6, %7 : vector<1x128xf32>
    %9 = arith.mulf %5, %5 : vector<1x128xf32>
    %10 = arith.subf %8, %9 : vector<1x128xf32>
    %cst_7 = arith.constant 0.000000e+00 : f32
    %11 = vector.broadcast %cst_7 : f32 to vector<1x128xf32>
    %12 = arith.maximumf %10, %11 : vector<1x128xf32>
    %c0_8 = arith.constant 0 : index
    %c0_9 = arith.constant 0 : index
    %13 = vector.load %arg3[%c0_8, %c0_9] : memref<1x128xf32, #tpu.memory_space<vmem>>, vector<1x128xf32>
    %cst_10 = arith.constant 9.99999974E-6 : f32
    %14 = vector.broadcast %cst_10 : f32 to vector<1x128xf32>
    %15 = arith.addf %12, %14 : vector<1x128xf32>
    %16 = math.rsqrt %15 : vector<1x128xf32>
    %17 = arith.mulf %13, %16 : vector<1x128xf32>
    %c0_11 = arith.constant 0 : index
    %c0_12 = arith.constant 0 : index
    %18 = vector.load %arg4[%c0_11, %c0_12] : memref<1x128xf32, #tpu.memory_space<vmem>>, vector<1x128xf32>
    %19 = arith.mulf %5, %17 : vector<1x128xf32>
    %20 = arith.subf %18, %19 : vector<1x128xf32>
    %21 = vector.shape_cast %17 : vector<1x128xf32> to vector<1x1x128xf32>
    %22 = vector.broadcast %21 : vector<1x1x128xf32> to vector<4x4x128xf32>
    %23 = arith.mulf %2, %22 : vector<4x4x128xf32>
    %24 = vector.shape_cast %20 : vector<1x128xf32> to vector<1x1x128xf32>
    %25 = vector.broadcast %24 : vector<1x1x128xf32> to vector<4x4x128xf32>
    %26 = arith.addf %23, %25 : vector<4x4x128xf32>
    %cst_13 = arith.constant 0.000000e+00 : f32
    %27 = vector.broadcast %cst_13 : f32 to vector<4x4x128xf32>
    %28 = arith.maximumf %26, %27 : vector<4x4x128xf32>
    %29 = vector.shape_cast %28 : vector<4x4x128xf32> to vector<1x4x4x128xf32>
    %c0_14 = arith.constant 0 : index
    %c0_15 = arith.constant 0 : index
    %c0_16 = arith.constant 0 : index
    %c0_17 = arith.constant 0 : index
    %30 = vector.load %arg5[%c0_14, %c0_15, %c0_16, %c0_17] : memref<1x4x4x128xf32, #tpu.memory_space<vmem>>, vector<1x4x4x128xf32>
    tpu.vector_store %arg5[%c0_14, %c0_15, %c0_16, %c0_17], %29 {strides = array<i32>} : memref<1x4x4x128xf32, #tpu.memory_space<vmem>>, vector<1x4x4x128xf32>,
    return
  }
  func.func @transform_0(%arg0: i32) -> (i32, i32, i32, i32) {
    %c0_i32 = arith.constant 0 : i32
    %c0_i32_0 = arith.constant 0 : i32
    %c0_i32_1 = arith.constant 0 : i32
    %c0_i32_2 = arith.constant 0 : i32
    return %arg0, %c0_i32, %c0_i32_0, %c0_i32_1 : i32, i32, i32, i32
  }
  func.func @transform_1(%arg0: i32) -> (i32, i32) {
    %c0_i32 = arith.constant 0 : i32
    %c0_i32_0 = arith.constant 0 : i32
    %c0_i32_1 = arith.constant 0 : i32
    return %c0_i32, %c0_i32_0 : i32, i32
  }
  func.func @transform_2(%arg0: i32) -> (i32, i32) {
    %c0_i32 = arith.constant 0 : i32
    %c0_i32_0 = arith.constant 0 : i32
    %c0_i32_1 = arith.constant 0 : i32
    return %c0_i32, %c0_i32_0 : i32, i32
  }
  func.func @transform_3(%arg0: i32) -> (i32, i32) {
    %c0_i32 = arith.constant 0 : i32
    %c0_i32_0 = arith.constant 0 : i32
    %c0_i32_1 = arith.constant 0 : i32
    return %c0_i32, %c0_i32_0 : i32, i32
  }
  func.func @transform_4(%arg0: i32) -> (i32, i32, i32, i32) {
    %c0_i32 = arith.constant 0 : i32
    %c0_i32_0 = arith.constant 0 : i32
    %c0_i32_1 = arith.constant 0 : i32
    %c0_i32_2 = arith.constant 0 : i32
    return %arg0, %c0_i32, %c0_i32_0, %c0_i32_1 : i32, i32, i32, i32
  }
}

module attributes {stable_mosaic.version = 11 : i64} {
  func.func @_bn1_conv2_kernel(%arg0: i32, %arg1: memref<1x6x6x128xbf16, #tpu.memory_space<vmem>>, %arg2: memref<2x128xf32, #tpu.memory_space<vmem>>, %arg3: memref<1x128xf32, #tpu.memory_space<vmem>>, %arg4: memref<1x128xf32, #tpu.memory_space<vmem>>, %arg5: memref<9x128x128xbf16, #tpu.memory_space<vmem>>, %arg6: memref<1x4x4x128xbf16, #tpu.memory_space<vmem>>, %arg7: memref<1x2x128xf32, #tpu.memory_space<vmem>>) attributes {dimension_semantics = [#tpu.dimension_semantics<parallel>], iteration_bounds = array<i64: 2>, scalar_prefetch = 0 : i64, scratch_operands = 0 : i64, tpu.core_type = #tpu.core_type<tc>, window_params = [{transform_indices = @transform_0, window_bounds = array<i64: 1, 6, 6, 128>}, {pipeline_mode = #tpu.pipeline_mode<synchronous>, transform_indices = @transform_1, window_bounds = array<i64: 2, 128>}, {pipeline_mode = #tpu.pipeline_mode<synchronous>, transform_indices = @transform_2, window_bounds = array<i64: 1, 128>}, {pipeline_mode = #tpu.pipeline_mode<synchronous>, transform_indices = @transform_3, window_bounds = array<i64: 1, 128>}, {pipeline_mode = #tpu.pipeline_mode<synchronous>, transform_indices = @transform_4, window_bounds = array<i64: 9, 128, 128>}, {transform_indices = @transform_5, window_bounds = array<i64: 1, 4, 4, 128>}, {transform_indices = @transform_6, window_bounds = array<i64: 1, 2, 128>}]} {
    %c0 = arith.constant 0 : index
    %c0_0 = arith.constant 0 : index
    %c0_1 = arith.constant 0 : index
    %c0_2 = arith.constant 0 : index
    %0 = vector.load %arg1[%c0, %c0_0, %c0_1, %c0_2] : memref<1x6x6x128xbf16, #tpu.memory_space<vmem>>, vector<1x6x6x128xbf16>
    %1 = vector.shape_cast %0 : vector<1x6x6x128xbf16> to vector<6x6x128xbf16>
    %2 = arith.extf %1 : vector<6x6x128xbf16> to vector<6x6x128xf32>
    %c0_3 = arith.constant 0 : index
    %c0_4 = arith.constant 0 : index
    %3 = vector.load %arg2[%c0_3, %c0_4] : memref<2x128xf32, #tpu.memory_space<vmem>>, vector<1x128xf32>
    %cst = arith.constant 0.013888889 : f32
    %4 = vector.broadcast %cst : f32 to vector<1x128xf32>
    %5 = arith.mulf %3, %4 : vector<1x128xf32>
    %c1 = arith.constant 1 : index
    %c0_5 = arith.constant 0 : index
    %6 = vector.load %arg2[%c1, %c0_5] : memref<2x128xf32, #tpu.memory_space<vmem>>, vector<1x128xf32>
    %cst_6 = arith.constant 0.013888889 : f32
    %7 = vector.broadcast %cst_6 : f32 to vector<1x128xf32>
    %8 = arith.mulf %6, %7 : vector<1x128xf32>
    %9 = arith.mulf %5, %5 : vector<1x128xf32>
    %10 = arith.subf %8, %9 : vector<1x128xf32>
    %cst_7 = arith.constant 0.000000e+00 : f32
    %11 = vector.broadcast %cst_7 : f32 to vector<1x128xf32>
    %12 = arith.maximumf %10, %11 : vector<1x128xf32>
    %c0_8 = arith.constant 0 : index
    %c0_9 = arith.constant 0 : index
    %13 = vector.load %arg3[%c0_8, %c0_9] : memref<1x128xf32, #tpu.memory_space<vmem>>, vector<1x128xf32>
    %cst_10 = arith.constant 9.99999974E-6 : f32
    %14 = vector.broadcast %cst_10 : f32 to vector<1x128xf32>
    %15 = arith.addf %12, %14 : vector<1x128xf32>
    %16 = math.rsqrt %15 : vector<1x128xf32>
    %17 = arith.mulf %13, %16 : vector<1x128xf32>
    %c0_11 = arith.constant 0 : index
    %c0_12 = arith.constant 0 : index
    %18 = vector.load %arg4[%c0_11, %c0_12] : memref<1x128xf32, #tpu.memory_space<vmem>>, vector<1x128xf32>
    %19 = arith.mulf %5, %17 : vector<1x128xf32>
    %20 = arith.subf %18, %19 : vector<1x128xf32>
    %21 = vector.shape_cast %17 : vector<1x128xf32> to vector<1x1x128xf32>
    %22 = vector.broadcast %21 : vector<1x1x128xf32> to vector<6x6x128xf32>
    %23 = arith.mulf %2, %22 : vector<6x6x128xf32>
    %24 = vector.shape_cast %20 : vector<1x128xf32> to vector<1x1x128xf32>
    %25 = vector.broadcast %24 : vector<1x1x128xf32> to vector<6x6x128xf32>
    %26 = arith.addf %23, %25 : vector<6x6x128xf32>
    %cst_13 = arith.constant 0.000000e+00 : f32
    %27 = vector.broadcast %cst_13 : f32 to vector<6x6x128xf32>
    %28 = arith.maximumf %26, %27 : vector<6x6x128xf32>
    %29 = arith.truncf %28 : vector<6x6x128xf32> to vector<6x6x128xbf16>
    %30 = vector.extract_strided_slice %29 {offsets = [0, 0, 0], sizes = [4, 4, 128], strides = [1, 1, 1]} : vector<6x6x128xbf16> to vector<4x4x128xbf16>
    %31 = vector.shape_cast %30 : vector<4x4x128xbf16> to vector<16x128xbf16>
    %c0_14 = arith.constant 0 : index
    %c0_15 = arith.constant 0 : index
    %c0_16 = arith.constant 0 : index
    %32 = vector.load %arg5[%c0_14, %c0_15, %c0_16] : memref<9x128x128xbf16, #tpu.memory_space<vmem>>, vector<1x128x128xbf16>
    %33 = vector.shape_cast %32 : vector<1x128x128xbf16> to vector<128x128xbf16>
    %cst_17 = arith.constant dense<0.000000e+00> : vector<16x128xf32>
    %34 = tpu.matmul %31, %33, %cst_17 {dimension_numbers = #tpu.dot_dimension_numbers<[1], [0], [0], [1], [0, 0, 1, 1], [], []>} : vector<16x128xbf16>, vector<128x128xbf16>, vector<16x128xf32> -> vector<16x128xf32>
    %35 = vector.extract_strided_slice %29 {offsets = [0, 1, 0], sizes = [4, 4, 128], strides = [1, 1, 1]} : vector<6x6x128xbf16> to vector<4x4x128xbf16>
    %36 = vector.shape_cast %35 : vector<4x4x128xbf16> to vector<16x128xbf16>
    %c1_18 = arith.constant 1 : index
    %c0_19 = arith.constant 0 : index
    %c0_20 = arith.constant 0 : index
    %37 = vector.load %arg5[%c1_18, %c0_19, %c0_20] : memref<9x128x128xbf16, #tpu.memory_space<vmem>>, vector<1x128x128xbf16>
    %38 = vector.shape_cast %37 : vector<1x128x128xbf16> to vector<128x128xbf16>
    %cst_21 = arith.constant dense<0.000000e+00> : vector<16x128xf32>
    %39 = tpu.matmul %36, %38, %cst_21 {dimension_numbers = #tpu.dot_dimension_numbers<[1], [0], [0], [1], [0, 0, 1, 1], [], []>} : vector<16x128xbf16>, vector<128x128xbf16>, vector<16x128xf32> -> vector<16x128xf32>
    %40 = arith.addf %34, %39 : vector<16x128xf32>
    %41 = vector.extract_strided_slice %29 {offsets = [0, 2, 0], sizes = [4, 4, 128], strides = [1, 1, 1]} : vector<6x6x128xbf16> to vector<4x4x128xbf16>
    %42 = vector.shape_cast %41 : vector<4x4x128xbf16> to vector<16x128xbf16>
    %c2 = arith.constant 2 : index
    %c0_22 = arith.constant 0 : index
    %c0_23 = arith.constant 0 : index
    %43 = vector.load %arg5[%c2, %c0_22, %c0_23] : memref<9x128x128xbf16, #tpu.memory_space<vmem>>, vector<1x128x128xbf16>
    %44 = vector.shape_cast %43 : vector<1x128x128xbf16> to vector<128x128xbf16>
    %cst_24 = arith.constant dense<0.000000e+00> : vector<16x128xf32>
    %45 = tpu.matmul %42, %44, %cst_24 {dimension_numbers = #tpu.dot_dimension_numbers<[1], [0], [0], [1], [0, 0, 1, 1], [], []>} : vector<16x128xbf16>, vector<128x128xbf16>, vector<16x128xf32> -> vector<16x128xf32>
    %46 = arith.addf %40, %45 : vector<16x128xf32>
    %47 = vector.extract_strided_slice %29 {offsets = [1, 0, 0], sizes = [4, 4, 128], strides = [1, 1, 1]} : vector<6x6x128xbf16> to vector<4x4x128xbf16>
    %48 = vector.shape_cast %47 : vector<4x4x128xbf16> to vector<16x128xbf16>
    %c3 = arith.constant 3 : index
    %c0_25 = arith.constant 0 : index
    %c0_26 = arith.constant 0 : index
    %49 = vector.load %arg5[%c3, %c0_25, %c0_26] : memref<9x128x128xbf16, #tpu.memory_space<vmem>>, vector<1x128x128xbf16>
    %50 = vector.shape_cast %49 : vector<1x128x128xbf16> to vector<128x128xbf16>
    %cst_27 = arith.constant dense<0.000000e+00> : vector<16x128xf32>
    %51 = tpu.matmul %48, %50, %cst_27 {dimension_numbers = #tpu.dot_dimension_numbers<[1], [0], [0], [1], [0, 0, 1, 1], [], []>} : vector<16x128xbf16>, vector<128x128xbf16>, vector<16x128xf32> -> vector<16x128xf32>
    %52 = arith.addf %46, %51 : vector<16x128xf32>
    %53 = vector.extract_strided_slice %29 {offsets = [1, 1, 0], sizes = [4, 4, 128], strides = [1, 1, 1]} : vector<6x6x128xbf16> to vector<4x4x128xbf16>
    %54 = vector.shape_cast %53 : vector<4x4x128xbf16> to vector<16x128xbf16>
    %c4 = arith.constant 4 : index
    %c0_28 = arith.constant 0 : index
    %c0_29 = arith.constant 0 : index
    %55 = vector.load %arg5[%c4, %c0_28, %c0_29] : memref<9x128x128xbf16, #tpu.memory_space<vmem>>, vector<1x128x128xbf16>
    %56 = vector.shape_cast %55 : vector<1x128x128xbf16> to vector<128x128xbf16>
    %cst_30 = arith.constant dense<0.000000e+00> : vector<16x128xf32>
    %57 = tpu.matmul %54, %56, %cst_30 {dimension_numbers = #tpu.dot_dimension_numbers<[1], [0], [0], [1], [0, 0, 1, 1], [], []>} : vector<16x128xbf16>, vector<128x128xbf16>, vector<16x128xf32> -> vector<16x128xf32>
    %58 = arith.addf %52, %57 : vector<16x128xf32>
    %59 = vector.extract_strided_slice %29 {offsets = [1, 2, 0], sizes = [4, 4, 128], strides = [1, 1, 1]} : vector<6x6x128xbf16> to vector<4x4x128xbf16>
    %60 = vector.shape_cast %59 : vector<4x4x128xbf16> to vector<16x128xbf16>
    %c5 = arith.constant 5 : index
    %c0_31 = arith.constant 0 : index
    %c0_32 = arith.constant 0 : index
    %61 = vector.load %arg5[%c5, %c0_31, %c0_32] : memref<9x128x128xbf16, #tpu.memory_space<vmem>>, vector<1x128x128xbf16>
    %62 = vector.shape_cast %61 : vector<1x128x128xbf16> to vector<128x128xbf16>
    %cst_33 = arith.constant dense<0.000000e+00> : vector<16x128xf32>
    %63 = tpu.matmul %60, %62, %cst_33 {dimension_numbers = #tpu.dot_dimension_numbers<[1], [0], [0], [1], [0, 0, 1, 1], [], []>} : vector<16x128xbf16>, vector<128x128xbf16>, vector<16x128xf32> -> vector<16x128xf32>
    %64 = arith.addf %58, %63 : vector<16x128xf32>
    %65 = vector.extract_strided_slice %29 {offsets = [2, 0, 0], sizes = [4, 4, 128], strides = [1, 1, 1]} : vector<6x6x128xbf16> to vector<4x4x128xbf16>
    %66 = vector.shape_cast %65 : vector<4x4x128xbf16> to vector<16x128xbf16>
    %c6 = arith.constant 6 : index
    %c0_34 = arith.constant 0 : index
    %c0_35 = arith.constant 0 : index
    %67 = vector.load %arg5[%c6, %c0_34, %c0_35] : memref<9x128x128xbf16, #tpu.memory_space<vmem>>, vector<1x128x128xbf16>
    %68 = vector.shape_cast %67 : vector<1x128x128xbf16> to vector<128x128xbf16>
    %cst_36 = arith.constant dense<0.000000e+00> : vector<16x128xf32>
    %69 = tpu.matmul %66, %68, %cst_36 {dimension_numbers = #tpu.dot_dimension_numbers<[1], [0], [0], [1], [0, 0, 1, 1], [], []>} : vector<16x128xbf16>, vector<128x128xbf16>, vector<16x128xf32> -> vector<16x128xf32>
    %70 = arith.addf %64, %69 : vector<16x128xf32>
    %71 = vector.extract_strided_slice %29 {offsets = [2, 1, 0], sizes = [4, 4, 128], strides = [1, 1, 1]} : vector<6x6x128xbf16> to vector<4x4x128xbf16>
    %72 = vector.shape_cast %71 : vector<4x4x128xbf16> to vector<16x128xbf16>
    %c7 = arith.constant 7 : index
    %c0_37 = arith.constant 0 : index
    %c0_38 = arith.constant 0 : index
    %73 = vector.load %arg5[%c7, %c0_37, %c0_38] : memref<9x128x128xbf16, #tpu.memory_space<vmem>>, vector<1x128x128xbf16>
    %74 = vector.shape_cast %73 : vector<1x128x128xbf16> to vector<128x128xbf16>
    %cst_39 = arith.constant dense<0.000000e+00> : vector<16x128xf32>
    %75 = tpu.matmul %72, %74, %cst_39 {dimension_numbers = #tpu.dot_dimension_numbers<[1], [0], [0], [1], [0, 0, 1, 1], [], []>} : vector<16x128xbf16>, vector<128x128xbf16>, vector<16x128xf32> -> vector<16x128xf32>
    %76 = arith.addf %70, %75 : vector<16x128xf32>
    %77 = vector.extract_strided_slice %29 {offsets = [2, 2, 0], sizes = [4, 4, 128], strides = [1, 1, 1]} : vector<6x6x128xbf16> to vector<4x4x128xbf16>
    %78 = vector.shape_cast %77 : vector<4x4x128xbf16> to vector<16x128xbf16>
    %c8 = arith.constant 8 : index
    %c0_40 = arith.constant 0 : index
    %c0_41 = arith.constant 0 : index
    %79 = vector.load %arg5[%c8, %c0_40, %c0_41] : memref<9x128x128xbf16, #tpu.memory_space<vmem>>, vector<1x128x128xbf16>
    %80 = vector.shape_cast %79 : vector<1x128x128xbf16> to vector<128x128xbf16>
    %cst_42 = arith.constant dense<0.000000e+00> : vector<16x128xf32>
    %81 = tpu.matmul %78, %80, %cst_42 {dimension_numbers = #tpu.dot_dimension_numbers<[1], [0], [0], [1], [0, 0, 1, 1], [], []>} : vector<16x128xbf16>, vector<128x128xbf16>, vector<16x128xf32> -> vector<16x128xf32>
    %82 = arith.addf %76, %81 : vector<16x128xf32>
    %83 = vector.shape_cast %82 : vector<16x128xf32> to vector<1x4x4x128xf32>
    %84 = arith.truncf %83 : vector<1x4x4x128xf32> to vector<1x4x4x128xbf16>
    %c0_43 = arith.constant 0 : index
    %c0_44 = arith.constant 0 : index
    %c0_45 = arith.constant 0 : index
    %c0_46 = arith.constant 0 : index
    %85 = vector.load %arg6[%c0_43, %c0_44, %c0_45, %c0_46] : memref<1x4x4x128xbf16, #tpu.memory_space<vmem>>, vector<1x4x4x128xbf16>
    tpu.vector_store %arg6[%c0_43, %c0_44, %c0_45, %c0_46], %84 {strides = array<i32>} : memref<1x4x4x128xbf16, #tpu.memory_space<vmem>>, vector<1x4x4x128xbf16>,
    %cst_47 = arith.constant dense<0.000000e+00> : vector<128xf32>
    %86 = vector.multi_reduction <add>, %82, %cst_47 [0] : vector<16x128xf32> to vector<128xf32>
    %87 = vector.shape_cast %86 : vector<128xf32> to vector<1x128xf32>
    %88 = vector.shape_cast %87 : vector<1x128xf32> to vector<1x1x128xf32>
    %c0_48 = arith.constant 0 : index
    %c0_49 = arith.constant 0 : index
    %c0_50 = arith.constant 0 : index
    %89 = vector.load %arg7[%c0_48, %c0_49, %c0_50] : memref<1x2x128xf32, #tpu.memory_space<vmem>>, vector<1x1x128xf32>
    tpu.vector_store %arg7[%c0_48, %c0_49, %c0_50], %88 {strides = array<i32>} : memref<1x2x128xf32, #tpu.memory_space<vmem>>, vector<1x1x128xf32>,
    %90 = arith.mulf %82, %82 : vector<16x128xf32>
    %cst_51 = arith.constant dense<0.000000e+00> : vector<128xf32>
    %91 = vector.multi_reduction <add>, %90, %cst_51 [0] : vector<16x128xf32> to vector<128xf32>
    %92 = vector.shape_cast %91 : vector<128xf32> to vector<1x128xf32>
    %93 = vector.shape_cast %92 : vector<1x128xf32> to vector<1x1x128xf32>
    %c0_52 = arith.constant 0 : index
    %c1_53 = arith.constant 1 : index
    %c0_54 = arith.constant 0 : index
    %94 = vector.load %arg7[%c0_52, %c1_53, %c0_54] : memref<1x2x128xf32, #tpu.memory_space<vmem>>, vector<1x1x128xf32>
    tpu.vector_store %arg7[%c0_52, %c1_53, %c0_54], %93 {strides = array<i32>} : memref<1x2x128xf32, #tpu.memory_space<vmem>>, vector<1x1x128xf32>,
    return
  }
  func.func @transform_0(%arg0: i32) -> (i32, i32, i32, i32) {
    %c0_i32 = arith.constant 0 : i32
    %c0_i32_0 = arith.constant 0 : i32
    %c0_i32_1 = arith.constant 0 : i32
    %c0_i32_2 = arith.constant 0 : i32
    return %arg0, %c0_i32, %c0_i32_0, %c0_i32_1 : i32, i32, i32, i32
  }
  func.func @transform_1(%arg0: i32) -> (i32, i32) {
    %c0_i32 = arith.constant 0 : i32
    %c0_i32_0 = arith.constant 0 : i32
    %c0_i32_1 = arith.constant 0 : i32
    return %c0_i32, %c0_i32_0 : i32, i32
  }
  func.func @transform_2(%arg0: i32) -> (i32, i32) {
    %c0_i32 = arith.constant 0 : i32
    %c0_i32_0 = arith.constant 0 : i32
    %c0_i32_1 = arith.constant 0 : i32
    return %c0_i32, %c0_i32_0 : i32, i32
  }
  func.func @transform_3(%arg0: i32) -> (i32, i32) {
    %c0_i32 = arith.constant 0 : i32
    %c0_i32_0 = arith.constant 0 : i32
    %c0_i32_1 = arith.constant 0 : i32
    return %c0_i32, %c0_i32_0 : i32, i32
  }
  func.func @transform_4(%arg0: i32) -> (i32, i32, i32) {
    %c0_i32 = arith.constant 0 : i32
    %c0_i32_0 = arith.constant 0 : i32
    %c0_i32_1 = arith.constant 0 : i32
    %c0_i32_2 = arith.constant 0 : i32
    return %c0_i32, %c0_i32_0, %c0_i32_1 : i32, i32, i32
  }
  func.func @transform_5(%arg0: i32) -> (i32, i32, i32, i32) {
    %c0_i32 = arith.constant 0 : i32
    %c0_i32_0 = arith.constant 0 : i32
    %c0_i32_1 = arith.constant 0 : i32
    %c0_i32_2 = arith.constant 0 : i32
    return %arg0, %c0_i32, %c0_i32_0, %c0_i32_1 : i32, i32, i32, i32
  }
  func.func @transform_6(%arg0: i32) -> (i32, i32, i32) {
    %c0_i32 = arith.constant 0 : i32
    %c0_i32_0 = arith.constant 0 : i32
    %c0_i32_1 = arith.constant 0 : i32
    return %arg0, %c0_i32, %c0_i32_0 : i32, i32, i32
  }
}

</mosaic_0001>

<llo_original>
// kernel: down_forward.5
$region0: #{down_forward.5}
  #allocation0 [shape = 'u32[]', space=smem, size = 0x4, offset = 0x4, fixed_abs, tag = 'smem constant byte address 0x4 - core index']
  #allocation1 [shape = 'u32[144,128]{1,0:T(1,128)}', space=vmem, size = 0x12000, scoped, tag = 'internal scratch']
  %s0 = inlined_call_operand.vmem [shape: bf16[2,4,4,128], index: 0, kind: input, shape index: {}]
  %s1 = inlined_call_operand.vmem [shape: f32[2,128], index: 1, kind: input, shape index: {}]
  %s2 = inlined_call_operand.vmem [shape: f32[1,128], index: 2, kind: input, shape index: {}]
  %s3 = inlined_call_operand.vmem [shape: f32[1,128], index: 3, kind: input, shape index: {}]
  %s4 = inlined_call_operand.vmem [shape: f32[2,4,4,128], index: 4, kind: output, shape index: {}]
  %s5 = sld [smem:[#allocation0]]
  $region49: #{down_forward.5} parent=0
    _
  %s7 = ssub.s32 1, %s5
  %s8 = scalar_select 0, %s7, %s5
  loop: start=0, step=1, limit=4
  $region2: #{down_forward.5} parent=0 // loop_pre_header
    _
  $region3: #{down_forward.5} parent=0 // loop_header
    %s10 = sphi 0, %s14
    %p11 = scmp.ge.s32.totalorder %s10, 4
    %s20 = sphi 0, %s22
    %s23 = sphi 0, %s20
    %s24 = sphi 0, %s23
    %s40 = sphi 0, %s24
    %s44 = sphi 0, %s44
    %s46 = sphi 0, %s44
    %s47 = sphi 0, %s46
    %s61 = sphi 0, %s47
    %s65 = sphi 0, %s65
    %s67 = sphi 0, %s65
    %s68 = sphi 0, %s67
    %s82 = sphi 0, %s68
    %s86 = sphi 0, %s86
    %s88 = sphi 0, %s86
    %s89 = sphi 0, %s88
    %s103 = sphi 0, %s89
    %s109 = sphi 0, %s111
    %s112 = sphi 0, %s109
    %s113 = sphi 0, %s112
    %s129 = sphi 0, %s113
  $region4: #{down_forward.5} parent=0 // loop_header_branch
    %13 = sbr.rel (%p11) target = $region8
  $region5: #{down_forward.5} parent=0 // loop_body
    %s15 = ssub.s32 %s10, 1
    %s16 = ssub.s32 %s10, 2
    %s17 = sadd.s32 %s10, 1
    %s18 = ssub.s32 %s10, %s17
    %p19 = scmp.eq.s32.totalorder %s18, 0
    %s21 = sadd.s32 %s20, 1
    %s22 = scalar_select %p19, %s20, %s21
    %p25 = pneg %p19
    %p26 = scmp.eq.s32.totalorder %s10, 1
    %p27 = por %p25, %p26
    %p28 = scmp.ne.s32.totalorder %s20, %s23
    %p29 = scmp.eq.s32.totalorder %s10, 0
    %p30 = por %p28, %p29
    %p31 = scmp.ne.s32.totalorder %s20, %s23
    %p32 = scmp.eq.s32.totalorder %s15, 1
    %p33 = por %p31, %p32
    %p34 = scmp.ne.s32.totalorder %s23, %s24
    %p35 = scmp.eq.s32.totalorder %s15, 0
    %p36 = por %p34, %p35
    %p37 = scmp.ne.s32.totalorder %s23, %s24
    %p38 = scmp.eq.s32.totalorder %s16, 1
    %p39 = por %p37, %p38
    %p41 = scmp.ne.s32.totalorder %s24, %s40
    %p42 = scmp.eq.s32.totalorder %s16, 0
    %p43 = por %p41, %p42
    %s45 = sadd.s32 %s44, 1
    %p48 = scmp.eq.s32.totalorder %s10, 1
    %p49 = scmp.ne.s32.totalorder %s44, %s46
    %p50 = scmp.eq.s32.totalorder %s10, 0
    %p51 = por %p49, %p50
    %p52 = scmp.ne.s32.totalorder %s44, %s46
    %p53 = scmp.eq.s32.totalorder %s15, 1
    %p54 = por %p52, %p53
    %p55 = scmp.ne.s32.totalorder %s46, %s47
    %p56 = scmp.eq.s32.totalorder %s15, 0
    %p57 = por %p55, %p56
    %p58 = scmp.ne.s32.totalorder %s46, %s47
    %p59 = scmp.eq.s32.totalorder %s16, 1
    %p60 = por %p58, %p59
    %p62 = scmp.ne.s32.totalorder %s47, %s61
    %p63 = scmp.eq.s32.totalorder %s16, 0
    %p64 = por %p62, %p63
    %s66 = sadd.s32 %s65, 1
    %p69 = scmp.eq.s32.totalorder %s10, 1
    %p70 = scmp.ne.s32.totalorder %s65, %s67
    %p71 = scmp.eq.s32.totalorder %s10, 0
    %p72 = por %p70, %p71
    %p73 = scmp.ne.s32.totalorder %s65, %s67
    %p74 = scmp.eq.s32.totalorder %s15, 1
    %p75 = por %p73, %p74
    %p76 = scmp.ne.s32.totalorder %s67, %s68
    %p77 = scmp.eq.s32.totalorder %s15, 0
    %p78 = por %p76, %p77
    %p79 = scmp.ne.s32.totalorder %s67, %s68
    %p80 = scmp.eq.s32.totalorder %s16, 1
    %p81 = por %p79, %p80
    %p83 = scmp.ne.s32.totalorder %s68, %s82
    %p84 = scmp.eq.s32.totalorder %s16, 0
    %p85 = por %p83, %p84
    %s87 = sadd.s32 %s86, 1
    %p90 = scmp.eq.s32.totalorder %s10, 1
    %p91 = scmp.ne.s32.totalorder %s86, %s88
    %p92 = scmp.eq.s32.totalorder %s10, 0
    %p93 = por %p91, %p92
    %p94 = scmp.ne.s32.totalorder %s86, %s88
    %p95 = scmp.eq.s32.totalorder %s15, 1
    %p96 = por %p94, %p95
    %p97 = scmp.ne.s32.totalorder %s88, %s89
    %p98 = scmp.eq.s32.totalorder %s15, 0
    %p99 = por %p97, %p98
    %p100 = scmp.ne.s32.totalorder %s88, %s89
    %p101 = scmp.eq.s32.totalorder %s16, 1
    %p102 = por %p100, %p101
    %p104 = scmp.ne.s32.totalorder %s89, %s103
    %p105 = scmp.eq.s32.totalorder %s16, 0
    %p106 = por %p104, %p105
    %s107 = ssub.s32 %s10, %s17
    %p108 = scmp.eq.s32.totalorder %s107, 0
    %s110 = sadd.s32 %s109, 1
    %s111 = scalar_select %p108, %s109, %s110
    %p114 = pneg %p108
    %p115 = scmp.eq.s32.totalorder %s10, 1
    %p116 = por %p114, %p115
    %p117 = scmp.ne.s32.totalorder %s109, %s112
    %p118 = scmp.eq.s32.totalorder %s10, 0
    %p119 = por %p117, %p118
    %p120 = scmp.ne.s32.totalorder %s109, %s112
    %p121 = scmp.eq.s32.totalorder %s15, 1
    %p122 = por %p120, %p121
    %p123 = scmp.ne.s32.totalorder %s112, %s113
    %p124 = scmp.eq.s32.totalorder %s15, 0
    %p125 = por %p123, %p124
    %p126 = scmp.ne.s32.totalorder %s112, %s113
    %p127 = scmp.eq.s32.totalorder %s16, 1
    %p128 = por %p126, %p127
    %p130 = scmp.ne.s32.totalorder %s113, %s129
    %p131 = scmp.eq.s32.totalorder %s16, 0
    %p132 = por %p130, %p131
    %p133 = scmp.le.s32.totalorder 1, %s10
    %p134 = scmp.lt.s32.totalorder %s10, 3
    %p135 = pnand %p133, %p134
    %p136 = pneg %p135
    // Predicated region
    $region9: #{down_forward.5} parent=5 // pred_check
      _
    $region10: #{down_forward.5} parent=5 // pred_check_branch
      %138 = sbr.rel (%p135) target = $region12
    $region11: #{down_forward.5} parent=5 // pred_region
      %s139 = ssub.s32 %s10, 1
      // Predicated region
      $region13: #{down_forward.5} parent=11 // pred_check
        %p140 = pneg %p57
      $region14: #{down_forward.5} parent=11 // pred_check_branch
        %142 = sbr.rel (%p140) target = $region16
      $region15: #{down_forward.5} parent=11 // pred_region
        _
      $region16: #{down_forward.5} parent=11 // pred_fallthru
        _
      // Predicated region
      $region17: #{down_forward.5} parent=11 // pred_check
        %p143 = pneg %p78
      $region18: #{down_forward.5} parent=11 // pred_check_branch
        %145 = sbr.rel (%p143) target = $region20
      $region19: #{down_forward.5} parent=11 // pred_region
        _
      $region20: #{down_forward.5} parent=11 // pred_fallthru
        _
      // Predicated region
      $region21: #{down_forward.5} parent=11 // pred_check
        %p146 = pneg %p99
      $region22: #{down_forward.5} parent=11 // pred_check_branch
        %148 = sbr.rel (%p146) target = $region24
      $region23: #{down_forward.5} parent=11 // pred_region
        _
      $region24: #{down_forward.5} parent=11 // pred_fallthru
        _
    $region12: #{down_forward.5} parent=5 // pred_fallthru
      _
    %p149 = scmp.lt.s32.totalorder %s10, 2
    // Predicated region
    $region25: #{down_forward.5} parent=5 // pred_check
      %p150 = pneg %p149
    $region26: #{down_forward.5} parent=5 // pred_check_branch
      %152 = sbr.rel (%p150) target = $region28
    $region27: #{down_forward.5} parent=5 // pred_region
      // Predicated region
      $region29: #{down_forward.5} parent=27 // pred_check
        %p153 = pneg %p30
      $region30: #{down_forward.5} parent=27 // pred_check_branch
        %155 = sbr.rel (%p153) target = $region32
      $region31: #{down_forward.5} parent=27 // pred_region
        %p156 = scmp.lt.s32.totalorder %s10, 1
        %s157 = scalar_select %p156, %s10, 1
        %s158 = smul.addr %s157, 4
        %s159 = smul.addr %s158, 2
        %s160 = scalar_lea.vmem %s0, %s159
      $region32: #{down_forward.5} parent=27 // pred_fallthru
        _
    $region28: #{down_forward.5} parent=5 // pred_fallthru
      _
    %p161 = scmp.le.s32.totalorder 1, %s10
    %p162 = scmp.lt.s32.totalorder %s10, 3
    %p163 = pnand %p161, %p162
    %p164 = pneg %p163
    // Predicated region
    $region33: #{down_forward.5} parent=5 // pred_check
      _
    $region34: #{down_forward.5} parent=5 // pred_check_branch
      %166 = sbr.rel (%p163) target = $region36
    $region35: #{down_forward.5} parent=5 // pred_region
      %s167 = ssub.s32 %s10, 1
      %p168 = scmp.lt.s32.totalorder %s15, 1
      %s169 = scalar_select %p168, %s15, 1
      %s170 = smul.addr %s169, 4
      %s171 = smul.addr %s170, 2
      %s172 = scalar_lea.vmem %s0, %s171
      %p173 = pneg %p36
      %p174 = pneg %p33
      %p175 = pneg %p57
      %p176 = pneg %p54
      %p177 = pneg %p78
      %p178 = pneg %p75
      %p179 = pneg %p99
      %p180 = pneg %p96
      %p181 = pneg %p125
      %p182 = pneg %p122
      %p183 = scmp.lt.s32.totalorder %s15, 1
      %s184 = scalar_select %p183, %s15, 1
      %s185 = smul.addr %s184, 4
      %s186 = smul.addr %s185, 4
      %s187 = scalar_lea.vmem %s4, %s186
      %p188 = scmp.lt.s32.totalorder %s15, 1
      %s189 = scalar_select %p188, %s15, 1
      %s190 = smul.addr %s189, 4
      %s191 = smul.addr %s190, 2
      %s192 = scalar_lea.vmem %s0, %s191
      %p193 = scmp.lt.s32.totalorder %s15, 1
      %s194 = scalar_select %p193, %s15, 1
      %s195 = smul.addr %s194, 4
      %s196 = smul.addr %s195, 4
      %s197 = scalar_lea.vmem %s4, %s196
      %v198 = vld [vmem:[%s192] sm:$0x3]
      %v199 = vld [vmem:[%s192 + $0x2] sm:$0x3]
      %v200 = vld [vmem:[%s192 + $0x4] sm:$0x3]
      %v201 = vld [vmem:[%s192 + $0x6] sm:$0x3]
      %v202 = vunpack.c.l.bf16 %v198
      %v203 = vunpack.c.l.bf16 %v199
      %v204 = vunpack.c.l.bf16 %v200
      %v205 = vunpack.c.l.bf16 %v201
      %v206 = vld [vmem:[%s1] sm:$0x1]
      %v207 = vmul.f32 %v206, 0.03125
      %v208 = vld [vmem:[%s1 + $0x1] sm:$0x1]
      %v209 = vmul.f32 %v208, 0.03125
      %v210 = vmul.f32 %v207, %v207
      %v211 = vsub.f32 %v209, %v210
      %v212 = vmax.f32 %v211, 0.0
      %v213 = vld [vmem:[%s2] sm:$0x1]
      %v214 = vadd.f32 %v212, 1e-05
      %v215 = vrsqrt.pop %v214
      %v216 = vmul.f32 %v213, %v215
      %v217 = vld [vmem:[%s3] sm:$0x1]
      %v218 = vmul.f32 %v207, %v216
      %v219 = vsub.f32 %v217, %v218
      %v221 = vlaneseq
      %v222 = vshrl.u32 %v221, 7
      %v223 = vsub.s32 0, %v222
      %v224 = vrot.slane %v216, %v223
      %v226 = vmul.f32 %v202, %v224
      %v227 = vmul.f32 %v203, %v224
      %v228 = vmul.f32 %v204, %v224
      %v229 = vmul.f32 %v205, %v224
      %v231 = vlaneseq
      %v232 = vshrl.u32 %v231, 7
      %v233 = vsub.s32 0, %v232
      %v234 = vrot.slane %v219, %v233
      %v236 = vadd.f32 %v226, %v234
      %v237 = vadd.f32 %v227, %v234
      %v238 = vadd.f32 %v228, %v234
      %v239 = vadd.f32 %v229, %v234
      %v240 = vmax.f32 %v236, 0.0
      %v241 = vmax.f32 %v237, 0.0
      %v242 = vmax.f32 %v238, 0.0
      %v243 = vmax.f32 %v239, 0.0
      %244 = vst [vmem:[%s197] sm:$0xf] %v240
      %245 = vst [vmem:[%s197 + $0x4] sm:$0xf] %v241
      %246 = vst [vmem:[%s197 + $0x8] sm:$0xf] %v242
      %247 = vst [vmem:[%s197 + $0xc] sm:$0xf] %v243
      %p248 = scmp.lt.s32.totalorder %s15, 1
      %s249 = scalar_select %p248, %s15, 1
      %s250 = smul.addr %s249, 4
      %s251 = smul.addr %s250, 4
      %s252 = scalar_lea.vmem %s4, %s251
      // Predicated region
      $region37: #{down_forward.5} parent=35 // pred_check
        %p253 = pneg %p122
      $region38: #{down_forward.5} parent=35 // pred_check_branch
        %255 = sbr.rel (%p253) target = $region40
      $region39: #{down_forward.5} parent=35 // pred_region
        _
      $region40: #{down_forward.5} parent=35 // pred_fallthru
        _
    $region36: #{down_forward.5} parent=5 // pred_fallthru
      _
    %p256 = scmp.le.s32.totalorder 2, %s10
    // Predicated region
    $region41: #{down_forward.5} parent=5 // pred_check
      %p257 = pneg %p256
    $region42: #{down_forward.5} parent=5 // pred_check_branch
      %259 = sbr.rel (%p257) target = $region44
    $region43: #{down_forward.5} parent=5 // pred_region
      %s260 = ssub.s32 %s10, 2
      // Predicated region
      $region45: #{down_forward.5} parent=43 // pred_check
        %p261 = pneg %p128
      $region46: #{down_forward.5} parent=43 // pred_check_branch
        %263 = sbr.rel (%p261) target = $region48
      $region47: #{down_forward.5} parent=43 // pred_region
        %p264 = scmp.lt.s32.totalorder %s16, 1
        %s265 = scalar_select %p264, %s16, 1
        %s266 = smul.addr %s265, 4
        %s267 = smul.addr %s266, 4
        %s268 = scalar_lea.vmem %s4, %s267
      $region48: #{down_forward.5} parent=43 // pred_fallthru
        _
    $region44: #{down_forward.5} parent=5 // pred_fallthru
      _
  $region6: #{down_forward.5} parent=0 // loop_footer
    %s14 = sadd.s32 1, %s10
  $region7: #{down_forward.5} parent=0 // loop_footer_branch
    %9 = sbr.rel target = $region3
  $region8: #{down_forward.5} parent=0 // loop_exit
    _

// kernel: down_forward.3
$region0: #{down_forward.3}
  #allocation0 [shape = 'u32[]', space=smem, size = 0x4, offset = 0x4, fixed_abs, tag = 'smem constant byte address 0x4 - core index']
  #allocation1 [shape = 'u32[144,128]{1,0:T(1,128)}', space=vmem, size = 0x12000, scoped, tag = 'internal scratch']
  %s0 = inlined_call_operand.vmem [shape: f32[2,16,16,4], index: 0, kind: input, shape index: {}]
  %s1 = inlined_call_operand.vmem [shape: bf16[128,128], index: 1, kind: input, shape index: {}]
  %s2 = inlined_call_operand.vmem [shape: bf16[2,6,6,128], index: 2, kind: output, shape index: {0}]
  %s3 = inlined_call_operand.vmem [shape: f32[2,2,128], index: 3, kind: output, shape index: {1}]
  %4 = xla_tuple %s2, %s3
  %s5 = sld [smem:[#allocation0]]
  $region49: #{down_forward.3} parent=0
    _
  %s7 = ssub.s32 1, %s5
  %s8 = scalar_select 0, %s7, %s5
  loop: start=0, step=1, limit=4
  $region2: #{down_forward.3} parent=0 // loop_pre_header
    _
  $region3: #{down_forward.3} parent=0 // loop_header
    %s10 = sphi 0, %s14
    %p11 = scmp.ge.s32.totalorder %s10, 4
    %s20 = sphi 0, %s22
    %s23 = sphi 0, %s20
    %s24 = sphi 0, %s23
    %s40 = sphi 0, %s24
    %s44 = sphi 0, %s44
    %s46 = sphi 0, %s44
    %s47 = sphi 0, %s46
    %s61 = sphi 0, %s47
    %s67 = sphi 0, %s69
    %s70 = sphi 0, %s67
    %s71 = sphi 0, %s70
    %s87 = sphi 0, %s71
    %s93 = sphi 0, %s95
    %s96 = sphi 0, %s93
    %s97 = sphi 0, %s96
    %s113 = sphi 0, %s97
  $region4: #{down_forward.3} parent=0 // loop_header_branch
    %13 = sbr.rel (%p11) target = $region8
  $region5: #{down_forward.3} parent=0 // loop_body
    %s15 = ssub.s32 %s10, 1
    %s16 = ssub.s32 %s10, 2
    %s17 = sadd.s32 %s10, 1
    %s18 = ssub.s32 %s10, %s17
    %p19 = scmp.eq.s32.totalorder %s18, 0
    %s21 = sadd.s32 %s20, 1
    %s22 = scalar_select %p19, %s20, %s21
    %p25 = pneg %p19
    %p26 = scmp.eq.s32.totalorder %s10, 1
    %p27 = por %p25, %p26
    %p28 = scmp.ne.s32.totalorder %s20, %s23
    %p29 = scmp.eq.s32.totalorder %s10, 0
    %p30 = por %p28, %p29
    %p31 = scmp.ne.s32.totalorder %s20, %s23
    %p32 = scmp.eq.s32.totalorder %s15, 1
    %p33 = por %p31, %p32
    %p34 = scmp.ne.s32.totalorder %s23, %s24
    %p35 = scmp.eq.s32.totalorder %s15, 0
    %p36 = por %p34, %p35
    %p37 = scmp.ne.s32.totalorder %s23, %s24
    %p38 = scmp.eq.s32.totalorder %s16, 1
    %p39 = por %p37, %p38
    %p41 = scmp.ne.s32.totalorder %s24, %s40
    %p42 = scmp.eq.s32.totalorder %s16, 0
    %p43 = por %p41, %p42
    %s45 = sadd.s32 %s44, 1
    %p48 = scmp.eq.s32.totalorder %s10, 1
    %p49 = scmp.ne.s32.totalorder %s44, %s46
    %p50 = scmp.eq.s32.totalorder %s10, 0
    %p51 = por %p49, %p50
    %p52 = scmp.ne.s32.totalorder %s44, %s46
    %p53 = scmp.eq.s32.totalorder %s15, 1
    %p54 = por %p52, %p53
    %p55 = scmp.ne.s32.totalorder %s46, %s47
    %p56 = scmp.eq.s32.totalorder %s15, 0
    %p57 = por %p55, %p56
    %p58 = scmp.ne.s32.totalorder %s46, %s47
    %p59 = scmp.eq.s32.totalorder %s16, 1
    %p60 = por %p58, %p59
    %p62 = scmp.ne.s32.totalorder %s47, %s61
    %p63 = scmp.eq.s32.totalorder %s16, 0
    %p64 = por %p62, %p63
    %s65 = ssub.s32 %s10, %s17
    %p66 = scmp.eq.s32.totalorder %s65, 0
    %s68 = sadd.s32 %s67, 1
    %s69 = scalar_select %p66, %s67, %s68
    %p72 = pneg %p66
    %p73 = scmp.eq.s32.totalorder %s10, 1
    %p74 = por %p72, %p73
    %p75 = scmp.ne.s32.totalorder %s67, %s70
    %p76 = scmp.eq.s32.totalorder %s10, 0
    %p77 = por %p75, %p76
    %p78 = scmp.ne.s32.totalorder %s67, %s70
    %p79 = scmp.eq.s32.totalorder %s15, 1
    %p80 = por %p78, %p79
    %p81 = scmp.ne.s32.totalorder %s70, %s71
    %p82 = scmp.eq.s32.totalorder %s15, 0
    %p83 = por %p81, %p82
    %p84 = scmp.ne.s32.totalorder %s70, %s71
    %p85 = scmp.eq.s32.totalorder %s16, 1
    %p86 = por %p84, %p85
    %p88 = scmp.ne.s32.totalorder %s71, %s87
    %p89 = scmp.eq.s32.totalorder %s16, 0
    %p90 = por %p88, %p89
    %s91 = ssub.s32 %s10, %s17
    %p92 = scmp.eq.s32.totalorder %s91, 0
    %s94 = sadd.s32 %s93, 1
    %s95 = scalar_select %p92, %s93, %s94
    %p98 = pneg %p92
    %p99 = scmp.eq.s32.totalorder %s10, 1
    %p100 = por %p98, %p99
    %p101 = scmp.ne.s32.totalorder %s93, %s96
    %p102 = scmp.eq.s32.totalorder %s10, 0
    %p103 = por %p101, %p102
    %p104 = scmp.ne.s32.totalorder %s93, %s96
    %p105 = scmp.eq.s32.totalorder %s15, 1
    %p106 = por %p104, %p105
    %p107 = scmp.ne.s32.totalorder %s96, %s97
    %p108 = scmp.eq.s32.totalorder %s15, 0
    %p109 = por %p107, %p108
    %p110 = scmp.ne.s32.totalorder %s96, %s97
    %p111 = scmp.eq.s32.totalorder %s16, 1
    %p112 = por %p110, %p111
    %p114 = scmp.ne.s32.totalorder %s97, %s113
    %p115 = scmp.eq.s32.totalorder %s16, 0
    %p116 = por %p114, %p115
    %p117 = scmp.le.s32.totalorder 1, %s10
    %p118 = scmp.lt.s32.totalorder %s10, 3
    %p119 = pnand %p117, %p118
    %p120 = pneg %p119
    // Predicated region
    $region9: #{down_forward.3} parent=5 // pred_check
      _
    $region10: #{down_forward.3} parent=5 // pred_check_branch
      %122 = sbr.rel (%p119) target = $region12
    $region11: #{down_forward.3} parent=5 // pred_region
      %s123 = ssub.s32 %s10, 1
      // Predicated region
      $region13: #{down_forward.3} parent=11 // pred_check
        %p124 = pneg %p57
      $region14: #{down_forward.3} parent=11 // pred_check_branch
        %126 = sbr.rel (%p124) target = $region16
      $region15: #{down_forward.3} parent=11 // pred_region
        _
      $region16: #{down_forward.3} parent=11 // pred_fallthru
        _
    $region12: #{down_forward.3} parent=5 // pred_fallthru
      _
    %p127 = scmp.lt.s32.totalorder %s10, 2
    // Predicated region
    $region17: #{down_forward.3} parent=5 // pred_check
      %p128 = pneg %p127
    $region18: #{down_forward.3} parent=5 // pred_check_branch
      %130 = sbr.rel (%p128) target = $region20
    $region19: #{down_forward.3} parent=5 // pred_region
      // Predicated region
      $region21: #{down_forward.3} parent=19 // pred_check
        %p131 = pneg %p30
      $region22: #{down_forward.3} parent=19 // pred_check_branch
        %133 = sbr.rel (%p131) target = $region24
      $region23: #{down_forward.3} parent=19 // pred_region
        %p134 = scmp.lt.s32.totalorder %s10, 1
        %s135 = scalar_select %p134, %s10, 1
        %s136 = smul.addr %s135, 32
        %s137 = smul.addr %s136, 8
        %s138 = scalar_lea.vmem %s0, %s137
      $region24: #{down_forward.3} parent=19 // pred_fallthru
        _
    $region20: #{down_forward.3} parent=5 // pred_fallthru
      _
    %p139 = scmp.le.s32.totalorder 1, %s10
    %p140 = scmp.lt.s32.totalorder %s10, 3
    %p141 = pnand %p139, %p140
    %p142 = pneg %p141
    // Predicated region
    $region25: #{down_forward.3} parent=5 // pred_check
      _
    $region26: #{down_forward.3} parent=5 // pred_check_branch
      %144 = sbr.rel (%p141) target = $region28
    $region27: #{down_forward.3} parent=5 // pred_region
      %s145 = ssub.s32 %s10, 1
      %p146 = scmp.lt.s32.totalorder %s15, 1
      %s147 = scalar_select %p146, %s15, 1
      %s148 = smul.addr %s147, 32
      %s149 = smul.addr %s148, 8
      %s150 = scalar_lea.vmem %s0, %s149
      %p151 = pneg %p36
      %p152 = pneg %p33
      %p153 = pneg %p57
      %p154 = pneg %p54
      %p155 = pneg %p83
      %p156 = pneg %p80
      %p157 = scmp.lt.s32.totalorder %s15, 1
      %s158 = scalar_select %p157, %s15, 1
      %s159 = smul.addr %s158, 6
      %s160 = smul.addr %s159, 4
      %s161 = scalar_lea.vmem %s2, %s160
      %p162 = pneg %p109
      %p163 = pneg %p106
      %p164 = scmp.lt.s32.totalorder %s15, 1
      %s165 = scalar_select %p164, %s15, 1
      %s166 = smul.addr %s165, 2
      %s167 = scalar_lea.vmem %s3, %s166
      %p168 = scmp.lt.s32.totalorder %s15, 1
      %s169 = scalar_select %p168, %s15, 1
      %s170 = smul.addr %s169, 32
      %s171 = smul.addr %s170, 8
      %s172 = scalar_lea.vmem %s0, %s171
      %p173 = scmp.lt.s32.totalorder %s15, 1
      %s174 = scalar_select %p173, %s15, 1
      %s175 = smul.addr %s174, 6
      %s176 = smul.addr %s175, 4
      %s177 = scalar_lea.vmem %s2, %s176
      %p178 = scmp.lt.s32.totalorder %s15, 1
      %s179 = scalar_select %p178, %s15, 1
      %s180 = smul.addr %s179, 2
      %s181 = scalar_lea.vmem %s3, %s180
      %v183 = vld [vmem:[%s172] sm:$0xff]
      %v184 = vld [vmem:[%s172 + $0x8] sm:$0xff]
      %v185 = vld [vmem:[%s172 + $0x10] sm:$0xff]
      %v186 = vld [vmem:[%s172 + $0x18] sm:$0xff]
      %v187 = vld [vmem:[%s172 + $0x20] sm:$0xff]
      %v188 = vld [vmem:[%s172 + $0x28] sm:$0xff]
      %v189 = vld [vmem:[%s172 + $0x30] sm:$0xff]
      %v190 = vld [vmem:[%s172 + $0x38] sm:$0xff]
      %v191 = vld [vmem:[%s172 + $0x40] sm:$0xff]
      %v192 = vld [vmem:[%s172 + $0x48] sm:$0xff]
      %v193 = vld [vmem:[%s172 + $0x50] sm:$0xff]
      %v194 = vld [vmem:[%s172 + $0x58] sm:$0xff]
      %v195 = vld [vmem:[%s172 + $0x60] sm:$0xff]
      %v196 = vld [vmem:[%s172 + $0x68] sm:$0xff]
      %v197 = vld [vmem:[%s172 + $0x70] sm:$0xff]
      %v198 = vld [vmem:[%s172 + $0x78] sm:$0xff]
      %v199 = vld [vmem:[%s172 + $0x80] sm:$0xff]
      %v200 = vld [vmem:[%s172 + $0x88] sm:$0xff]
      %v201 = vld [vmem:[%s172 + $0x90] sm:$0xff]
      %v202 = vld [vmem:[%s172 + $0x98] sm:$0xff]
      %v203 = vld [vmem:[%s172 + $0xa0] sm:$0xff]
      %v204 = vld [vmem:[%s172 + $0xa8] sm:$0xff]
      %v205 = vld [vmem:[%s172 + $0xb0] sm:$0xff]
      %v206 = vld [vmem:[%s172 + $0xb8] sm:$0xff]
      %v207 = vld [vmem:[%s172 + $0xc0] sm:$0xff]
      %v208 = vld [vmem:[%s172 + $0xc8] sm:$0xff]
      %v209 = vld [vmem:[%s172 + $0xd0] sm:$0xff]
      %v210 = vld [vmem:[%s172 + $0xd8] sm:$0xff]
      %v211 = vld [vmem:[%s172 + $0xe0] sm:$0xff]
      %v212 = vld [vmem:[%s172 + $0xe8] sm:$0xff]
      %v213 = vld [vmem:[%s172 + $0xf0] sm:$0xff]
      %v214 = vld [vmem:[%s172 + $0xf8] sm:$0xff]
      %vm215 = vcmask 31744
      %v216 = vsel %vm215, %v183, -inf
      %v217 = vsel %vm215, %v185, -inf
      %v218 = vmax.f32 %v216, %v217
      %v219 = vsel %vm215, %v184, -inf
      %v220 = vsel %vm215, %v186, -inf
      %v221 = vmax.f32 %v219, %v220
      %v222 = vsel %vm215, %v187, -inf
      %v223 = vsel %vm215, %v189, -inf
      %v224 = vmax.f32 %v222, %v223
      %v225 = vsel %vm215, %v188, -inf
      %v226 = vsel %vm215, %v190, -inf
      %v227 = vmax.f32 %v225, %v226
      %v228 = vsel %vm215, %v191, -inf
      %v229 = vsel %vm215, %v193, -inf
      %v230 = vmax.f32 %v228, %v229
      %v231 = vsel %vm215, %v192, -inf
      %v232 = vsel %vm215, %v194, -inf
      %v233 = vmax.f32 %v231, %v232
      %v234 = vsel %vm215, %v195, -inf
      %v235 = vsel %vm215, %v197, -inf
      %v236 = vmax.f32 %v234, %v235
      %v237 = vsel %vm215, %v196, -inf
      %v238 = vsel %vm215, %v198, -inf
      %v239 = vmax.f32 %v237, %v238
      %v240 = vsel %vm215, %v199, -inf
      %v241 = vsel %vm215, %v201, -inf
      %v242 = vmax.f32 %v240, %v241
      %v243 = vsel %vm215, %v200, -inf
      %v244 = vsel %vm215, %v202, -inf
      %v245 = vmax.f32 %v243, %v244
      %v246 = vsel %vm215, %v203, -inf
      %v247 = vsel %vm215, %v205, -inf
      %v248 = vmax.f32 %v246, %v247
      %v249 = vsel %vm215, %v204, -inf
      %v250 = vsel %vm215, %v206, -inf
      %v251 = vmax.f32 %v249, %v250
      %v252 = vsel %vm215, %v207, -inf
      %v253 = vsel %vm215, %v209, -inf
      %v254 = vmax.f32 %v252, %v253
      %v255 = vsel %vm215, %v208, -inf
      %v256 = vsel %vm215, %v210, -inf
      %v257 = vmax.f32 %v255, %v256
      %v258 = vsel %vm215, %v211, -inf
      %v259 = vsel %vm215, %v213, -inf
      %v260 = vmax.f32 %v258, %v259
      %v261 = vsel %vm215, %v212, -inf
      %v262 = vsel %vm215, %v214, -inf
      %v263 = vmax.f32 %v261, %v262
      %v280 = vcombine.high %v218, %v218
      %v282 = vunpack.c.l.s4 1983009808
      %v283 = vunpack.c.0.s8 %v282
      %v284 = vlaneseq
      %v285 = vshrl.u32 %v284, 7
      %v286 = vsub.s32 %v283, %v285
      %v287 = vrot.slane %v218, %v286
      %v289 = vunpack.c.l.s4 1983009808
      %v290 = vunpack.c.0.s8 %v289
      %v291 = vlaneseq
      %v292 = vshrl.u32 %v291, 7
      %v293 = vsub.s32 %v290, %v292
      %v294 = vrot.slane %v280, %v293
      %v295 = vcombine.high %v287, %v287
      %v296 = vcombine.high %v294, %v294
      %v297 = vcombine.high %v221, %v221
      %v299 = vunpack.c.l.s4 1983009808
      %v300 = vunpack.c.0.s8 %v299
      %v301 = vlaneseq
      %v302 = vshrl.u32 %v301, 7
      %v303 = vsub.s32 %v300, %v302
      %v304 = vrot.slane %v221, %v303
      %v306 = vunpack.c.l.s4 1983009808
      %v307 = vunpack.c.0.s8 %v306
      %v308 = vlaneseq
      %v309 = vshrl.u32 %v308, 7
      %v310 = vsub.s32 %v307, %v309
      %v311 = vrot.slane %v297, %v310
      %v312 = vcombine.high %v304, %v304
      %v313 = vcombine.high %v311, %v311
      %v314 = vcombine.high %v224, %v224
      %v316 = vunpack.c.l.s4 1983009808
      %v317 = vunpack.c.0.s8 %v316
      %v318 = vlaneseq
      %v319 = vshrl.u32 %v318, 7
      %v320 = vsub.s32 %v317, %v319
      %v321 = vrot.slane %v224, %v320
      %v323 = vunpack.c.l.s4 1983009808
      %v324 = vunpack.c.0.s8 %v323
      %v325 = vlaneseq
      %v326 = vshrl.u32 %v325, 7
      %v327 = vsub.s32 %v324, %v326
      %v328 = vrot.slane %v314, %v327
      %v329 = vcombine.high %v321, %v321
      %v330 = vcombine.high %v328, %v328
      %v331 = vcombine.high %v227, %v227
      %v333 = vunpack.c.l.s4 1983009808
      %v334 = vunpack.c.0.s8 %v333
      %v335 = vlaneseq
      %v336 = vshrl.u32 %v335, 7
      %v337 = vsub.s32 %v334, %v336
      %v338 = vrot.slane %v227, %v337
      %v340 = vunpack.c.l.s4 1983009808
      %v341 = vunpack.c.0.s8 %v340
      %v342 = vlaneseq
      %v343 = vshrl.u32 %v342, 7
      %v344 = vsub.s32 %v341, %v343
      %v345 = vrot.slane %v331, %v344
      %v346 = vcombine.high %v338, %v338
      %v347 = vcombine.high %v345, %v345
      %v348 = vcombine.high %v230, %v230
      %v350 = vunpack.c.l.s4 1983009808
      %v351 = vunpack.c.0.s8 %v350
      %v352 = vlaneseq
      %v353 = vshrl.u32 %v352, 7
      %v354 = vsub.s32 %v351, %v353
      %v355 = vrot.slane %v230, %v354
      %v357 = vunpack.c.l.s4 1983009808
      %v358 = vunpack.c.0.s8 %v357
      %v359 = vlaneseq
      %v360 = vshrl.u32 %v359, 7
      %v361 = vsub.s32 %v358, %v360
      %v362 = vrot.slane %v348, %v361
      %v363 = vcombine.high %v355, %v355
      %v364 = vcombine.high %v362, %v362
      %v365 = vcombine.high %v233, %v233
      %v367 = vunpack.c.l.s4 1983009808
      %v368 = vunpack.c.0.s8 %v367
      %v369 = vlaneseq
      %v370 = vshrl.u32 %v369, 7
      %v371 = vsub.s32 %v368, %v370
      %v372 = vrot.slane %v233, %v371
      %v374 = vunpack.c.l.s4 1983009808
      %v375 = vunpack.c.0.s8 %v374
      %v376 = vlaneseq
      %v377 = vshrl.u32 %v376, 7
      %v378 = vsub.s32 %v375, %v377
      %v379 = vrot.slane %v365, %v378
      %v380 = vcombine.high %v372, %v372
      %v381 = vcombine.high %v379, %v379
      %v382 = vcombine.high %v236, %v236
      %v384 = vunpack.c.l.s4 1983009808
      %v385 = vunpack.c.0.s8 %v384
      %v386 = vlaneseq
      %v387 = vshrl.u32 %v386, 7
      %v388 = vsub.s32 %v385, %v387
      %v389 = vrot.slane %v236, %v388
      %v391 = vunpack.c.l.s4 1983009808
      %v392 = vunpack.c.0.s8 %v391
      %v393 = vlaneseq
      %v394 = vshrl.u32 %v393, 7
      %v395 = vsub.s32 %v392, %v394
      %v396 = vrot.slane %v382, %v395
      %v397 = vcombine.high %v389, %v389
      %v398 = vcombine.high %v396, %v396
      %v399 = vcombine.high %v239, %v239
      %v401 = vunpack.c.l.s4 1983009808
      %v402 = vunpack.c.0.s8 %v401
      %v403 = vlaneseq
      %v404 = vshrl.u32 %v403, 7
      %v405 = vsub.s32 %v402, %v404
      %v406 = vrot.slane %v239, %v405
      %v408 = vunpack.c.l.s4 1983009808
      %v409 = vunpack.c.0.s8 %v408
      %v410 = vlaneseq
      %v411 = vshrl.u32 %v410, 7
      %v412 = vsub.s32 %v409, %v411
      %v413 = vrot.slane %v399, %v412
      %v414 = vcombine.high %v406, %v406
      %v415 = vcombine.high %v413, %v413
      %v416 = vcombine.high %v242, %v242
      %v418 = vunpack.c.l.s4 1983009808
      %v419 = vunpack.c.0.s8 %v418
      %v420 = vlaneseq
      %v421 = vshrl.u32 %v420, 7
      %v422 = vsub.s32 %v419, %v421
      %v423 = vrot.slane %v242, %v422
      %v425 = vunpack.c.l.s4 1983009808
      %v426 = vunpack.c.0.s8 %v425
      %v427 = vlaneseq
      %v428 = vshrl.u32 %v427, 7
      %v429 = vsub.s32 %v426, %v428
      %v430 = vrot.slane %v416, %v429
      %v431 = vcombine.high %v423, %v423
      %v432 = vcombine.high %v430, %v430
      %v433 = vcombine.high %v245, %v245
      %v435 = vunpack.c.l.s4 1983009808
      %v436 = vunpack.c.0.s8 %v435
      %v437 = vlaneseq
      %v438 = vshrl.u32 %v437, 7
      %v439 = vsub.s32 %v436, %v438
      %v440 = vrot.slane %v245, %v439
      %v442 = vunpack.c.l.s4 1983009808
      %v443 = vunpack.c.0.s8 %v442
      %v444 = vlaneseq
      %v445 = vshrl.u32 %v444, 7
      %v446 = vsub.s32 %v443, %v445
      %v447 = vrot.slane %v433, %v446
      %v448 = vcombine.high %v440, %v440
      %v449 = vcombine.high %v447, %v447
      %v450 = vcombine.high %v248, %v248
      %v452 = vunpack.c.l.s4 1983009808
      %v453 = vunpack.c.0.s8 %v452
      %v454 = vlaneseq
      %v455 = vshrl.u32 %v454, 7
      %v456 = vsub.s32 %v453, %v455
      %v457 = vrot.slane %v248, %v456
      %v459 = vunpack.c.l.s4 1983009808
      %v460 = vunpack.c.0.s8 %v459
      %v461 = vlaneseq
      %v462 = vshrl.u32 %v461, 7
      %v463 = vsub.s32 %v460, %v462
      %v464 = vrot.slane %v450, %v463
      %v465 = vcombine.high %v457, %v457
      %v466 = vcombine.high %v464, %v464
      %v467 = vcombine.high %v251, %v251
      %v469 = vunpack.c.l.s4 1983009808
      %v470 = vunpack.c.0.s8 %v469
      %v471 = vlaneseq
      %v472 = vshrl.u32 %v471, 7
      %v473 = vsub.s32 %v470, %v472
      %v474 = vrot.slane %v251, %v473
      %v476 = vunpack.c.l.s4 1983009808
      %v477 = vunpack.c.0.s8 %v476
      %v478 = vlaneseq
      %v479 = vshrl.u32 %v478, 7
      %v480 = vsub.s32 %v477, %v479
      %v481 = vrot.slane %v467, %v480
      %v482 = vcombine.high %v474, %v474
      %v483 = vcombine.high %v481, %v481
      %v484 = vcombine.high %v254, %v254
      %v486 = vunpack.c.l.s4 1983009808
      %v487 = vunpack.c.0.s8 %v486
      %v488 = vlaneseq
      %v489 = vshrl.u32 %v488, 7
      %v490 = vsub.s32 %v487, %v489
      %v491 = vrot.slane %v254, %v490
      %v493 = vunpack.c.l.s4 1983009808
      %v494 = vunpack.c.0.s8 %v493
      %v495 = vlaneseq
      %v496 = vshrl.u32 %v495, 7
      %v497 = vsub.s32 %v494, %v496
      %v498 = vrot.slane %v484, %v497
      %v499 = vcombine.high %v491, %v491
      %v500 = vcombine.high %v498, %v498
      %v501 = vcombine.high %v257, %v257
      %v503 = vunpack.c.l.s4 1983009808
      %v504 = vunpack.c.0.s8 %v503
      %v505 = vlaneseq
      %v506 = vshrl.u32 %v505, 7
      %v507 = vsub.s32 %v504, %v506
      %v508 = vrot.slane %v257, %v507
      %v510 = vunpack.c.l.s4 1983009808
      %v511 = vunpack.c.0.s8 %v510
      %v512 = vlaneseq
      %v513 = vshrl.u32 %v512, 7
      %v514 = vsub.s32 %v511, %v513
      %v515 = vrot.slane %v501, %v514
      %v516 = vcombine.high %v508, %v508
      %v517 = vcombine.high %v515, %v515
      %v518 = vcombine.high %v260, %v260
      %v520 = vunpack.c.l.s4 1983009808
      %v521 = vunpack.c.0.s8 %v520
      %v522 = vlaneseq
      %v523 = vshrl.u32 %v522, 7
      %v524 = vsub.s32 %v521, %v523
      %v525 = vrot.slane %v260, %v524
      %v527 = vunpack.c.l.s4 1983009808
      %v528 = vunpack.c.0.s8 %v527
      %v529 = vlaneseq
      %v530 = vshrl.u32 %v529, 7
      %v531 = vsub.s32 %v528, %v530
      %v532 = vrot.slane %v518, %v531
      %v533 = vcombine.high %v525, %v525
      %v534 = vcombine.high %v532, %v532
      %v535 = vcombine.high %v263, %v263
      %v537 = vunpack.c.l.s4 1983009808
      %v538 = vunpack.c.0.s8 %v537
      %v539 = vlaneseq
      %v540 = vshrl.u32 %v539, 7
      %v541 = vsub.s32 %v538, %v540
      %v542 = vrot.slane %v263, %v541
      %v544 = vunpack.c.l.s4 1983009808
      %v545 = vunpack.c.0.s8 %v544
      %v546 = vlaneseq
      %v547 = vshrl.u32 %v546, 7
      %v548 = vsub.s32 %v545, %v547
      %v549 = vrot.slane %v535, %v548
      %v550 = vcombine.high %v542, %v542
      %v551 = vcombine.high %v549, %v549
      %vm616 = vcmask 25600
      %v617 = vsel %vm616, %v287, -inf
      %v618 = vrot.slane %v617, 4
      %v619 = vmax.f32 %v617, %v618
      %v620 = vrot.slane %v619, 2
      %v621 = vmax.f32 %v619, %v620
      %v622 = vrot.slane %v621, 1
      %v623 = vmax.f32 %v621, %v622
      %v624 = vsel %vm616, %v295, -inf
      %v625 = vrot.slane %v624, 4
      %v626 = vmax.f32 %v624, %v625
      %v627 = vrot.slane %v626, 2
      %v628 = vmax.f32 %v626, %v627
      %v629 = vrot.slane %v628, 1
      %v630 = vmax.f32 %v628, %v629
      %v631 = vsel %vm616, %v294, -inf
      %v632 = vrot.slane %v631, 4
      %v633 = vmax.f32 %v631, %v632
      %v634 = vrot.slane %v633, 2
      %v635 = vmax.f32 %v633, %v634
      %v636 = vrot.slane %v635, 1
      %v637 = vmax.f32 %v635, %v636
      %v638 = vsel %vm616, %v296, -inf
      %v639 = vrot.slane %v638, 4
      %v640 = vmax.f32 %v638, %v639
      %v641 = vrot.slane %v640, 2
      %v642 = vmax.f32 %v640, %v641
      %v643 = vrot.slane %v642, 1
      %v644 = vmax.f32 %v642, %v643
      %v645 = vsel %vm616, %v304, -inf
      %v646 = vrot.slane %v645, 4
      %v647 = vmax.f32 %v645, %v646
      %v648 = vrot.slane %v647, 2
      %v649 = vmax.f32 %v647, %v648
      %v650 = vrot.slane %v649, 1
      %v651 = vmax.f32 %v649, %v650
      %v652 = vsel %vm616, %v312, -inf
      %v653 = vrot.slane %v652, 4
      %v654 = vmax.f32 %v652, %v653
      %v655 = vrot.slane %v654, 2
      %v656 = vmax.f32 %v654, %v655
      %v657 = vrot.slane %v656, 1
      %v658 = vmax.f32 %v656, %v657
      %v659 = vsel %vm616, %v311, -inf
      %v660 = vrot.slane %v659, 4
      %v661 = vmax.f32 %v659, %v660
      %v662 = vrot.slane %v661, 2
      %v663 = vmax.f32 %v661, %v662
      %v664 = vrot.slane %v663, 1
      %v665 = vmax.f32 %v663, %v664
      %v666 = vsel %vm616, %v313, -inf
      %v667 = vrot.slane %v666, 4
      %v668 = vmax.f32 %v666, %v667
      %v669 = vrot.slane %v668, 2
      %v670 = vmax.f32 %v668, %v669
      %v671 = vrot.slane %v670, 1
      %v672 = vmax.f32 %v670, %v671
      %v673 = vsel %vm616, %v321, -inf
      %v674 = vrot.slane %v673, 4
      %v675 = vmax.f32 %v673, %v674
      %v676 = vrot.slane %v675, 2
      %v677 = vmax.f32 %v675, %v676
      %v678 = vrot.slane %v677, 1
      %v679 = vmax.f32 %v677, %v678
      %v680 = vsel %vm616, %v329, -inf
      %v681 = vrot.slane %v680, 4
      %v682 = vmax.f32 %v680, %v681
      %v683 = vrot.slane %v682, 2
      %v684 = vmax.f32 %v682, %v683
      %v685 = vrot.slane %v684, 1
      %v686 = vmax.f32 %v684, %v685
      %v687 = vsel %vm616, %v328, -inf
      %v688 = vrot.slane %v687, 4
      %v689 = vmax.f32 %v687, %v688
      %v690 = vrot.slane %v689, 2
      %v691 = vmax.f32 %v689, %v690
      %v692 = vrot.slane %v691, 1
      %v693 = vmax.f32 %v691, %v692
      %v694 = vsel %vm616, %v330, -inf
      %v695 = vrot.slane %v694, 4
      %v696 = vmax.f32 %v694, %v695
      %v697 = vrot.slane %v696, 2
      %v698 = vmax.f32 %v696, %v697
      %v699 = vrot.slane %v698, 1
      %v700 = vmax.f32 %v698, %v699
      %v701 = vsel %vm616, %v338, -inf
      %v702 = vrot.slane %v701, 4
      %v703 = vmax.f32 %v701, %v702
      %v704 = vrot.slane %v703, 2
      %v705 = vmax.f32 %v703, %v704
      %v706 = vrot.slane %v705, 1
      %v707 = vmax.f32 %v705, %v706
      %v708 = vsel %vm616, %v346, -inf
      %v709 = vrot.slane %v708, 4
      %v710 = vmax.f32 %v708, %v709
      %v711 = vrot.slane %v710, 2
      %v712 = vmax.f32 %v710, %v711
      %v713 = vrot.slane %v712, 1
      %v714 = vmax.f32 %v712, %v713
      %v715 = vsel %vm616, %v345, -inf
      %v716 = vrot.slane %v715, 4
      %v717 = vmax.f32 %v715, %v716
      %v718 = vrot.slane %v717, 2
      %v719 = vmax.f32 %v717, %v718
      %v720 = vrot.slane %v719, 1
      %v721 = vmax.f32 %v719, %v720
      %v722 = vsel %vm616, %v347, -inf
      %v723 = vrot.slane %v722, 4
      %v724 = vmax.f32 %v722, %v723
      %v725 = vrot.slane %v724, 2
      %v726 = vmax.f32 %v724, %v725
      %v727 = vrot.slane %v726, 1
      %v728 = vmax.f32 %v726, %v727
      %v729 = vsel %vm616, %v355, -inf
      %v730 = vrot.slane %v729, 4
      %v731 = vmax.f32 %v729, %v730
      %v732 = vrot.slane %v731, 2
      %v733 = vmax.f32 %v731, %v732
      %v734 = vrot.slane %v733, 1
      %v735 = vmax.f32 %v733, %v734
      %v736 = vsel %vm616, %v363, -inf
      %v737 = vrot.slane %v736, 4
      %v738 = vmax.f32 %v736, %v737
      %v739 = vrot.slane %v738, 2
      %v740 = vmax.f32 %v738, %v739
      %v741 = vrot.slane %v740, 1
      %v742 = vmax.f32 %v740, %v741
      %v743 = vsel %vm616, %v362, -inf
      %v744 = vrot.slane %v743, 4
      %v745 = vmax.f32 %v743, %v744
      %v746 = vrot.slane %v745, 2
      %v747 = vmax.f32 %v745, %v746
      %v748 = vrot.slane %v747, 1
      %v749 = vmax.f32 %v747, %v748
      %v750 = vsel %vm616, %v364, -inf
      %v751 = vrot.slane %v750, 4
      %v752 = vmax.f32 %v750, %v751
      %v753 = vrot.slane %v752, 2
      %v754 = vmax.f32 %v752, %v753
      %v755 = vrot.slane %v754, 1
      %v756 = vmax.f32 %v754, %v755
      %v757 = vsel %vm616, %v372, -inf
      %v758 = vrot.slane %v757, 4
      %v759 = vmax.f32 %v757, %v758
      %v760 = vrot.slane %v759, 2
      %v761 = vmax.f32 %v759, %v760
      %v762 = vrot.slane %v761, 1
      %v763 = vmax.f32 %v761, %v762
      %v764 = vsel %vm616, %v380, -inf
      %v765 = vrot.slane %v764, 4
      %v766 = vmax.f32 %v764, %v765
      %v767 = vrot.slane %v766, 2
      %v768 = vmax.f32 %v766, %v767
      %v769 = vrot.slane %v768, 1
      %v770 = vmax.f32 %v768, %v769
      %v771 = vsel %vm616, %v379, -inf
      %v772 = vrot.slane %v771, 4
      %v773 = vmax.f32 %v771, %v772
      %v774 = vrot.slane %v773, 2
      %v775 = vmax.f32 %v773, %v774
      %v776 = vrot.slane %v775, 1
      %v777 = vmax.f32 %v775, %v776
      %v778 = vsel %vm616, %v381, -inf
      %v779 = vrot.slane %v778, 4
      %v780 = vmax.f32 %v778, %v779
      %v781 = vrot.slane %v780, 2
      %v782 = vmax.f32 %v780, %v781
      %v783 = vrot.slane %v782, 1
      %v784 = vmax.f32 %v782, %v783
      %v785 = vsel %vm616, %v389, -inf
      %v786 = vrot.slane %v785, 4
      %v787 = vmax.f32 %v785, %v786
      %v788 = vrot.slane %v787, 2
      %v789 = vmax.f32 %v787, %v788
      %v790 = vrot.slane %v789, 1
      %v791 = vmax.f32 %v789, %v790
      %v792 = vsel %vm616, %v397, -inf
      %v793 = vrot.slane %v792, 4
      %v794 = vmax.f32 %v792, %v793
      %v795 = vrot.slane %v794, 2
      %v796 = vmax.f32 %v794, %v795
      %v797 = vrot.slane %v796, 1
      %v798 = vmax.f32 %v796, %v797
      %v799 = vsel %vm616, %v396, -inf
      %v800 = vrot.slane %v799, 4
      %v801 = vmax.f32 %v799, %v800
      %v802 = vrot.slane %v801, 2
      %v803 = vmax.f32 %v801, %v802
      %v804 = vrot.slane %v803, 1
      %v805 = vmax.f32 %v803, %v804
      %v806 = vsel %vm616, %v398, -inf
      %v807 = vrot.slane %v806, 4
      %v808 = vmax.f32 %v806, %v807
      %v809 = vrot.slane %v808, 2
      %v810 = vmax.f32 %v808, %v809
      %v811 = vrot.slane %v810, 1
      %v812 = vmax.f32 %v810, %v811
      %v813 = vsel %vm616, %v406, -inf
      %v814 = vrot.slane %v813, 4
      %v815 = vmax.f32 %v813, %v814
      %v816 = vrot.slane %v815, 2
      %v817 = vmax.f32 %v815, %v816
      %v818 = vrot.slane %v817, 1
      %v819 = vmax.f32 %v817, %v818
      %v820 = vsel %vm616, %v414, -inf
      %v821 = vrot.slane %v820, 4
      %v822 = vmax.f32 %v820, %v821
      %v823 = vrot.slane %v822, 2
      %v824 = vmax.f32 %v822, %v823
      %v825 = vrot.slane %v824, 1
      %v826 = vmax.f32 %v824, %v825
      %v827 = vsel %vm616, %v413, -inf
      %v828 = vrot.slane %v827, 4
      %v829 = vmax.f32 %v827, %v828
      %v830 = vrot.slane %v829, 2
      %v831 = vmax.f32 %v829, %v830
      %v832 = vrot.slane %v831, 1
      %v833 = vmax.f32 %v831, %v832
      %v834 = vsel %vm616, %v415, -inf
      %v835 = vrot.slane %v834, 4
      %v836 = vmax.f32 %v834, %v835
      %v837 = vrot.slane %v836, 2
      %v838 = vmax.f32 %v836, %v837
      %v839 = vrot.slane %v838, 1
      %v840 = vmax.f32 %v838, %v839
      %v841 = vsel %vm616, %v423, -inf
      %v842 = vrot.slane %v841, 4
      %v843 = vmax.f32 %v841, %v842
      %v844 = vrot.slane %v843, 2
      %v845 = vmax.f32 %v843, %v844
      %v846 = vrot.slane %v845, 1
      %v847 = vmax.f32 %v845, %v846
      %v848 = vsel %vm616, %v431, -inf
      %v849 = vrot.slane %v848, 4
      %v850 = vmax.f32 %v848, %v849
      %v851 = vrot.slane %v850, 2
      %v852 = vmax.f32 %v850, %v851
      %v853 = vrot.slane %v852, 1
      %v854 = vmax.f32 %v852, %v853
      %v855 = vsel %vm616, %v430, -inf
      %v856 = vrot.slane %v855, 4
      %v857 = vmax.f32 %v855, %v856
      %v858 = vrot.slane %v857, 2
      %v859 = vmax.f32 %v857, %v858
      %v860 = vrot.slane %v859, 1
      %v861 = vmax.f32 %v859, %v860
      %v862 = vsel %vm616, %v432, -inf
      %v863 = vrot.slane %v862, 4
      %v864 = vmax.f32 %v862, %v863
      %v865 = vrot.slane %v864, 2
      %v866 = vmax.f32 %v864, %v865
      %v867 = vrot.slane %v866, 1
      %v868 = vmax.f32 %v866, %v867
      %v869 = vsel %vm616, %v440, -inf
      %v870 = vrot.slane %v869, 4
      %v871 = vmax.f32 %v869, %v870
      %v872 = vrot.slane %v871, 2
      %v873 = vmax.f32 %v871, %v872
      %v874 = vrot.slane %v873, 1
      %v875 = vmax.f32 %v873, %v874
      %v876 = vsel %vm616, %v448, -inf
      %v877 = vrot.slane %v876, 4
      %v878 = vmax.f32 %v876, %v877
      %v879 = vrot.slane %v878, 2
      %v880 = vmax.f32 %v878, %v879
      %v881 = vrot.slane %v880, 1
      %v882 = vmax.f32 %v880, %v881
      %v883 = vsel %vm616, %v447, -inf
      %v884 = vrot.slane %v883, 4
      %v885 = vmax.f32 %v883, %v884
      %v886 = vrot.slane %v885, 2
      %v887 = vmax.f32 %v885, %v886
      %v888 = vrot.slane %v887, 1
      %v889 = vmax.f32 %v887, %v888
      %v890 = vsel %vm616, %v449, -inf
      %v891 = vrot.slane %v890, 4
      %v892 = vmax.f32 %v890, %v891
      %v893 = vrot.slane %v892, 2
      %v894 = vmax.f32 %v892, %v893
      %v895 = vrot.slane %v894, 1
      %v896 = vmax.f32 %v894, %v895
      %v897 = vsel %vm616, %v457, -inf
      %v898 = vrot.slane %v897, 4
      %v899 = vmax.f32 %v897, %v898
      %v900 = vrot.slane %v899, 2
      %v901 = vmax.f32 %v899, %v900
      %v902 = vrot.slane %v901, 1
      %v903 = vmax.f32 %v901, %v902
      %v904 = vsel %vm616, %v465, -inf
      %v905 = vrot.slane %v904, 4
      %v906 = vmax.f32 %v904, %v905
      %v907 = vrot.slane %v906, 2
      %v908 = vmax.f32 %v906, %v907
      %v909 = vrot.slane %v908, 1
      %v910 = vmax.f32 %v908, %v909
      %v911 = vsel %vm616, %v464, -inf
      %v912 = vrot.slane %v911, 4
      %v913 = vmax.f32 %v911, %v912
      %v914 = vrot.slane %v913, 2
      %v915 = vmax.f32 %v913, %v914
      %v916 = vrot.slane %v915, 1
      %v917 = vmax.f32 %v915, %v916
      %v918 = vsel %vm616, %v466, -inf
      %v919 = vrot.slane %v918, 4
      %v920 = vmax.f32 %v918, %v919
      %v921 = vrot.slane %v920, 2
      %v922 = vmax.f32 %v920, %v921
      %v923 = vrot.slane %v922, 1
      %v924 = vmax.f32 %v922, %v923
      %v925 = vsel %vm616, %v474, -inf
      %v926 = vrot.slane %v925, 4
      %v927 = vmax.f32 %v925, %v926
      %v928 = vrot.slane %v927, 2
      %v929 = vmax.f32 %v927, %v928
      %v930 = vrot.slane %v929, 1
      %v931 = vmax.f32 %v929, %v930
      %v932 = vsel %vm616, %v482, -inf
      %v933 = vrot.slane %v932, 4
      %v934 = vmax.f32 %v932, %v933
      %v935 = vrot.slane %v934, 2
      %v936 = vmax.f32 %v934, %v935
      %v937 = vrot.slane %v936, 1
      %v938 = vmax.f32 %v936, %v937
      %v939 = vsel %vm616, %v481, -inf
      %v940 = vrot.slane %v939, 4
      %v941 = vmax.f32 %v939, %v940
      %v942 = vrot.slane %v941, 2
      %v943 = vmax.f32 %v941, %v942
      %v944 = vrot.slane %v943, 1
      %v945 = vmax.f32 %v943, %v944
      %v946 = vsel %vm616, %v483, -inf
      %v947 = vrot.slane %v946, 4
      %v948 = vmax.f32 %v946, %v947
      %v949 = vrot.slane %v948, 2
      %v950 = vmax.f32 %v948, %v949
      %v951 = vrot.slane %v950, 1
      %v952 = vmax.f32 %v950, %v951
      %v953 = vsel %vm616, %v491, -inf
      %v954 = vrot.slane %v953, 4
      %v955 = vmax.f32 %v953, %v954
      %v956 = vrot.slane %v955, 2
      %v957 = vmax.f32 %v955, %v956
      %v958 = vrot.slane %v957, 1
      %v959 = vmax.f32 %v957, %v958
      %v960 = vsel %vm616, %v499, -inf
      %v961 = vrot.slane %v960, 4
      %v962 = vmax.f32 %v960, %v961
      %v963 = vrot.slane %v962, 2
      %v964 = vmax.f32 %v962, %v963
      %v965 = vrot.slane %v964, 1
      %v966 = vmax.f32 %v964, %v965
      %v967 = vsel %vm616, %v498, -inf
      %v968 = vrot.slane %v967, 4
      %v969 = vmax.f32 %v967, %v968
      %v970 = vrot.slane %v969, 2
      %v971 = vmax.f32 %v969, %v970
      %v972 = vrot.slane %v971, 1
      %v973 = vmax.f32 %v971, %v972
      %v974 = vsel %vm616, %v500, -inf
      %v975 = vrot.slane %v974, 4
      %v976 = vmax.f32 %v974, %v975
      %v977 = vrot.slane %v976, 2
      %v978 = vmax.f32 %v976, %v977
      %v979 = vrot.slane %v978, 1
      %v980 = vmax.f32 %v978, %v979
      %v981 = vsel %vm616, %v508, -inf
      %v982 = vrot.slane %v981, 4
      %v983 = vmax.f32 %v981, %v982
      %v984 = vrot.slane %v983, 2
      %v985 = vmax.f32 %v983, %v984
      %v986 = vrot.slane %v985, 1
      %v987 = vmax.f32 %v985, %v986
      %v988 = vsel %vm616, %v516, -inf
      %v989 = vrot.slane %v988, 4
      %v990 = vmax.f32 %v988, %v989
      %v991 = vrot.slane %v990, 2
      %v992 = vmax.f32 %v990, %v991
      %v993 = vrot.slane %v992, 1
      %v994 = vmax.f32 %v992, %v993
      %v995 = vsel %vm616, %v515, -inf
      %v996 = vrot.slane %v995, 4
      %v997 = vmax.f32 %v995, %v996
      %v998 = vrot.slane %v997, 2
      %v999 = vmax.f32 %v997, %v998
      %v1000 = vrot.slane %v999, 1
      %v1001 = vmax.f32 %v999, %v1000
      %v1002 = vsel %vm616, %v517, -inf
      %v1003 = vrot.slane %v1002, 4
      %v1004 = vmax.f32 %v1002, %v1003
      %v1005 = vrot.slane %v1004, 2
      %v1006 = vmax.f32 %v1004, %v1005
      %v1007 = vrot.slane %v1006, 1
      %v1008 = vmax.f32 %v1006, %v1007
      %v1009 = vsel %vm616, %v525, -inf
      %v1010 = vrot.slane %v1009, 4
      %v1011 = vmax.f32 %v1009, %v1010
      %v1012 = vrot.slane %v1011, 2
      %v1013 = vmax.f32 %v1011, %v1012
      %v1014 = vrot.slane %v1013, 1
      %v1015 = vmax.f32 %v1013, %v1014
      %v1016 = vsel %vm616, %v533, -inf
      %v1017 = vrot.slane %v1016, 4
      %v1018 = vmax.f32 %v1016, %v1017
      %v1019 = vrot.slane %v1018, 2
      %v1020 = vmax.f32 %v1018, %v1019
      %v1021 = vrot.slane %v1020, 1
      %v1022 = vmax.f32 %v1020, %v1021
      %v1023 = vsel %vm616, %v532, -inf
      %v1024 = vrot.slane %v1023, 4
      %v1025 = vmax.f32 %v1023, %v1024
      %v1026 = vrot.slane %v1025, 2
      %v1027 = vmax.f32 %v1025, %v1026
      %v1028 = vrot.slane %v1027, 1
      %v1029 = vmax.f32 %v1027, %v1028
      %v1030 = vsel %vm616, %v534, -inf
      %v1031 = vrot.slane %v1030, 4
      %v1032 = vmax.f32 %v1030, %v1031
      %v1033 = vrot.slane %v1032, 2
      %v1034 = vmax.f32 %v1032, %v1033
      %v1035 = vrot.slane %v1034, 1
      %v1036 = vmax.f32 %v1034, %v1035
      %v1037 = vsel %vm616, %v542, -inf
      %v1038 = vrot.slane %v1037, 4
      %v1039 = vmax.f32 %v1037, %v1038
      %v1040 = vrot.slane %v1039, 2
      %v1041 = vmax.f32 %v1039, %v1040
      %v1042 = vrot.slane %v1041, 1
      %v1043 = vmax.f32 %v1041, %v1042
      %v1044 = vsel %vm616, %v550, -inf
      %v1045 = vrot.slane %v1044, 4
      %v1046 = vmax.f32 %v1044, %v1045
      %v1047 = vrot.slane %v1046, 2
      %v1048 = vmax.f32 %v1046, %v1047
      %v1049 = vrot.slane %v1048, 1
      %v1050 = vmax.f32 %v1048, %v1049
      %v1051 = vsel %vm616, %v549, -inf
      %v1052 = vrot.slane %v1051, 4
      %v1053 = vmax.f32 %v1051, %v1052
      %v1054 = vrot.slane %v1053, 2
      %v1055 = vmax.f32 %v1053, %v1054
      %v1056 = vrot.slane %v1055, 1
      %v1057 = vmax.f32 %v1055, %v1056
      %v1058 = vsel %vm616, %v551, -inf
      %v1059 = vrot.slane %v1058, 4
      %v1060 = vmax.f32 %v1058, %v1059
      %v1061 = vrot.slane %v1060, 2
      %v1062 = vmax.f32 %v1060, %v1061
      %v1063 = vrot.slane %v1062, 1
      %v1064 = vmax.f32 %v1062, %v1063
      %v1065 = vpack.c.bf16 %v623, %v623
      %v1066 = vpack.c.bf16 %v630, %v630
      %v1067 = vpack.c.bf16 %v637, %v637
      %v1068 = vpack.c.bf16 %v644, %v644
      %v1069 = vpack.c.bf16 %v651, %v651
      %v1070 = vpack.c.bf16 %v658, %v658
      %v1071 = vpack.c.bf16 %v665, %v665
      %v1072 = vpack.c.bf16 %v672, %v672
      %v1073 = vpack.c.bf16 %v679, %v679
      %v1074 = vpack.c.bf16 %v686, %v686
      %v1075 = vpack.c.bf16 %v693, %v693
      %v1076 = vpack.c.bf16 %v700, %v700
      %v1077 = vpack.c.bf16 %v707, %v707
      %v1078 = vpack.c.bf16 %v714, %v714
      %v1079 = vpack.c.bf16 %v721, %v721
      %v1080 = vpack.c.bf16 %v728, %v728
      %v1081 = vpack.c.bf16 %v735, %v735
      %v1082 = vpack.c.bf16 %v742, %v742
      %v1083 = vpack.c.bf16 %v749, %v749
      %v1084 = vpack.c.bf16 %v756, %v756
      %v1085 = vpack.c.bf16 %v763, %v763
      %v1086 = vpack.c.bf16 %v770, %v770
      %v1087 = vpack.c.bf16 %v777, %v777
      %v1088 = vpack.c.bf16 %v784, %v784
      %v1089 = vpack.c.bf16 %v791, %v791
      %v1090 = vpack.c.bf16 %v798, %v798
      %v1091 = vpack.c.bf16 %v805, %v805
      %v1092 = vpack.c.bf16 %v812, %v812
      %v1093 = vpack.c.bf16 %v819, %v819
      %v1094 = vpack.c.bf16 %v826, %v826
      %v1095 = vpack.c.bf16 %v833, %v833
      %v1096 = vpack.c.bf16 %v840, %v840
      %v1097 = vpack.c.bf16 %v847, %v847
      %v1098 = vpack.c.bf16 %v854, %v854
      %v1099 = vpack.c.bf16 %v861, %v861
      %v1100 = vpack.c.bf16 %v868, %v868
      %v1101 = vpack.c.bf16 %v875, %v875
      %v1102 = vpack.c.bf16 %v882, %v882
      %v1103 = vpack.c.bf16 %v889, %v889
      %v1104 = vpack.c.bf16 %v896, %v896
      %v1105 = vpack.c.bf16 %v903, %v903
      %v1106 = vpack.c.bf16 %v910, %v910
      %v1107 = vpack.c.bf16 %v917, %v917
      %v1108 = vpack.c.bf16 %v924, %v924
      %v1109 = vpack.c.bf16 %v931, %v931
      %v1110 = vpack.c.bf16 %v938, %v938
      %v1111 = vpack.c.bf16 %v945, %v945
      %v1112 = vpack.c.bf16 %v952, %v952
      %v1113 = vpack.c.bf16 %v959, %v959
      %v1114 = vpack.c.bf16 %v966, %v966
      %v1115 = vpack.c.bf16 %v973, %v973
      %v1116 = vpack.c.bf16 %v980, %v980
      %v1117 = vpack.c.bf16 %v987, %v987
      %v1118 = vpack.c.bf16 %v994, %v994
      %v1119 = vpack.c.bf16 %v1001, %v1001
      %v1120 = vpack.c.bf16 %v1008, %v1008
      %v1121 = vpack.c.bf16 %v1015, %v1015
      %v1122 = vpack.c.bf16 %v1022, %v1022
      %v1123 = vpack.c.bf16 %v1029, %v1029
      %v1124 = vpack.c.bf16 %v1036, %v1036
      %v1125 = vpack.c.bf16 %v1043, %v1043
      %v1126 = vpack.c.bf16 %v1050, %v1050
      %v1127 = vpack.c.bf16 %v1057, %v1057
      %v1128 = vpack.c.bf16 %v1064, %v1064
      %v1165 = vunpack.c.l.b16 %v1065
      %v1166 = vunpack.c.l.b16 %v1066
      %v1167 = vunpack.c.l.b16 %v1067
      %v1168 = vunpack.c.l.b16 %v1068
      %v1169 = vunpack.c.l.b16 %v1069
      %v1170 = vunpack.c.l.b16 %v1070
      %v1171 = vunpack.c.l.b16 %v1073
      %v1172 = vunpack.c.l.b16 %v1074
      %v1173 = vunpack.c.l.b16 %v1075
      %v1174 = vunpack.c.l.b16 %v1076
      %v1175 = vunpack.c.l.b16 %v1077
      %v1176 = vunpack.c.l.b16 %v1078
      %v1177 = vunpack.c.l.b16 %v1081
      %v1178 = vunpack.c.l.b16 %v1082
      %v1179 = vunpack.c.l.b16 %v1083
      %v1180 = vunpack.c.l.b16 %v1084
      %v1181 = vunpack.c.l.b16 %v1085
      %v1182 = vunpack.c.l.b16 %v1086
      %v1183 = vunpack.c.l.b16 %v1089
      %v1184 = vunpack.c.l.b16 %v1090
      %v1185 = vunpack.c.l.b16 %v1091
      %v1186 = vunpack.c.l.b16 %v1092
      %v1187 = vunpack.c.l.b16 %v1093
      %v1188 = vunpack.c.l.b16 %v1094
      %v1189 = vunpack.c.l.b16 %v1097
      %v1190 = vunpack.c.l.b16 %v1098
      %v1191 = vunpack.c.l.b16 %v1099
      %v1192 = vunpack.c.l.b16 %v1100
      %v1193 = vunpack.c.l.b16 %v1101
      %v1194 = vunpack.c.l.b16 %v1102
      %v1195 = vunpack.c.l.b16 %v1105
      %v1196 = vunpack.c.l.b16 %v1106
      %v1197 = vunpack.c.l.b16 %v1107
      %v1198 = vunpack.c.l.b16 %v1108
      %v1199 = vunpack.c.l.b16 %v1109
      %v1200 = vunpack.c.l.b16 %v1110
      %vm1201 = vcmask 1041409
      %v1202 = vsel %vm1201, %v1166, %v1165
      %vm1203 = vcmask 1042434
      %v1204 = vsel %vm1203, %v1167, %v1202
      %vm1205 = vcmask 1043459
      %v1206 = vsel %vm1205, %v1168, %v1204
      %vm1207 = vcmask 1044484
      %v1208 = vsel %vm1207, %v1169, %v1206
      %vm1209 = vcmask 1045509
      %v1210 = vsel %vm1209, %v1170, %v1208
      %v1211 = vsel %vm1201, %v1172, %v1171
      %v1212 = vsel %vm1203, %v1173, %v1211
      %v1213 = vsel %vm1205, %v1174, %v1212
      %v1214 = vsel %vm1207, %v1175, %v1213
      %v1215 = vsel %vm1209, %v1176, %v1214
      %v1216 = vsel %vm1201, %v1178, %v1177
      %v1217 = vsel %vm1203, %v1179, %v1216
      %v1218 = vsel %vm1205, %v1180, %v1217
      %v1219 = vsel %vm1207, %v1181, %v1218
      %v1220 = vsel %vm1209, %v1182, %v1219
      %v1221 = vsel %vm1201, %v1184, %v1183
      %v1222 = vsel %vm1203, %v1185, %v1221
      %v1223 = vsel %vm1205, %v1186, %v1222
      %v1224 = vsel %vm1207, %v1187, %v1223
      %v1225 = vsel %vm1209, %v1188, %v1224
      %v1226 = vsel %vm1201, %v1190, %v1189
      %v1227 = vsel %vm1203, %v1191, %v1226
      %v1228 = vsel %vm1205, %v1192, %v1227
      %v1229 = vsel %vm1207, %v1193, %v1228
      %v1230 = vsel %vm1209, %v1194, %v1229
      %v1231 = vsel %vm1201, %v1196, %v1195
      %v1232 = vsel %vm1203, %v1197, %v1231
      %v1233 = vsel %vm1205, %v1198, %v1232
      %v1234 = vsel %vm1207, %v1199, %v1233
      %v1235 = vsel %vm1209, %v1200, %v1234
      %v1236 = vpack.c.b16 %v1210, %v1210
      %v1237 = vpack.c.b16 %v1215, %v1215
      %v1238 = vpack.c.b16 %v1220, %v1220
      %v1239 = vpack.c.b16 %v1225, %v1225
      %v1240 = vpack.c.b16 %v1230, %v1230
      %v1241 = vpack.c.b16 %v1235, %v1235
      %v1248 = vunpack.c.l.b16 %v1071
      %v1249 = vunpack.c.l.b16 %v1079
      %v1250 = vunpack.c.l.b16 %v1087
      %v1251 = vunpack.c.l.b16 %v1095
      %v1252 = vunpack.c.l.b16 %v1103
      %v1253 = vunpack.c.l.b16 %v1111
      %v1254 = vsel %vm1201, %v1167, %v1166
      %v1255 = vsel %vm1203, %v1168, %v1254
      %v1256 = vsel %vm1205, %v1169, %v1255
      %v1257 = vsel %vm1207, %v1170, %v1256
      %v1258 = vsel %vm1209, %v1248, %v1257
      %v1259 = vsel %vm1201, %v1173, %v1172
      %v1260 = vsel %vm1203, %v1174, %v1259
      %v1261 = vsel %vm1205, %v1175, %v1260
      %v1262 = vsel %vm1207, %v1176, %v1261
      %v1263 = vsel %vm1209, %v1249, %v1262
      %v1264 = vsel %vm1201, %v1179, %v1178
      %v1265 = vsel %vm1203, %v1180, %v1264
      %v1266 = vsel %vm1205, %v1181, %v1265
      %v1267 = vsel %vm1207, %v1182, %v1266
      %v1268 = vsel %vm1209, %v1250, %v1267
      %v1269 = vsel %vm1201, %v1185, %v1184
      %v1270 = vsel %vm1203, %v1186, %v1269
      %v1271 = vsel %vm1205, %v1187, %v1270
      %v1272 = vsel %vm1207, %v1188, %v1271
      %v1273 = vsel %vm1209, %v1251, %v1272
      %v1274 = vsel %vm1201, %v1191, %v1190
      %v1275 = vsel %vm1203, %v1192, %v1274
      %v1276 = vsel %vm1205, %v1193, %v1275
      %v1277 = vsel %vm1207, %v1194, %v1276
      %v1278 = vsel %vm1209, %v1252, %v1277
      %v1279 = vsel %vm1201, %v1197, %v1196
      %v1280 = vsel %vm1203, %v1198, %v1279
      %v1281 = vsel %vm1205, %v1199, %v1280
      %v1282 = vsel %vm1207, %v1200, %v1281
      %v1283 = vsel %vm1209, %v1253, %v1282
      %v1284 = vpack.c.b16 %v1258, %v1258
      %v1285 = vpack.c.b16 %v1263, %v1263
      %v1286 = vpack.c.b16 %v1268, %v1268
      %v1287 = vpack.c.b16 %v1273, %v1273
      %v1288 = vpack.c.b16 %v1278, %v1278
      %v1289 = vpack.c.b16 %v1283, %v1283
      %1290 = vrot.lane.b32.xlu0 %v1284, 4
      %v1291 = vpop.permute.xlu0 %1290
      %1292 = vrot.lane.b32.xlu0 %v1285, 4
      %v1293 = vpop.permute.xlu0 %1292
      %1294 = vrot.lane.b32.xlu0 %v1286, 4
      %v1295 = vpop.permute.xlu0 %1294
      %1296 = vrot.lane.b32.xlu0 %v1287, 4
      %v1297 = vpop.permute.xlu0 %1296
      %1298 = vrot.lane.b32.xlu0 %v1288, 4
      %v1299 = vpop.permute.xlu0 %1298
      %1300 = vrot.lane.b32.xlu0 %v1289, 4
      %v1301 = vpop.permute.xlu0 %1300
      %v1308 = vunpack.c.l.b16 %v1072
      %v1309 = vunpack.c.l.b16 %v1080
      %v1310 = vunpack.c.l.b16 %v1088
      %v1311 = vunpack.c.l.b16 %v1096
      %v1312 = vunpack.c.l.b16 %v1104
      %v1313 = vunpack.c.l.b16 %v1112
      %v1314 = vsel %vm1201, %v1168, %v1167
      %v1315 = vsel %vm1203, %v1169, %v1314
      %v1316 = vsel %vm1205, %v1170, %v1315
      %v1317 = vsel %vm1207, %v1248, %v1316
      %v1318 = vsel %vm1209, %v1308, %v1317
      %v1319 = vsel %vm1201, %v1174, %v1173
      %v1320 = vsel %vm1203, %v1175, %v1319
      %v1321 = vsel %vm1205, %v1176, %v1320
      %v1322 = vsel %vm1207, %v1249, %v1321
      %v1323 = vsel %vm1209, %v1309, %v1322
      %v1324 = vsel %vm1201, %v1180, %v1179
      %v1325 = vsel %vm1203, %v1181, %v1324
      %v1326 = vsel %vm1205, %v1182, %v1325
      %v1327 = vsel %vm1207, %v1250, %v1326
      %v1328 = vsel %vm1209, %v1310, %v1327
      %v1329 = vsel %vm1201, %v1186, %v1185
      %v1330 = vsel %vm1203, %v1187, %v1329
      %v1331 = vsel %vm1205, %v1188, %v1330
      %v1332 = vsel %vm1207, %v1251, %v1331
      %v1333 = vsel %vm1209, %v1311, %v1332
      %v1334 = vsel %vm1201, %v1192, %v1191
      %v1335 = vsel %vm1203, %v1193, %v1334
      %v1336 = vsel %vm1205, %v1194, %v1335
      %v1337 = vsel %vm1207, %v1252, %v1336
      %v1338 = vsel %vm1209, %v1312, %v1337
      %v1339 = vsel %vm1201, %v1198, %v1197
      %v1340 = vsel %vm1203, %v1199, %v1339
      %v1341 = vsel %vm1205, %v1200, %v1340
      %v1342 = vsel %vm1207, %v1253, %v1341
      %v1343 = vsel %vm1209, %v1313, %v1342
      %v1344 = vpack.c.b16 %v1318, %v1318
      %v1345 = vpack.c.b16 %v1323, %v1323
      %v1346 = vpack.c.b16 %v1328, %v1328
      %v1347 = vpack.c.b16 %v1333, %v1333
      %v1348 = vpack.c.b16 %v1338, %v1338
      %v1349 = vpack.c.b16 %v1343, %v1343
      %1350 = vrot.lane.b32.xlu0 %v1344, 8
      %v1351 = vpop.permute.xlu0 %1350
      %1352 = vrot.lane.b32.xlu0 %v1345, 8
      %v1353 = vpop.permute.xlu0 %1352
      %1354 = vrot.lane.b32.xlu0 %v1346, 8
      %v1355 = vpop.permute.xlu0 %1354
      %1356 = vrot.lane.b32.xlu0 %v1347, 8
      %v1357 = vpop.permute.xlu0 %1356
      %1358 = vrot.lane.b32.xlu0 %v1348, 8
      %v1359 = vpop.permute.xlu0 %1358
      %1360 = vrot.lane.b32.xlu0 %v1349, 8
      %v1361 = vpop.permute.xlu0 %1360
      %v1368 = vunpack.c.l.b16 %v1113
      %v1369 = vunpack.c.l.b16 %v1114
      %v1370 = vunpack.c.l.b16 %v1115
      %v1371 = vunpack.c.l.b16 %v1116
      %v1372 = vunpack.c.l.b16 %v1117
      %v1373 = vunpack.c.l.b16 %v1118
      %v1374 = vsel %vm1201, %v1369, %v1368
      %v1375 = vsel %vm1203, %v1370, %v1374
      %v1376 = vsel %vm1205, %v1371, %v1375
      %v1377 = vsel %vm1207, %v1372, %v1376
      %v1378 = vsel %vm1209, %v1373, %v1377
      %v1379 = vpack.c.b16 %v1378, %v1378
      %1380 = vrot.lane.b32.xlu0 %v1237, 12
      %v1381 = vpop.permute.xlu0 %1380
      %1382 = vrot.lane.b32.xlu0 %v1238, 12
      %v1383 = vpop.permute.xlu0 %1382
      %1384 = vrot.lane.b32.xlu0 %v1239, 12
      %v1385 = vpop.permute.xlu0 %1384
      %1386 = vrot.lane.b32.xlu0 %v1240, 12
      %v1387 = vpop.permute.xlu0 %1386
      %1388 = vrot.lane.b32.xlu0 %v1241, 12
      %v1389 = vpop.permute.xlu0 %1388
      %1390 = vrot.lane.b32.xlu0 %v1379, 12
      %v1391 = vpop.permute.xlu0 %1390
      %v1393 = vunpack.c.l.b16 %v1119
      %v1394 = vsel %vm1201, %v1370, %v1369
      %v1395 = vsel %vm1203, %v1371, %v1394
      %v1396 = vsel %vm1205, %v1372, %v1395
      %v1397 = vsel %vm1207, %v1373, %v1396
      %v1398 = vsel %vm1209, %v1393, %v1397
      %v1399 = vpack.c.b16 %v1398, %v1398
      %1400 = vrot.lane.b32.xlu0 %v1285, 16
      %v1401 = vpop.permute.xlu0 %1400
      %1402 = vrot.lane.b32.xlu0 %v1286, 16
      %v1403 = vpop.permute.xlu0 %1402
      %1404 = vrot.lane.b32.xlu0 %v1287, 16
      %v1405 = vpop.permute.xlu0 %1404
      %1406 = vrot.lane.b32.xlu0 %v1288, 16
      %v1407 = vpop.permute.xlu0 %1406
      %1408 = vrot.lane.b32.xlu0 %v1289, 16
      %v1409 = vpop.permute.xlu0 %1408
      %1410 = vrot.lane.b32.xlu0 %v1399, 16
      %v1411 = vpop.permute.xlu0 %1410
      %v1413 = vunpack.c.l.b16 %v1120
      %v1414 = vsel %vm1201, %v1371, %v1370
      %v1415 = vsel %vm1203, %v1372, %v1414
      %v1416 = vsel %vm1205, %v1373, %v1415
      %v1417 = vsel %vm1207, %v1393, %v1416
      %v1418 = vsel %vm1209, %v1413, %v1417
      %v1419 = vpack.c.b16 %v1418, %v1418
      %1420 = vrot.lane.b32.xlu0 %v1345, 20
      %v1421 = vpop.permute.xlu0 %1420
      %1422 = vrot.lane.b32.xlu0 %v1346, 20
      %v1423 = vpop.permute.xlu0 %1422
      %1424 = vrot.lane.b32.xlu0 %v1347, 20
      %v1425 = vpop.permute.xlu0 %1424
      %1426 = vrot.lane.b32.xlu0 %v1348, 20
      %v1427 = vpop.permute.xlu0 %1426
      %1428 = vrot.lane.b32.xlu0 %v1349, 20
      %v1429 = vpop.permute.xlu0 %1428
      %1430 = vrot.lane.b32.xlu0 %v1419, 20
      %v1431 = vpop.permute.xlu0 %1430
      %v1438 = vunpack.c.l.b16 %v1121
      %v1439 = vunpack.c.l.b16 %v1122
      %v1440 = vunpack.c.l.b16 %v1123
      %v1441 = vunpack.c.l.b16 %v1124
      %v1442 = vunpack.c.l.b16 %v1125
      %v1443 = vunpack.c.l.b16 %v1126
      %v1444 = vsel %vm1201, %v1439, %v1438
      %v1445 = vsel %vm1203, %v1440, %v1444
      %v1446 = vsel %vm1205, %v1441, %v1445
      %v1447 = vsel %vm1207, %v1442, %v1446
      %v1448 = vsel %vm1209, %v1443, %v1447
      %v1449 = vpack.c.b16 %v1448, %v1448
      %1450 = vrot.lane.b32.xlu0 %v1238, 24
      %v1451 = vpop.permute.xlu0 %1450
      %1452 = vrot.lane.b32.xlu0 %v1239, 24
      %v1453 = vpop.permute.xlu0 %1452
      %1454 = vrot.lane.b32.xlu0 %v1240, 24
      %v1455 = vpop.permute.xlu0 %1454
      %1456 = vrot.lane.b32.xlu0 %v1241, 24
      %v1457 = vpop.permute.xlu0 %1456
      %1458 = vrot.lane.b32.xlu0 %v1379, 24
      %v1459 = vpop.permute.xlu0 %1458
      %1460 = vrot.lane.b32.xlu0 %v1449, 24
      %v1461 = vpop.permute.xlu0 %1460
      %v1463 = vunpack.c.l.b16 %v1127
      %v1464 = vsel %vm1201, %v1440, %v1439
      %v1465 = vsel %vm1203, %v1441, %v1464
      %v1466 = vsel %vm1205, %v1442, %v1465
      %v1467 = vsel %vm1207, %v1443, %v1466
      %v1468 = vsel %vm1209, %v1463, %v1467
      %v1469 = vpack.c.b16 %v1468, %v1468
      %1470 = vrot.lane.b32.xlu0 %v1286, 28
      %v1471 = vpop.permute.xlu0 %1470
      %1472 = vrot.lane.b32.xlu0 %v1287, 28
      %v1473 = vpop.permute.xlu0 %1472
      %1474 = vrot.lane.b32.xlu0 %v1288, 28
      %v1475 = vpop.permute.xlu0 %1474
      %1476 = vrot.lane.b32.xlu0 %v1289, 28
      %v1477 = vpop.permute.xlu0 %1476
      %1478 = vrot.lane.b32.xlu0 %v1399, 28
      %v1479 = vpop.permute.xlu0 %1478
      %1480 = vrot.lane.b32.xlu0 %v1469, 28
      %v1481 = vpop.permute.xlu0 %1480
      %v1483 = vunpack.c.l.b16 %v1128
      %v1484 = vsel %vm1201, %v1441, %v1440
      %v1485 = vsel %vm1203, %v1442, %v1484
      %v1486 = vsel %vm1205, %v1443, %v1485
      %v1487 = vsel %vm1207, %v1463, %v1486
      %v1488 = vsel %vm1209, %v1483, %v1487
      %v1489 = vpack.c.b16 %v1488, %v1488
      %1490 = vrot.lane.b32.xlu0 %v1346, 32
      %v1491 = vpop.permute.xlu0 %1490
      %1492 = vrot.lane.b32.xlu0 %v1347, 32
      %v1493 = vpop.permute.xlu0 %1492
      %1494 = vrot.lane.b32.xlu0 %v1348, 32
      %v1495 = vpop.permute.xlu0 %1494
      %1496 = vrot.lane.b32.xlu0 %v1349, 32
      %v1497 = vpop.permute.xlu0 %1496
      %1498 = vrot.lane.b32.xlu0 %v1419, 32
      %v1499 = vpop.permute.xlu0 %1498
      %1500 = vrot.lane.b32.xlu0 %v1489, 32
      %v1501 = vpop.permute.xlu0 %1500
      %v1504 = vsel %vm215, %v1236, %v1291
      %v1507 = vsel %vm215, %v1237, %v1293
      %v1510 = vsel %vm215, %v1238, %v1295
      %v1513 = vsel %vm215, %v1239, %v1297
      %v1516 = vsel %vm215, %v1240, %v1299
      %v1519 = vsel %vm215, %v1241, %v1301
      %vm1520 = vcmask 64512
      %v1522 = vsel %vm1520, %v1504, %v1351
      %v1524 = vsel %vm1520, %v1507, %v1353
      %v1526 = vsel %vm1520, %v1510, %v1355
      %v1528 = vsel %vm1520, %v1513, %v1357
      %v1530 = vsel %vm1520, %v1516, %v1359
      %v1532 = vsel %vm1520, %v1519, %v1361
      %vm1533 = vcmask 97280
      %v1535 = vsel %vm1533, %v1522, %v1381
      %v1537 = vsel %vm1533, %v1524, %v1383
      %v1539 = vsel %vm1533, %v1526, %v1385
      %v1541 = vsel %vm1533, %v1528, %v1387
      %v1543 = vsel %vm1533, %v1530, %v1389
      %v1545 = vsel %vm1533, %v1532, %v1391
      %vm1546 = vcmask 130048
      %v1548 = vsel %vm1546, %v1535, %v1401
      %v1550 = vsel %vm1546, %v1537, %v1403
      %v1552 = vsel %vm1546, %v1539, %v1405
      %v1554 = vsel %vm1546, %v1541, %v1407
      %v1556 = vsel %vm1546, %v1543, %v1409
      %v1558 = vsel %vm1546, %v1545, %v1411
      %vm1559 = vcmask 162816
      %v1561 = vsel %vm1559, %v1548, %v1421
      %v1563 = vsel %vm1559, %v1550, %v1423
      %v1565 = vsel %vm1559, %v1552, %v1425
      %v1567 = vsel %vm1559, %v1554, %v1427
      %v1569 = vsel %vm1559, %v1556, %v1429
      %v1571 = vsel %vm1559, %v1558, %v1431
      %vm1572 = vcmask 195584
      %v1574 = vsel %vm1572, %v1561, %v1451
      %v1576 = vsel %vm1572, %v1563, %v1453
      %v1578 = vsel %vm1572, %v1565, %v1455
      %v1580 = vsel %vm1572, %v1567, %v1457
      %v1582 = vsel %vm1572, %v1569, %v1459
      %v1584 = vsel %vm1572, %v1571, %v1461
      %vm1585 = vcmask 228352
      %v1587 = vsel %vm1585, %v1574, %v1471
      %v1589 = vsel %vm1585, %v1576, %v1473
      %v1591 = vsel %vm1585, %v1578, %v1475
      %v1593 = vsel %vm1585, %v1580, %v1477
      %v1595 = vsel %vm1585, %v1582, %v1479
      %v1597 = vsel %vm1585, %v1584, %v1481
      %vm1598 = vcmask 261120
      %v1600 = vsel %vm1598, %v1587, %v1491
      %v1602 = vsel %vm1598, %v1589, %v1493
      %v1604 = vsel %vm1598, %v1591, %v1495
      %v1606 = vsel %vm1598, %v1593, %v1497
      %v1608 = vsel %vm1598, %v1595, %v1499
      %v1610 = vsel %vm1598, %v1597, %v1501
      %vm1611 = vcmask 293888
      %v1613 = vsel %vm1611, %v1600, 0
      %v1614 = vsel %vm1611, %v1602, 0
      %v1615 = vsel %vm1611, %v1604, 0
      %v1616 = vsel %vm1611, %v1606, 0
      %v1617 = vsel %vm1611, %v1608, 0
      %v1618 = vsel %vm1611, %v1610, 0
      %v1626 = vunpack.c.l.s4 1966171168
      %v1627 = vunpack.c.0.s8 %v1626
      %v1628 = vlaneseq
      %v1629 = vshrl.u32 %v1628, 7
      %v1630 = vsub.s32 %v1627, %v1629
      %v1631 = vrot.slane %v1613, %v1630
      %v1632 = vcombine.high %v1631, %v1631
      %v1634 = vunpack.c.l.s4 1966171168
      %v1635 = vunpack.c.0.s8 %v1634
      %v1636 = vlaneseq
      %v1637 = vshrl.u32 %v1636, 7
      %v1638 = vsub.s32 %v1635, %v1637
      %v1639 = vrot.slane %v1631, %v1638
      %v1641 = vunpack.c.l.s4 1966171168
      %v1642 = vunpack.c.0.s8 %v1641
      %v1643 = vlaneseq
      %v1644 = vshrl.u32 %v1643, 7
      %v1645 = vsub.s32 %v1642, %v1644
      %v1646 = vrot.slane %v1632, %v1645
      %v1647 = vcombine.high %v1639, %v1639
      %v1649 = vunpack.c.l.s4 1966171168
      %v1650 = vunpack.c.0.s8 %v1649
      %v1651 = vlaneseq
      %v1652 = vshrl.u32 %v1651, 7
      %v1653 = vsub.s32 %v1650, %v1652
      %v1654 = vrot.slane %v1614, %v1653
      %v1655 = vcombine.high %v1654, %v1654
      %v1657 = vunpack.c.l.s4 1966171168
      %v1658 = vunpack.c.0.s8 %v1657
      %v1659 = vlaneseq
      %v1660 = vshrl.u32 %v1659, 7
      %v1661 = vsub.s32 %v1658, %v1660
      %v1662 = vrot.slane %v1654, %v1661
      %v1664 = vunpack.c.l.s4 1966171168
      %v1665 = vunpack.c.0.s8 %v1664
      %v1666 = vlaneseq
      %v1667 = vshrl.u32 %v1666, 7
      %v1668 = vsub.s32 %v1665, %v1667
      %v1669 = vrot.slane %v1655, %v1668
      %v1670 = vcombine.high %v1662, %v1662
      %v1672 = vunpack.c.l.s4 1966171168
      %v1673 = vunpack.c.0.s8 %v1672
      %v1674 = vlaneseq
      %v1675 = vshrl.u32 %v1674, 7
      %v1676 = vsub.s32 %v1673, %v1675
      %v1677 = vrot.slane %v1615, %v1676
      %v1678 = vcombine.high %v1677, %v1677
      %v1680 = vunpack.c.l.s4 1966171168
      %v1681 = vunpack.c.0.s8 %v1680
      %v1682 = vlaneseq
      %v1683 = vshrl.u32 %v1682, 7
      %v1684 = vsub.s32 %v1681, %v1683
      %v1685 = vrot.slane %v1677, %v1684
      %v1687 = vunpack.c.l.s4 1966171168
      %v1688 = vunpack.c.0.s8 %v1687
      %v1689 = vlaneseq
      %v1690 = vshrl.u32 %v1689, 7
      %v1691 = vsub.s32 %v1688, %v1690
      %v1692 = vrot.slane %v1678, %v1691
      %v1693 = vcombine.high %v1685, %v1685
      %v1695 = vunpack.c.l.s4 1966171168
      %v1696 = vunpack.c.0.s8 %v1695
      %v1697 = vlaneseq
      %v1698 = vshrl.u32 %v1697, 7
      %v1699 = vsub.s32 %v1696, %v1698
      %v1700 = vrot.slane %v1616, %v1699
      %v1701 = vcombine.high %v1700, %v1700
      %v1703 = vunpack.c.l.s4 1966171168
      %v1704 = vunpack.c.0.s8 %v1703
      %v1705 = vlaneseq
      %v1706 = vshrl.u32 %v1705, 7
      %v1707 = vsub.s32 %v1704, %v1706
      %v1708 = vrot.slane %v1700, %v1707
      %v1710 = vunpack.c.l.s4 1966171168
      %v1711 = vunpack.c.0.s8 %v1710
      %v1712 = vlaneseq
      %v1713 = vshrl.u32 %v1712, 7
      %v1714 = vsub.s32 %v1711, %v1713
      %v1715 = vrot.slane %v1701, %v1714
      %v1716 = vcombine.high %v1708, %v1708
      %v1718 = vunpack.c.l.s4 1966171168
      %v1719 = vunpack.c.0.s8 %v1718
      %v1720 = vlaneseq
      %v1721 = vshrl.u32 %v1720, 7
      %v1722 = vsub.s32 %v1719, %v1721
      %v1723 = vrot.slane %v1617, %v1722
      %v1724 = vcombine.high %v1723, %v1723
      %v1726 = vunpack.c.l.s4 1966171168
      %v1727 = vunpack.c.0.s8 %v1726
      %v1728 = vlaneseq
      %v1729 = vshrl.u32 %v1728, 7
      %v1730 = vsub.s32 %v1727, %v1729
      %v1731 = vrot.slane %v1723, %v1730
      %v1733 = vunpack.c.l.s4 1966171168
      %v1734 = vunpack.c.0.s8 %v1733
      %v1735 = vlaneseq
      %v1736 = vshrl.u32 %v1735, 7
      %v1737 = vsub.s32 %v1734, %v1736
      %v1738 = vrot.slane %v1724, %v1737
      %v1739 = vcombine.high %v1731, %v1731
      %v1741 = vunpack.c.l.s4 1966171168
      %v1742 = vunpack.c.0.s8 %v1741
      %v1743 = vlaneseq
      %v1744 = vshrl.u32 %v1743, 7
      %v1745 = vsub.s32 %v1742, %v1744
      %v1746 = vrot.slane %v1618, %v1745
      %v1747 = vcombine.high %v1746, %v1746
      %v1749 = vunpack.c.l.s4 1966171168
      %v1750 = vunpack.c.0.s8 %v1749
      %v1751 = vlaneseq
      %v1752 = vshrl.u32 %v1751, 7
      %v1753 = vsub.s32 %v1750, %v1752
      %v1754 = vrot.slane %v1746, %v1753
      %v1756 = vunpack.c.l.s4 1966171168
      %v1757 = vunpack.c.0.s8 %v1756
      %v1758 = vlaneseq
      %v1759 = vshrl.u32 %v1758, 7
      %v1760 = vsub.s32 %v1757, %v1759
      %v1761 = vrot.slane %v1747, %v1760
      %v1762 = vcombine.high %v1754, %v1754
      %v1763 = vld [vmem:[%s1] sm:$0xf]
      %v1764 = vld [vmem:[%s1 + $0x4] sm:$0xf]
      %v1765 = vld [vmem:[%s1 + $0x8] sm:$0xf]
      %v1766 = vld [vmem:[%s1 + $0xc] sm:$0xf]
      %v1767 = vld [vmem:[%s1 + $0x10] sm:$0xf]
      %v1768 = vld [vmem:[%s1 + $0x14] sm:$0xf]
      %v1769 = vld [vmem:[%s1 + $0x18] sm:$0xf]
      %v1770 = vld [vmem:[%s1 + $0x1c] sm:$0xf]
      %v1771 = vld [vmem:[%s1 + $0x20] sm:$0xf]
      %v1772 = vld [vmem:[%s1 + $0x24] sm:$0xf]
      %v1773 = vld [vmem:[%s1 + $0x28] sm:$0xf]
      %v1774 = vld [vmem:[%s1 + $0x2c] sm:$0xf]
      %v1775 = vld [vmem:[%s1 + $0x30] sm:$0xf]
      %v1776 = vld [vmem:[%s1 + $0x34] sm:$0xf]
      %v1777 = vld [vmem:[%s1 + $0x38] sm:$0xf]
      %v1778 = vld [vmem:[%s1 + $0x3c] sm:$0xf]
      %v1779 = vcombine.low %v1639, %v1646
      %v1780 = vcombine.low %v1647, %v1662
      %v1781 = vcombine.low %v1669, %v1670
      %v1782 = vcombine.low %v1685, %v1692
      %v1784 = vunpack.c.l.s4 1966171168
      %v1785 = vunpack.c.0.s8 %v1784
      %v1786 = vlaneseq
      %v1787 = vshrl.u32 %v1786, 7
      %v1788 = vsub.s32 %v1785, %v1787
      %v1789 = vrot.slane %v1779, %v1788
      %v1791 = vunpack.c.l.s4 1966171168
      %v1792 = vunpack.c.0.s8 %v1791
      %v1793 = vlaneseq
      %v1794 = vshrl.u32 %v1793, 7
      %v1795 = vsub.s32 %v1792, %v1794
      %v1796 = vrot.slane %v1780, %v1795
      %v1798 = vunpack.c.l.s4 1966171168
      %v1799 = vunpack.c.0.s8 %v1798
      %v1800 = vlaneseq
      %v1801 = vshrl.u32 %v1800, 7
      %v1802 = vsub.s32 %v1799, %v1801
      %v1803 = vrot.slane %v1781, %v1802
      %v1805 = vunpack.c.l.s4 1966171168
      %v1806 = vunpack.c.0.s8 %v1805
      %v1807 = vlaneseq
      %v1808 = vshrl.u32 %v1807, 7
      %v1809 = vsub.s32 %v1806, %v1808
      %v1810 = vrot.slane %v1782, %v1809
      %v1811 = vcombine.low %v1789, %v1796
      %v1812 = vcombine.low %v1803, %v1810
      %v1814 = vunpack.c.l.s4 1966171168
      %v1815 = vunpack.c.0.s8 %v1814
      %v1816 = vlaneseq
      %v1817 = vshrl.u32 %v1816, 7
      %v1818 = vsub.s32 %v1815, %v1817
      %v1819 = vrot.slane %v1811, %v1818
      %v1821 = vunpack.c.l.s4 1966171168
      %v1822 = vunpack.c.0.s8 %v1821
      %v1823 = vlaneseq
      %v1824 = vshrl.u32 %v1823, 7
      %v1825 = vsub.s32 %v1822, %v1824
      %v1826 = vrot.slane %v1812, %v1825
      %v1827 = vcombine.low %v1819, %v1826
      %v1828 = vcombine.low %v1693, %v1708
      %v1829 = vcombine.low %v1715, %v1716
      %v1830 = vcombine.low %v1731, %v1738
      %v1831 = vcombine.low %v1739, %v1754
      %v1833 = vunpack.c.l.s4 1966171168
      %v1834 = vunpack.c.0.s8 %v1833
      %v1835 = vlaneseq
      %v1836 = vshrl.u32 %v1835, 7
      %v1837 = vsub.s32 %v1834, %v1836
      %v1838 = vrot.slane %v1828, %v1837
      %v1840 = vunpack.c.l.s4 1966171168
      %v1841 = vunpack.c.0.s8 %v1840
      %v1842 = vlaneseq
      %v1843 = vshrl.u32 %v1842, 7
      %v1844 = vsub.s32 %v1841, %v1843
      %v1845 = vrot.slane %v1829, %v1844
      %v1847 = vunpack.c.l.s4 1966171168
      %v1848 = vunpack.c.0.s8 %v1847
      %v1849 = vlaneseq
      %v1850 = vshrl.u32 %v1849, 7
      %v1851 = vsub.s32 %v1848, %v1850
      %v1852 = vrot.slane %v1830, %v1851
      %v1854 = vunpack.c.l.s4 1966171168
      %v1855 = vunpack.c.0.s8 %v1854
      %v1856 = vlaneseq
      %v1857 = vshrl.u32 %v1856, 7
      %v1858 = vsub.s32 %v1855, %v1857
      %v1859 = vrot.slane %v1831, %v1858
      %v1860 = vcombine.low %v1838, %v1845
      %v1861 = vcombine.low %v1852, %v1859
      %v1863 = vunpack.c.l.s4 1966171168
      %v1864 = vunpack.c.0.s8 %v1863
      %v1865 = vlaneseq
      %v1866 = vshrl.u32 %v1865, 7
      %v1867 = vsub.s32 %v1864, %v1866
      %v1868 = vrot.slane %v1860, %v1867
      %v1870 = vunpack.c.l.s4 1966171168
      %v1871 = vunpack.c.0.s8 %v1870
      %v1872 = vlaneseq
      %v1873 = vshrl.u32 %v1872, 7
      %v1874 = vsub.s32 %v1871, %v1873
      %v1875 = vrot.slane %v1861, %v1874
      %v1876 = vcombine.low %v1868, %v1875
      %v1877 = vcombine.low %v1761, %v1762
      %v1879 = vunpack.c.l.s4 1966171168
      %v1880 = vunpack.c.0.s8 %v1879
      %v1881 = vlaneseq
      %v1882 = vshrl.u32 %v1881, 7
      %v1883 = vsub.s32 %v1880, %v1882
      %v1884 = vrot.slane %v1877, %v1883
      %v1886 = vunpack.c.l.s4 1966171168
      %v1887 = vunpack.c.0.s8 %v1886
      %v1888 = vlaneseq
      %v1889 = vshrl.u32 %v1888, 7
      %v1890 = vsub.s32 %v1887, %v1889
      %v1891 = vrot.slane %v1884, %v1890
      %v1911 = vunpack.c.l.b16 %v1763
      %v1912 = vunpack.c.l.b16 %v1764
      %v1913 = vunpack.c.l.b16 %v1765
      %v1914 = vunpack.c.l.b16 %v1766
      %v1915 = vunpack.c.l.b16 %v1767
      %v1916 = vunpack.c.l.b16 %v1768
      %v1917 = vunpack.c.l.b16 %v1769
      %v1918 = vunpack.c.l.b16 %v1770
      %v1919 = vunpack.c.l.b16 %v1771
      %v1920 = vunpack.c.l.b16 %v1772
      %v1921 = vunpack.c.l.b16 %v1773
      %v1922 = vunpack.c.l.b16 %v1774
      %v1923 = vunpack.c.l.b16 %v1775
      %v1924 = vunpack.c.l.b16 %v1776
      %v1925 = vunpack.c.l.b16 %v1777
      %v1926 = vunpack.c.l.b16 %v1778
      %v1927 = vpack.c.b16 %v1912, %v1911
      %v1928 = vpack.c.b16 %v1914, %v1913
      %v1929 = vpack.c.b16 %v1916, %v1915
      %v1930 = vpack.c.b16 %v1918, %v1917
      %v1931 = vpack.c.b16 %v1920, %v1919
      %v1932 = vpack.c.b16 %v1922, %v1921
      %v1933 = vpack.c.b16 %v1924, %v1923
      %v1934 = vpack.c.b16 %v1926, %v1925
      %1943 = vmatprep.subr.bf16.mxu0 0
      %1944 = vmatpush1.bf16.msra.mxu0 %v1934
      %1945 = vmatprep.subr.bf16.mxu0 0
      %1946 = vmatpush1.bf16.msra.mxu0 %v1933
      %1947 = vmatprep.subr.bf16.mxu0 0
      %1948 = vmatpush1.bf16.msra.mxu0 %v1932
      %1949 = vmatprep.subr.bf16.mxu0 0
      %1950 = vmatpush1.bf16.msra.mxu0 %v1931
      %1951 = vmatprep.subr.bf16.mxu0 0
      %1952 = vmatpush1.bf16.msra.mxu0 %v1930
      %1953 = vmatprep.subr.bf16.mxu0 0
      %1954 = vmatpush1.bf16.msra.mxu0 %v1929
      %1955 = vmatprep.subr.bf16.mxu0 0
      %1956 = vmatpush1.bf16.msra.mxu0 %v1928
      %1957 = vmatprep.subr.bf16.mxu0 0
      %1958 = vmatpush1.bf16.msra.mxu0 %v1927
      %1959 = vmatprep.subr.bf16.mxu0 0
      %1960 = vmatpush2.bf16.msra.mxu0 0
      %1961 = vmatprep.subr.bf16.mxu0 0
      %1962 = vmatpush2.bf16.msra.mxu0 0
      %1963 = vmatprep.subr.bf16.mxu0 0
      %1964 = vmatpush2.bf16.msra.mxu0 0
      %1965 = vmatprep.subr.bf16.mxu0 0
      %1966 = vmatpush2.bf16.msra.mxu0 0
      %1967 = vmatprep.subr.bf16.mxu0 0
      %1968 = vmatpush2.bf16.msra.mxu0 0
      %1969 = vmatprep.subr.bf16.mxu0 0
      %1970 = vmatpush2.bf16.msra.mxu0 0
      %1971 = vmatprep.subr.bf16.mxu0 0
      %1972 = vmatpush2.bf16.msra.mxu0 0
      %1973 = vmatprep.subr.bf16.mxu0 0
      %1974 = vmatpush2.bf16.msra.mxu0 0
      %1975 = vmatprep.mubr.bf16.mxu0 0
      %1976 = vmatmul.mubr.bf16.gmra.mxu0 %v1827
      %v1977 = vpop.f32.mrf.mxu0
      %v1978 = vadd.f32 0.0, %v1977
      %v1979 = vpop.f32.mrf.mxu0
      %v1980 = vpop.f32.mrf.mxu0
      %v1981 = vadd.f32 0.0, %v1980
      %v1982 = vpop.f32.mrf.mxu0
      %1983 = vmatprep.mubr.bf16.mxu0 0
      %1984 = vmatmul.mubr.bf16.gmra.mxu0 %v1876
      %v1985 = vpop.f32.mrf.mxu0
      %v1986 = vadd.f32 0.0, %v1985
      %v1987 = vpop.f32.mrf.mxu0
      %v1988 = vpop.f32.mrf.mxu0
      %v1989 = vadd.f32 0.0, %v1988
      %v1990 = vpop.f32.mrf.mxu0
      %1991 = vmatprep.mubr.bf16.mxu0 0
      %1992 = vmatmul.mubr.bf16.gmra.mxu0 %v1891
      %v1993 = vpop.f32.mrf.mxu0
      %v1994 = vadd.f32 0.0, %v1993
      %v1995 = vpop.f32.mrf.mxu0
      %v1996 = vpop.f32.mrf.mxu0
      %v1997 = vpop.f32.mrf.mxu0
      %1998 = vdwg.mxu0
      %v2004 = vcombine.high %v1978, %v1978
      %v2006 = vunpack.c.l.s4 1983009808
      %v2007 = vunpack.c.0.s8 %v2006
      %v2008 = vlaneseq
      %v2009 = vshrl.u32 %v2008, 7
      %v2010 = vsub.s32 %v2007, %v2009
      %v2011 = vrot.slane %v1978, %v2010
      %v2013 = vunpack.c.l.s4 1983009808
      %v2014 = vunpack.c.0.s8 %v2013
      %v2015 = vlaneseq
      %v2016 = vshrl.u32 %v2015, 7
      %v2017 = vsub.s32 %v2014, %v2016
      %v2018 = vrot.slane %v2004, %v2017
      %v2019 = vcombine.high %v2011, %v2011
      %v2020 = vcombine.high %v2018, %v2018
      %v2021 = vcombine.high %v1981, %v1981
      %v2023 = vunpack.c.l.s4 1983009808
      %v2024 = vunpack.c.0.s8 %v2023
      %v2025 = vlaneseq
      %v2026 = vshrl.u32 %v2025, 7
      %v2027 = vsub.s32 %v2024, %v2026
      %v2028 = vrot.slane %v1981, %v2027
      %v2030 = vunpack.c.l.s4 1983009808
      %v2031 = vunpack.c.0.s8 %v2030
      %v2032 = vlaneseq
      %v2033 = vshrl.u32 %v2032, 7
      %v2034 = vsub.s32 %v2031, %v2033
      %v2035 = vrot.slane %v2021, %v2034
      %v2036 = vcombine.high %v2028, %v2028
      %v2037 = vcombine.high %v2035, %v2035
      %v2038 = vcombine.high %v1986, %v1986
      %v2040 = vunpack.c.l.s4 1983009808
      %v2041 = vunpack.c.0.s8 %v2040
      %v2042 = vlaneseq
      %v2043 = vshrl.u32 %v2042, 7
      %v2044 = vsub.s32 %v2041, %v2043
      %v2045 = vrot.slane %v1986, %v2044
      %v2047 = vunpack.c.l.s4 1983009808
      %v2048 = vunpack.c.0.s8 %v2047
      %v2049 = vlaneseq
      %v2050 = vshrl.u32 %v2049, 7
      %v2051 = vsub.s32 %v2048, %v2050
      %v2052 = vrot.slane %v2038, %v2051
      %v2053 = vcombine.high %v2045, %v2045
      %v2054 = vcombine.high %v2052, %v2052
      %v2055 = vcombine.high %v1989, %v1989
      %v2057 = vunpack.c.l.s4 1983009808
      %v2058 = vunpack.c.0.s8 %v2057
      %v2059 = vlaneseq
      %v2060 = vshrl.u32 %v2059, 7
      %v2061 = vsub.s32 %v2058, %v2060
      %v2062 = vrot.slane %v1989, %v2061
      %v2064 = vunpack.c.l.s4 1983009808
      %v2065 = vunpack.c.0.s8 %v2064
      %v2066 = vlaneseq
      %v2067 = vshrl.u32 %v2066, 7
      %v2068 = vsub.s32 %v2065, %v2067
      %v2069 = vrot.slane %v2055, %v2068
      %v2070 = vcombine.high %v2062, %v2062
      %v2071 = vcombine.high %v2069, %v2069
      %v2073 = vunpack.c.l.s4 1983009808
      %v2074 = vunpack.c.0.s8 %v2073
      %v2075 = vlaneseq
      %v2076 = vshrl.u32 %v2075, 7
      %v2077 = vsub.s32 %v2074, %v2076
      %v2078 = vrot.slane %v1994, %v2077
      %v2079 = vcombine.high %v2078, %v2078
      %v2080 = vcombine.low %v2011, %v2019
      %v2082 = vunpack.c.l.s4 1983009808
      %v2083 = vunpack.c.0.s8 %v2082
      %v2084 = vlaneseq
      %v2085 = vshrl.u32 %v2084, 7
      %v2086 = vsub.s32 %v2083, %v2085
      %v2087 = vrot.slane %v2080, %v2086
      %v2089 = vunpack.c.l.s4 1983009808
      %v2090 = vunpack.c.0.s8 %v2089
      %v2091 = vlaneseq
      %v2092 = vshrl.u32 %v2091, 7
      %v2093 = vsub.s32 %v2090, %v2092
      %v2094 = vrot.slane %v2018, %v2093
      %v2095 = vcombine.low %v2087, %v2094
      %v2096 = vcombine.low %v2020, %v2028
      %v2098 = vunpack.c.l.s4 1983009808
      %v2099 = vunpack.c.0.s8 %v2098
      %v2100 = vlaneseq
      %v2101 = vshrl.u32 %v2100, 7
      %v2102 = vsub.s32 %v2099, %v2101
      %v2103 = vrot.slane %v2096, %v2102
      %v2105 = vunpack.c.l.s4 1983009808
      %v2106 = vunpack.c.0.s8 %v2105
      %v2107 = vlaneseq
      %v2108 = vshrl.u32 %v2107, 7
      %v2109 = vsub.s32 %v2106, %v2108
      %v2110 = vrot.slane %v2036, %v2109
      %v2111 = vcombine.low %v2103, %v2110
      %v2112 = vcombine.low %v2035, %v2037
      %v2114 = vunpack.c.l.s4 1983009808
      %v2115 = vunpack.c.0.s8 %v2114
      %v2116 = vlaneseq
      %v2117 = vshrl.u32 %v2116, 7
      %v2118 = vsub.s32 %v2115, %v2117
      %v2119 = vrot.slane %v2112, %v2118
      %v2121 = vunpack.c.l.s4 1983009808
      %v2122 = vunpack.c.0.s8 %v2121
      %v2123 = vlaneseq
      %v2124 = vshrl.u32 %v2123, 7
      %v2125 = vsub.s32 %v2122, %v2124
      %v2126 = vrot.slane %v2045, %v2125
      %v2127 = vcombine.low %v2119, %v2126
      %v2128 = vcombine.low %v2053, %v2052
      %v2130 = vunpack.c.l.s4 1983009808
      %v2131 = vunpack.c.0.s8 %v2130
      %v2132 = vlaneseq
      %v2133 = vshrl.u32 %v2132, 7
      %v2134 = vsub.s32 %v2131, %v2133
      %v2135 = vrot.slane %v2128, %v2134
      %v2137 = vunpack.c.l.s4 1983009808
      %v2138 = vunpack.c.0.s8 %v2137
      %v2139 = vlaneseq
      %v2140 = vshrl.u32 %v2139, 7
      %v2141 = vsub.s32 %v2138, %v2140
      %v2142 = vrot.slane %v2054, %v2141
      %v2143 = vcombine.low %v2135, %v2142
      %v2144 = vcombine.low %v2062, %v2070
      %v2146 = vunpack.c.l.s4 1983009808
      %v2147 = vunpack.c.0.s8 %v2146
      %v2148 = vlaneseq
      %v2149 = vshrl.u32 %v2148, 7
      %v2150 = vsub.s32 %v2147, %v2149
      %v2151 = vrot.slane %v2144, %v2150
      %v2153 = vunpack.c.l.s4 1983009808
      %v2154 = vunpack.c.0.s8 %v2153
      %v2155 = vlaneseq
      %v2156 = vshrl.u32 %v2155, 7
      %v2157 = vsub.s32 %v2154, %v2156
      %v2158 = vrot.slane %v2069, %v2157
      %v2159 = vcombine.low %v2151, %v2158
      %v2160 = vcombine.low %v2071, %v2078
      %v2162 = vunpack.c.l.s4 1983009808
      %v2163 = vunpack.c.0.s8 %v2162
      %v2164 = vlaneseq
      %v2165 = vshrl.u32 %v2164, 7
      %v2166 = vsub.s32 %v2163, %v2165
      %v2167 = vrot.slane %v2160, %v2166
      %v2169 = vunpack.c.l.s4 1983009808
      %v2170 = vunpack.c.0.s8 %v2169
      %v2171 = vlaneseq
      %v2172 = vshrl.u32 %v2171, 7
      %v2173 = vsub.s32 %v2170, %v2172
      %v2174 = vrot.slane %v2079, %v2173
      %v2175 = vcombine.low %v2167, %v2174
      %v2182 = vpack.c.bf16 %v2095, %v2095
      %v2183 = vpack.c.bf16 %v2111, %v2111
      %v2184 = vpack.c.bf16 %v2127, %v2127
      %v2185 = vpack.c.bf16 %v2143, %v2143
      %v2186 = vpack.c.bf16 %v2159, %v2159
      %v2187 = vpack.c.bf16 %v2175, %v2175
      %2188 = vst [vmem:[%s177] sm:$0x7] %v2182
      %2189 = vst [vmem:[%s177 + $0x4] sm:$0x7] %v2183
      %2190 = vst [vmem:[%s177 + $0x8] sm:$0x7] %v2184
      %2191 = vst [vmem:[%s177 + $0xc] sm:$0x7] %v2185
      %2192 = vst [vmem:[%s177 + $0x10] sm:$0x7] %v2186
      %2193 = vst [vmem:[%s177 + $0x14] sm:$0x7] %v2187
      %v2194 = vadd.f32 %v1978, %v1981
      %v2195 = vadd.f32 %v2194, %v1986
      %v2196 = vadd.f32 %v2195, %v1989
      %vm2197 = vcmask 1043456
      %v2198 = vsel %vm2197, %v1994, 0.0
      %v2199 = vadd.f32 %v2196, %v2198
      %v2200 = vrot.slane %v2199, 4
      %v2201 = vadd.f32 %v2199, %v2200
      %v2202 = vrot.slane %v2201, 2
      %v2203 = vadd.f32 %v2201, %v2202
      %v2204 = vrot.slane %v2203, 1
      %v2205 = vadd.f32 %v2203, %v2204
      %2206 = vst [vmem:[%s181] sm:$0x1] %v2205
      %v2207 = vmul.f32 %v1978, %v1978
      %v2208 = vmul.f32 %v1981, %v1981
      %v2209 = vmul.f32 %v1986, %v1986
      %v2210 = vmul.f32 %v1989, %v1989
      %v2211 = vmul.f32 %v1994, %v1994
      %v2212 = vadd.f32 %v2207, %v2208
      %v2213 = vadd.f32 %v2212, %v2209
      %v2214 = vadd.f32 %v2213, %v2210
      %v2215 = vsel %vm2197, %v2211, 0.0
      %v2216 = vadd.f32 %v2214, %v2215
      %v2217 = vrot.slane %v2216, 4
      %v2218 = vadd.f32 %v2216, %v2217
      %v2219 = vrot.slane %v2218, 2
      %v2220 = vadd.f32 %v2218, %v2219
      %v2221 = vrot.slane %v2220, 1
      %v2222 = vadd.f32 %v2220, %v2221
      %2223 = vst [vmem:[%s181 + $0x1] sm:$0x1] %v2222
      %p2224 = scmp.lt.s32.totalorder %s15, 1
      %s2225 = scalar_select %p2224, %s15, 1
      %s2226 = smul.addr %s2225, 6
      %s2227 = smul.addr %s2226, 4
      %s2228 = scalar_lea.vmem %s2, %s2227
      %p2229 = scmp.lt.s32.totalorder %s15, 1
      %s2230 = scalar_select %p2229, %s15, 1
      %s2231 = smul.addr %s2230, 2
      %s2232 = scalar_lea.vmem %s3, %s2231
      // Predicated region
      $region29: #{down_forward.3} parent=27 // pred_check
        %p2233 = pneg %p80
      $region30: #{down_forward.3} parent=27 // pred_check_branch
        %2235 = sbr.rel (%p2233) target = $region32
      $region31: #{down_forward.3} parent=27 // pred_region
        _
      $region32: #{down_forward.3} parent=27 // pred_fallthru
        _
      // Predicated region
      $region33: #{down_forward.3} parent=27 // pred_check
        %p2236 = pneg %p106
      $region34: #{down_forward.3} parent=27 // pred_check_branch
        %2238 = sbr.rel (%p2236) target = $region36
      $region35: #{down_forward.3} parent=27 // pred_region
        _
      $region36: #{down_forward.3} parent=27 // pred_fallthru
        _
    $region28: #{down_forward.3} parent=5 // pred_fallthru
      _
    %p2239 = scmp.le.s32.totalorder 2, %s10
    // Predicated region
    $region37: #{down_forward.3} parent=5 // pred_check
      %p2240 = pneg %p2239
    $region38: #{down_forward.3} parent=5 // pred_check_branch
      %2242 = sbr.rel (%p2240) target = $region40
    $region39: #{down_forward.3} parent=5 // pred_region
      %s2243 = ssub.s32 %s10, 2
      // Predicated region
      $region41: #{down_forward.3} parent=39 // pred_check
        %p2244 = pneg %p86
      $region42: #{down_forward.3} parent=39 // pred_check_branch
        %2246 = sbr.rel (%p2244) target = $region44
      $region43: #{down_forward.3} parent=39 // pred_region
        %p2247 = scmp.lt.s32.totalorder %s16, 1
        %s2248 = scalar_select %p2247, %s16, 1
        %s2249 = smul.addr %s2248, 6
        %s2250 = smul.addr %s2249, 4
        %s2251 = scalar_lea.vmem %s2, %s2250
      $region44: #{down_forward.3} parent=39 // pred_fallthru
        _
      // Predicated region
      $region45: #{down_forward.3} parent=39 // pred_check
        %p2252 = pneg %p112
      $region46: #{down_forward.3} parent=39 // pred_check_branch
        %2254 = sbr.rel (%p2252) target = $region48
      $region47: #{down_forward.3} parent=39 // pred_region
        %p2255 = scmp.lt.s32.totalorder %s16, 1
        %s2256 = scalar_select %p2255, %s16, 1
        %s2257 = smul.addr %s2256, 2
        %s2258 = scalar_lea.vmem %s3, %s2257
      $region48: #{down_forward.3} parent=39 // pred_fallthru
        _
    $region40: #{down_forward.3} parent=5 // pred_fallthru
      _
  $region6: #{down_forward.3} parent=0 // loop_footer
    %s14 = sadd.s32 1, %s10
  $region7: #{down_forward.3} parent=0 // loop_footer_branch
    %9 = sbr.rel target = $region3
  $region8: #{down_forward.3} parent=0 // loop_exit
    _

// kernel: down_forward.4
$region0: #{down_forward.4}
  #allocation0 [shape = 'u32[]', space=smem, size = 0x4, offset = 0x4, fixed_abs, tag = 'smem constant byte address 0x4 - core index']
  #allocation1 [shape = 'u32[144,128]{1,0:T(1,128)}', space=vmem, size = 0x12000, scoped, tag = 'internal scratch']
  %s0 = inlined_call_operand.vmem [shape: bf16[2,6,6,128], index: 0, kind: input, shape index: {}]
  %s1 = inlined_call_operand.vmem [shape: f32[2,128], index: 1, kind: input, shape index: {}]
  %s2 = inlined_call_operand.vmem [shape: f32[1,128], index: 2, kind: input, shape index: {}]
  %s3 = inlined_call_operand.vmem [shape: f32[1,128], index: 3, kind: input, shape index: {}]
  %s4 = inlined_call_operand.vmem [shape: bf16[9,128,128], index: 4, kind: input, shape index: {}]
  %s5 = inlined_call_operand.vmem [shape: bf16[2,4,4,128], index: 5, kind: output, shape index: {0}]
  %s6 = inlined_call_operand.vmem [shape: f32[2,2,128], index: 6, kind: output, shape index: {1}]
  %7 = xla_tuple %s5, %s6
  %s8 = sld [smem:[#allocation0]]
  $region61: #{down_forward.4} parent=0
    _
  %s10 = ssub.s32 1, %s8
  %s11 = scalar_select 0, %s10, %s8
  loop: start=0, step=1, limit=4
  $region2: #{down_forward.4} parent=0 // loop_pre_header
    _
  $region3: #{down_forward.4} parent=0 // loop_header
    %s13 = sphi 0, %s17
    %p14 = scmp.ge.s32.totalorder %s13, 4
    %s23 = sphi 0, %s25
    %s26 = sphi 0, %s23
    %s27 = sphi 0, %s26
    %s43 = sphi 0, %s27
    %s47 = sphi 0, %s47
    %s49 = sphi 0, %s47
    %s50 = sphi 0, %s49
    %s64 = sphi 0, %s50
    %s68 = sphi 0, %s68
    %s70 = sphi 0, %s68
    %s71 = sphi 0, %s70
    %s85 = sphi 0, %s71
    %s89 = sphi 0, %s89
    %s91 = sphi 0, %s89
    %s92 = sphi 0, %s91
    %s106 = sphi 0, %s92
    %s110 = sphi 0, %s110
    %s112 = sphi 0, %s110
    %s113 = sphi 0, %s112
    %s127 = sphi 0, %s113
    %s133 = sphi 0, %s135
    %s136 = sphi 0, %s133
    %s137 = sphi 0, %s136
    %s153 = sphi 0, %s137
    %s159 = sphi 0, %s161
    %s162 = sphi 0, %s159
    %s163 = sphi 0, %s162
    %s179 = sphi 0, %s163
  $region4: #{down_forward.4} parent=0 // loop_header_branch
    %16 = sbr.rel (%p14) target = $region8
  $region5: #{down_forward.4} parent=0 // loop_body
    %s18 = ssub.s32 %s13, 1
    %s19 = ssub.s32 %s13, 2
    %s20 = sadd.s32 %s13, 1
    %s21 = ssub.s32 %s13, %s20
    %p22 = scmp.eq.s32.totalorder %s21, 0
    %s24 = sadd.s32 %s23, 1
    %s25 = scalar_select %p22, %s23, %s24
    %p28 = pneg %p22
    %p29 = scmp.eq.s32.totalorder %s13, 1
    %p30 = por %p28, %p29
    %p31 = scmp.ne.s32.totalorder %s23, %s26
    %p32 = scmp.eq.s32.totalorder %s13, 0
    %p33 = por %p31, %p32
    %p34 = scmp.ne.s32.totalorder %s23, %s26
    %p35 = scmp.eq.s32.totalorder %s18, 1
    %p36 = por %p34, %p35
    %p37 = scmp.ne.s32.totalorder %s26, %s27
    %p38 = scmp.eq.s32.totalorder %s18, 0
    %p39 = por %p37, %p38
    %p40 = scmp.ne.s32.totalorder %s26, %s27
    %p41 = scmp.eq.s32.totalorder %s19, 1
    %p42 = por %p40, %p41
    %p44 = scmp.ne.s32.totalorder %s27, %s43
    %p45 = scmp.eq.s32.totalorder %s19, 0
    %p46 = por %p44, %p45
    %s48 = sadd.s32 %s47, 1
    %p51 = scmp.eq.s32.totalorder %s13, 1
    %p52 = scmp.ne.s32.totalorder %s47, %s49
    %p53 = scmp.eq.s32.totalorder %s13, 0
    %p54 = por %p52, %p53
    %p55 = scmp.ne.s32.totalorder %s47, %s49
    %p56 = scmp.eq.s32.totalorder %s18, 1
    %p57 = por %p55, %p56
    %p58 = scmp.ne.s32.totalorder %s49, %s50
    %p59 = scmp.eq.s32.totalorder %s18, 0
    %p60 = por %p58, %p59
    %p61 = scmp.ne.s32.totalorder %s49, %s50
    %p62 = scmp.eq.s32.totalorder %s19, 1
    %p63 = por %p61, %p62
    %p65 = scmp.ne.s32.totalorder %s50, %s64
    %p66 = scmp.eq.s32.totalorder %s19, 0
    %p67 = por %p65, %p66
    %s69 = sadd.s32 %s68, 1
    %p72 = scmp.eq.s32.totalorder %s13, 1
    %p73 = scmp.ne.s32.totalorder %s68, %s70
    %p74 = scmp.eq.s32.totalorder %s13, 0
    %p75 = por %p73, %p74
    %p76 = scmp.ne.s32.totalorder %s68, %s70
    %p77 = scmp.eq.s32.totalorder %s18, 1
    %p78 = por %p76, %p77
    %p79 = scmp.ne.s32.totalorder %s70, %s71
    %p80 = scmp.eq.s32.totalorder %s18, 0
    %p81 = por %p79, %p80
    %p82 = scmp.ne.s32.totalorder %s70, %s71
    %p83 = scmp.eq.s32.totalorder %s19, 1
    %p84 = por %p82, %p83
    %p86 = scmp.ne.s32.totalorder %s71, %s85
    %p87 = scmp.eq.s32.totalorder %s19, 0
    %p88 = por %p86, %p87
    %s90 = sadd.s32 %s89, 1
    %p93 = scmp.eq.s32.totalorder %s13, 1
    %p94 = scmp.ne.s32.totalorder %s89, %s91
    %p95 = scmp.eq.s32.totalorder %s13, 0
    %p96 = por %p94, %p95
    %p97 = scmp.ne.s32.totalorder %s89, %s91
    %p98 = scmp.eq.s32.totalorder %s18, 1
    %p99 = por %p97, %p98
    %p100 = scmp.ne.s32.totalorder %s91, %s92
    %p101 = scmp.eq.s32.totalorder %s18, 0
    %p102 = por %p100, %p101
    %p103 = scmp.ne.s32.totalorder %s91, %s92
    %p104 = scmp.eq.s32.totalorder %s19, 1
    %p105 = por %p103, %p104
    %p107 = scmp.ne.s32.totalorder %s92, %s106
    %p108 = scmp.eq.s32.totalorder %s19, 0
    %p109 = por %p107, %p108
    %s111 = sadd.s32 %s110, 1
    %p114 = scmp.eq.s32.totalorder %s13, 1
    %p115 = scmp.ne.s32.totalorder %s110, %s112
    %p116 = scmp.eq.s32.totalorder %s13, 0
    %p117 = por %p115, %p116
    %p118 = scmp.ne.s32.totalorder %s110, %s112
    %p119 = scmp.eq.s32.totalorder %s18, 1
    %p120 = por %p118, %p119
    %p121 = scmp.ne.s32.totalorder %s112, %s113
    %p122 = scmp.eq.s32.totalorder %s18, 0
    %p123 = por %p121, %p122
    %p124 = scmp.ne.s32.totalorder %s112, %s113
    %p125 = scmp.eq.s32.totalorder %s19, 1
    %p126 = por %p124, %p125
    %p128 = scmp.ne.s32.totalorder %s113, %s127
    %p129 = scmp.eq.s32.totalorder %s19, 0
    %p130 = por %p128, %p129
    %s131 = ssub.s32 %s13, %s20
    %p132 = scmp.eq.s32.totalorder %s131, 0
    %s134 = sadd.s32 %s133, 1
    %s135 = scalar_select %p132, %s133, %s134
    %p138 = pneg %p132
    %p139 = scmp.eq.s32.totalorder %s13, 1
    %p140 = por %p138, %p139
    %p141 = scmp.ne.s32.totalorder %s133, %s136
    %p142 = scmp.eq.s32.totalorder %s13, 0
    %p143 = por %p141, %p142
    %p144 = scmp.ne.s32.totalorder %s133, %s136
    %p145 = scmp.eq.s32.totalorder %s18, 1
    %p146 = por %p144, %p145
    %p147 = scmp.ne.s32.totalorder %s136, %s137
    %p148 = scmp.eq.s32.totalorder %s18, 0
    %p149 = por %p147, %p148
    %p150 = scmp.ne.s32.totalorder %s136, %s137
    %p151 = scmp.eq.s32.totalorder %s19, 1
    %p152 = por %p150, %p151
    %p154 = scmp.ne.s32.totalorder %s137, %s153
    %p155 = scmp.eq.s32.totalorder %s19, 0
    %p156 = por %p154, %p155
    %s157 = ssub.s32 %s13, %s20
    %p158 = scmp.eq.s32.totalorder %s157, 0
    %s160 = sadd.s32 %s159, 1
    %s161 = scalar_select %p158, %s159, %s160
    %p164 = pneg %p158
    %p165 = scmp.eq.s32.totalorder %s13, 1
    %p166 = por %p164, %p165
    %p167 = scmp.ne.s32.totalorder %s159, %s162
    %p168 = scmp.eq.s32.totalorder %s13, 0
    %p169 = por %p167, %p168
    %p170 = scmp.ne.s32.totalorder %s159, %s162
    %p171 = scmp.eq.s32.totalorder %s18, 1
    %p172 = por %p170, %p171
    %p173 = scmp.ne.s32.totalorder %s162, %s163
    %p174 = scmp.eq.s32.totalorder %s18, 0
    %p175 = por %p173, %p174
    %p176 = scmp.ne.s32.totalorder %s162, %s163
    %p177 = scmp.eq.s32.totalorder %s19, 1
    %p178 = por %p176, %p177
    %p180 = scmp.ne.s32.totalorder %s163, %s179
    %p181 = scmp.eq.s32.totalorder %s19, 0
    %p182 = por %p180, %p181
    %p183 = scmp.le.s32.totalorder 1, %s13
    %p184 = scmp.lt.s32.totalorder %s13, 3
    %p185 = pnand %p183, %p184
    %p186 = pneg %p185
    // Predicated region
    $region9: #{down_forward.4} parent=5 // pred_check
      _
    $region10: #{down_forward.4} parent=5 // pred_check_branch
      %188 = sbr.rel (%p185) target = $region12
    $region11: #{down_forward.4} parent=5 // pred_region
      %s189 = ssub.s32 %s13, 1
      // Predicated region
      $region13: #{down_forward.4} parent=11 // pred_check
        %p190 = pneg %p60
      $region14: #{down_forward.4} parent=11 // pred_check_branch
        %192 = sbr.rel (%p190) target = $region16
      $region15: #{down_forward.4} parent=11 // pred_region
        _
      $region16: #{down_forward.4} parent=11 // pred_fallthru
        _
      // Predicated region
      $region17: #{down_forward.4} parent=11 // pred_check
        %p193 = pneg %p81
      $region18: #{down_forward.4} parent=11 // pred_check_branch
        %195 = sbr.rel (%p193) target = $region20
      $region19: #{down_forward.4} parent=11 // pred_region
        _
      $region20: #{down_forward.4} parent=11 // pred_fallthru
        _
      // Predicated region
      $region21: #{down_forward.4} parent=11 // pred_check
        %p196 = pneg %p102
      $region22: #{down_forward.4} parent=11 // pred_check_branch
        %198 = sbr.rel (%p196) target = $region24
      $region23: #{down_forward.4} parent=11 // pred_region
        _
      $region24: #{down_forward.4} parent=11 // pred_fallthru
        _
      // Predicated region
      $region25: #{down_forward.4} parent=11 // pred_check
        %p199 = pneg %p123
      $region26: #{down_forward.4} parent=11 // pred_check_branch
        %201 = sbr.rel (%p199) target = $region28
      $region27: #{down_forward.4} parent=11 // pred_region
        _
      $region28: #{down_forward.4} parent=11 // pred_fallthru
        _
    $region12: #{down_forward.4} parent=5 // pred_fallthru
      _
    %p202 = scmp.lt.s32.totalorder %s13, 2
    // Predicated region
    $region29: #{down_forward.4} parent=5 // pred_check
      %p203 = pneg %p202
    $region30: #{down_forward.4} parent=5 // pred_check_branch
      %205 = sbr.rel (%p203) target = $region32
    $region31: #{down_forward.4} parent=5 // pred_region
      // Predicated region
      $region33: #{down_forward.4} parent=31 // pred_check
        %p206 = pneg %p33
      $region34: #{down_forward.4} parent=31 // pred_check_branch
        %208 = sbr.rel (%p206) target = $region36
      $region35: #{down_forward.4} parent=31 // pred_region
        %p209 = scmp.lt.s32.totalorder %s13, 1
        %s210 = scalar_select %p209, %s13, 1
        %s211 = smul.addr %s210, 6
        %s212 = smul.addr %s211, 4
        %s213 = scalar_lea.vmem %s0, %s212
      $region36: #{down_forward.4} parent=31 // pred_fallthru
        _
    $region32: #{down_forward.4} parent=5 // pred_fallthru
      _
    %p214 = scmp.le.s32.totalorder 1, %s13
    %p215 = scmp.lt.s32.totalorder %s13, 3
    %p216 = pnand %p214, %p215
    %p217 = pneg %p216
    // Predicated region
    $region37: #{down_forward.4} parent=5 // pred_check
      _
    $region38: #{down_forward.4} parent=5 // pred_check_branch
      %219 = sbr.rel (%p216) target = $region40
    $region39: #{down_forward.4} parent=5 // pred_region
      %s220 = ssub.s32 %s13, 1
      %p221 = scmp.lt.s32.totalorder %s18, 1
      %s222 = scalar_select %p221, %s18, 1
      %s223 = smul.addr %s222, 6
      %s224 = smul.addr %s223, 4
      %s225 = scalar_lea.vmem %s0, %s224
      %p226 = pneg %p39
      %p227 = pneg %p36
      %p228 = pneg %p60
      %p229 = pneg %p57
      %p230 = pneg %p81
      %p231 = pneg %p78
      %p232 = pneg %p102
      %p233 = pneg %p99
      %p234 = pneg %p123
      %p235 = pneg %p120
      %p236 = pneg %p149
      %p237 = pneg %p146
      %p238 = scmp.lt.s32.totalorder %s18, 1
      %s239 = scalar_select %p238, %s18, 1
      %s240 = smul.addr %s239, 4
      %s241 = smul.addr %s240, 2
      %s242 = scalar_lea.vmem %s5, %s241
      %p243 = pneg %p175
      %p244 = pneg %p172
      %p245 = scmp.lt.s32.totalorder %s18, 1
      %s246 = scalar_select %p245, %s18, 1
      %s247 = smul.addr %s246, 2
      %s248 = scalar_lea.vmem %s6, %s247
      %p249 = scmp.lt.s32.totalorder %s18, 1
      %s250 = scalar_select %p249, %s18, 1
      %s251 = smul.addr %s250, 6
      %s252 = smul.addr %s251, 4
      %s253 = scalar_lea.vmem %s0, %s252
      %p254 = scmp.lt.s32.totalorder %s18, 1
      %s255 = scalar_select %p254, %s18, 1
      %s256 = smul.addr %s255, 4
      %s257 = smul.addr %s256, 2
      %s258 = scalar_lea.vmem %s5, %s257
      %p259 = scmp.lt.s32.totalorder %s18, 1
      %s260 = scalar_select %p259, %s18, 1
      %s261 = smul.addr %s260, 2
      %s262 = scalar_lea.vmem %s6, %s261
      %v264 = vld [vmem:[%s253] sm:$0x7]
      %v265 = vld [vmem:[%s253 + $0x4] sm:$0x7]
      %v266 = vld [vmem:[%s253 + $0x8] sm:$0x7]
      %v267 = vld [vmem:[%s253 + $0xc] sm:$0x7]
      %v268 = vld [vmem:[%s253 + $0x10] sm:$0x7]
      %v269 = vld [vmem:[%s253 + $0x14] sm:$0x7]
      %v270 = vunpack.c.l.bf16 %v264
      %v271 = vunpack.c.l.bf16 %v265
      %v272 = vunpack.c.l.bf16 %v266
      %v273 = vunpack.c.l.bf16 %v267
      %v274 = vunpack.c.l.bf16 %v268
      %v275 = vunpack.c.l.bf16 %v269
      %v276 = vld [vmem:[%s1] sm:$0x1]
      %v277 = vmul.f32 %v276, 0.013888889
      %v278 = vld [vmem:[%s1 + $0x1] sm:$0x1]
      %v279 = vmul.f32 %v278, 0.013888889
      %v280 = vmul.f32 %v277, %v277
      %v281 = vsub.f32 %v279, %v280
      %v282 = vmax.f32 %v281, 0.0
      %v283 = vld [vmem:[%s2] sm:$0x1]
      %v284 = vadd.f32 %v282, 1e-05
      %v285 = vrsqrt.pop %v284
      %v286 = vmul.f32 %v283, %v285
      %v287 = vld [vmem:[%s3] sm:$0x1]
      %v288 = vmul.f32 %v277, %v286
      %v289 = vsub.f32 %v287, %v288
      %v291 = vlaneseq
      %v292 = vshrl.u32 %v291, 7
      %v293 = vsub.s32 0, %v292
      %v294 = vrot.slane %v286, %v293
      %v296 = vmul.f32 %v270, %v294
      %v297 = vmul.f32 %v271, %v294
      %v298 = vmul.f32 %v272, %v294
      %v299 = vmul.f32 %v273, %v294
      %v300 = vmul.f32 %v274, %v294
      %v301 = vmul.f32 %v275, %v294
      %v303 = vlaneseq
      %v304 = vshrl.u32 %v303, 7
      %v305 = vsub.s32 0, %v304
      %v306 = vrot.slane %v289, %v305
      %v308 = vadd.f32 %v296, %v306
      %v309 = vadd.f32 %v297, %v306
      %v310 = vadd.f32 %v298, %v306
      %v311 = vadd.f32 %v299, %v306
      %v312 = vadd.f32 %v300, %v306
      %v313 = vadd.f32 %v301, %v306
      %v314 = vmax.f32 %v308, 0.0
      %v315 = vmax.f32 %v309, 0.0
      %v316 = vmax.f32 %v310, 0.0
      %v317 = vmax.f32 %v311, 0.0
      %v318 = vmax.f32 %v312, 0.0
      %v319 = vmax.f32 %v313, 0.0
      %v320 = vpack.c.bf16 %v314, %v314
      %v321 = vpack.c.bf16 %v315, %v315
      %v322 = vpack.c.bf16 %v316, %v316
      %v323 = vpack.c.bf16 %v317, %v317
      %v324 = vpack.c.bf16 %v318, %v318
      %v325 = vpack.c.bf16 %v319, %v319
      %v326 = vld [vmem:[%s4] sm:$0xf]
      %v327 = vld [vmem:[%s4 + $0x4] sm:$0xf]
      %v328 = vld [vmem:[%s4 + $0x8] sm:$0xf]
      %v329 = vld [vmem:[%s4 + $0xc] sm:$0xf]
      %v330 = vld [vmem:[%s4 + $0x10] sm:$0xf]
      %v331 = vld [vmem:[%s4 + $0x14] sm:$0xf]
      %v332 = vld [vmem:[%s4 + $0x18] sm:$0xf]
      %v333 = vld [vmem:[%s4 + $0x1c] sm:$0xf]
      %v334 = vld [vmem:[%s4 + $0x20] sm:$0xf]
      %v335 = vld [vmem:[%s4 + $0x24] sm:$0xf]
      %v336 = vld [vmem:[%s4 + $0x28] sm:$0xf]
      %v337 = vld [vmem:[%s4 + $0x2c] sm:$0xf]
      %v338 = vld [vmem:[%s4 + $0x30] sm:$0xf]
      %v339 = vld [vmem:[%s4 + $0x34] sm:$0xf]
      %v340 = vld [vmem:[%s4 + $0x38] sm:$0xf]
      %v341 = vld [vmem:[%s4 + $0x3c] sm:$0xf]
      %v347 = vunpack.c.l.s4 1983009808
      %v348 = vunpack.c.0.s8 %v347
      %v349 = vlaneseq
      %v350 = vshrl.u32 %v349, 7
      %v351 = vsub.s32 %v348, %v350
      %v352 = vrot.slane %v320, %v351
      %v353 = vcombine.high %v352, %v352
      %v355 = vunpack.c.l.s4 1983009808
      %v356 = vunpack.c.0.s8 %v355
      %v357 = vlaneseq
      %v358 = vshrl.u32 %v357, 7
      %v359 = vsub.s32 %v356, %v358
      %v360 = vrot.slane %v321, %v359
      %v361 = vcombine.high %v360, %v360
      %v363 = vunpack.c.l.s4 1983009808
      %v364 = vunpack.c.0.s8 %v363
      %v365 = vlaneseq
      %v366 = vshrl.u32 %v365, 7
      %v367 = vsub.s32 %v364, %v366
      %v368 = vrot.slane %v322, %v367
      %v369 = vcombine.high %v368, %v368
      %v371 = vunpack.c.l.s4 1983009808
      %v372 = vunpack.c.0.s8 %v371
      %v373 = vlaneseq
      %v374 = vshrl.u32 %v373, 7
      %v375 = vsub.s32 %v372, %v374
      %v376 = vrot.slane %v323, %v375
      %v377 = vcombine.high %v376, %v376
      %vm378 = vsmask.f32 1280
      %vm379 = vsmask.f32 3336
      %vm380 = vmor %vm378, %vm379
      %vm381 = vsmask.f32 5392
      %vm382 = vmor %vm380, %vm381
      %vm383 = vsmask.f32 7448
      %vm384 = vmor %vm382, %vm383
      %v386 = vshrl.u32 %v352, 16
      %v388 = vrot.slane %v386, 6
      %v389 = vshll.u32 %v352, 16
      %v391 = vrot.slane %v389, 7
      %v392 = vor.u32 %v388, %v391
      %v393 = vrot.slane %v392, 2
      %v395 = vshll.u32 %v353, 16
      %v397 = vrot.slane %v395, 7
      %v398 = vsel %vm384, %v393, %v397
      %v400 = vshrl.u32 %v360, 16
      %v402 = vrot.slane %v400, 6
      %v403 = vshll.u32 %v360, 16
      %v405 = vrot.slane %v403, 7
      %v406 = vor.u32 %v402, %v405
      %v407 = vrot.slane %v406, 2
      %v409 = vshll.u32 %v361, 16
      %v411 = vrot.slane %v409, 7
      %v412 = vsel %vm384, %v407, %v411
      %v414 = vshrl.u32 %v368, 16
      %v416 = vrot.slane %v414, 6
      %v417 = vshll.u32 %v368, 16
      %v419 = vrot.slane %v417, 7
      %v420 = vor.u32 %v416, %v419
      %v421 = vrot.slane %v420, 2
      %v423 = vshll.u32 %v369, 16
      %v425 = vrot.slane %v423, 7
      %v426 = vsel %vm384, %v421, %v425
      %v428 = vshrl.u32 %v376, 16
      %v430 = vrot.slane %v428, 6
      %v431 = vshll.u32 %v376, 16
      %v433 = vrot.slane %v431, 7
      %v434 = vor.u32 %v430, %v433
      %v435 = vrot.slane %v434, 2
      %v437 = vshll.u32 %v377, 16
      %v439 = vrot.slane %v437, 7
      %v440 = vsel %vm384, %v435, %v439
      %s441 = scalar_lea.vmem %s4, 64
      %v442 = vld [vmem:[%s441] sm:$0xf]
      %v443 = vld [vmem:[%s441 + $0x4] sm:$0xf]
      %v444 = vld [vmem:[%s441 + $0x8] sm:$0xf]
      %v445 = vld [vmem:[%s441 + $0xc] sm:$0xf]
      %v446 = vld [vmem:[%s441 + $0x10] sm:$0xf]
      %v447 = vld [vmem:[%s441 + $0x14] sm:$0xf]
      %v448 = vld [vmem:[%s441 + $0x18] sm:$0xf]
      %v449 = vld [vmem:[%s441 + $0x1c] sm:$0xf]
      %v450 = vld [vmem:[%s441 + $0x20] sm:$0xf]
      %v451 = vld [vmem:[%s441 + $0x24] sm:$0xf]
      %v452 = vld [vmem:[%s441 + $0x28] sm:$0xf]
      %v453 = vld [vmem:[%s441 + $0x2c] sm:$0xf]
      %v454 = vld [vmem:[%s441 + $0x30] sm:$0xf]
      %v455 = vld [vmem:[%s441 + $0x34] sm:$0xf]
      %v456 = vld [vmem:[%s441 + $0x38] sm:$0xf]
      %v457 = vld [vmem:[%s441 + $0x3c] sm:$0xf]
      %v458 = vcombine.low %v398, %v412
      %v459 = vcombine.low %v426, %v440
      %v461 = vunpack.c.l.s4 1983009808
      %v462 = vunpack.c.0.s8 %v461
      %v463 = vlaneseq
      %v464 = vshrl.u32 %v463, 7
      %v465 = vsub.s32 %v462, %v464
      %v466 = vrot.slane %v458, %v465
      %v468 = vunpack.c.l.s4 1983009808
      %v469 = vunpack.c.0.s8 %v468
      %v470 = vlaneseq
      %v471 = vshrl.u32 %v470, 7
      %v472 = vsub.s32 %v469, %v471
      %v473 = vrot.slane %v459, %v472
      %v474 = vcombine.low %v466, %v473
      %v492 = vunpack.c.l.b16 %v442
      %v493 = vunpack.c.l.b16 %v443
      %v494 = vunpack.c.l.b16 %v444
      %v495 = vunpack.c.l.b16 %v445
      %v496 = vunpack.c.l.b16 %v446
      %v497 = vunpack.c.l.b16 %v447
      %v498 = vunpack.c.l.b16 %v448
      %v499 = vunpack.c.l.b16 %v449
      %v500 = vunpack.c.l.b16 %v450
      %v501 = vunpack.c.l.b16 %v451
      %v502 = vunpack.c.l.b16 %v452
      %v503 = vunpack.c.l.b16 %v453
      %v504 = vunpack.c.l.b16 %v454
      %v505 = vunpack.c.l.b16 %v455
      %v506 = vunpack.c.l.b16 %v456
      %v507 = vunpack.c.l.b16 %v457
      %v508 = vpack.c.b16 %v493, %v492
      %v509 = vpack.c.b16 %v495, %v494
      %v510 = vpack.c.b16 %v497, %v496
      %v511 = vpack.c.b16 %v499, %v498
      %v512 = vpack.c.b16 %v501, %v500
      %v513 = vpack.c.b16 %v503, %v502
      %v514 = vpack.c.b16 %v505, %v504
      %v515 = vpack.c.b16 %v507, %v506
      %524 = vmatprep.subr.bf16.mxu0 0
      %525 = vmatpush1.bf16.msra.mxu0 %v515
      %526 = vmatprep.subr.bf16.mxu0 0
      %527 = vmatpush1.bf16.msra.mxu0 %v514
      %528 = vmatprep.subr.bf16.mxu0 0
      %529 = vmatpush1.bf16.msra.mxu0 %v513
      %530 = vmatprep.subr.bf16.mxu0 0
      %531 = vmatpush1.bf16.msra.mxu0 %v512
      %532 = vmatprep.subr.bf16.mxu0 0
      %533 = vmatpush1.bf16.msra.mxu0 %v511
      %534 = vmatprep.subr.bf16.mxu0 0
      %535 = vmatpush1.bf16.msra.mxu0 %v510
      %536 = vmatprep.subr.bf16.mxu0 0
      %537 = vmatpush1.bf16.msra.mxu0 %v509
      %538 = vmatprep.subr.bf16.mxu0 0
      %539 = vmatpush1.bf16.msra.mxu0 %v508
      %540 = vmatprep.subr.bf16.mxu0 0
      %541 = vmatpush2.bf16.msra.mxu0 0
      %542 = vmatprep.subr.bf16.mxu0 0
      %543 = vmatpush2.bf16.msra.mxu0 0
      %544 = vmatprep.subr.bf16.mxu0 0
      %545 = vmatpush2.bf16.msra.mxu0 0
      %546 = vmatprep.subr.bf16.mxu0 0
      %547 = vmatpush2.bf16.msra.mxu0 0
      %548 = vmatprep.subr.bf16.mxu0 0
      %549 = vmatpush2.bf16.msra.mxu0 0
      %550 = vmatprep.subr.bf16.mxu0 0
      %551 = vmatpush2.bf16.msra.mxu0 0
      %552 = vmatprep.subr.bf16.mxu0 0
      %553 = vmatpush2.bf16.msra.mxu0 0
      %554 = vmatprep.subr.bf16.mxu0 0
      %555 = vmatpush2.bf16.msra.mxu0 0
      %556 = vmatprep.mubr.bf16.mxu0 0
      %557 = vmatmul.mubr.bf16.gmra.mxu0 %v474
      %v558 = vpop.f32.mrf.mxu0
      %v559 = vadd.f32 0.0, %v558
      %v560 = vpop.f32.mrf.mxu0
      %v561 = vpop.f32.mrf.mxu0
      %v562 = vadd.f32 0.0, %v561
      %v563 = vpop.f32.mrf.mxu0
      %564 = vdwg.mxu0
      %v565 = vcombine.low %v320, %v321
      %v566 = vcombine.low %v322, %v323
      %v568 = vunpack.c.l.s4 1983009808
      %v569 = vunpack.c.0.s8 %v568
      %v570 = vlaneseq
      %v571 = vshrl.u32 %v570, 7
      %v572 = vsub.s32 %v569, %v571
      %v573 = vrot.slane %v565, %v572
      %v575 = vunpack.c.l.s4 1983009808
      %v576 = vunpack.c.0.s8 %v575
      %v577 = vlaneseq
      %v578 = vshrl.u32 %v577, 7
      %v579 = vsub.s32 %v576, %v578
      %v580 = vrot.slane %v566, %v579
      %v581 = vcombine.low %v573, %v580
      %v599 = vunpack.c.l.b16 %v326
      %v600 = vunpack.c.l.b16 %v327
      %v601 = vunpack.c.l.b16 %v328
      %v602 = vunpack.c.l.b16 %v329
      %v603 = vunpack.c.l.b16 %v330
      %v604 = vunpack.c.l.b16 %v331
      %v605 = vunpack.c.l.b16 %v332
      %v606 = vunpack.c.l.b16 %v333
      %v607 = vunpack.c.l.b16 %v334
      %v608 = vunpack.c.l.b16 %v335
      %v609 = vunpack.c.l.b16 %v336
      %v610 = vunpack.c.l.b16 %v337
      %v611 = vunpack.c.l.b16 %v338
      %v612 = vunpack.c.l.b16 %v339
      %v613 = vunpack.c.l.b16 %v340
      %v614 = vunpack.c.l.b16 %v341
      %v615 = vpack.c.b16 %v600, %v599
      %v616 = vpack.c.b16 %v602, %v601
      %v617 = vpack.c.b16 %v604, %v603
      %v618 = vpack.c.b16 %v606, %v605
      %v619 = vpack.c.b16 %v608, %v607
      %v620 = vpack.c.b16 %v610, %v609
      %v621 = vpack.c.b16 %v612, %v611
      %v622 = vpack.c.b16 %v614, %v613
      %631 = vmatprep.subr.bf16.mxu0 0
      %632 = vmatpush1.bf16.msra.mxu0 %v622
      %633 = vmatprep.subr.bf16.mxu0 0
      %634 = vmatpush1.bf16.msra.mxu0 %v621
      %635 = vmatprep.subr.bf16.mxu0 0
      %636 = vmatpush1.bf16.msra.mxu0 %v620
      %637 = vmatprep.subr.bf16.mxu0 0
      %638 = vmatpush1.bf16.msra.mxu0 %v619
      %639 = vmatprep.subr.bf16.mxu0 0
      %640 = vmatpush1.bf16.msra.mxu0 %v618
      %641 = vmatprep.subr.bf16.mxu0 0
      %642 = vmatpush1.bf16.msra.mxu0 %v617
      %643 = vmatprep.subr.bf16.mxu0 0
      %644 = vmatpush1.bf16.msra.mxu0 %v616
      %645 = vmatprep.subr.bf16.mxu0 0
      %646 = vmatpush1.bf16.msra.mxu0 %v615
      %647 = vmatprep.subr.bf16.mxu0 0
      %648 = vmatpush2.bf16.msra.mxu0 0
      %649 = vmatprep.subr.bf16.mxu0 0
      %650 = vmatpush2.bf16.msra.mxu0 0
      %651 = vmatprep.subr.bf16.mxu0 0
      %652 = vmatpush2.bf16.msra.mxu0 0
      %653 = vmatprep.subr.bf16.mxu0 0
      %654 = vmatpush2.bf16.msra.mxu0 0
      %655 = vmatprep.subr.bf16.mxu0 0
      %656 = vmatpush2.bf16.msra.mxu0 0
      %657 = vmatprep.subr.bf16.mxu0 0
      %658 = vmatpush2.bf16.msra.mxu0 0
      %659 = vmatprep.subr.bf16.mxu0 0
      %660 = vmatpush2.bf16.msra.mxu0 0
      %661 = vmatprep.subr.bf16.mxu0 0
      %662 = vmatpush2.bf16.msra.mxu0 0
      %663 = vmatprep.mubr.bf16.mxu0 0
      %664 = vmatmul.mubr.bf16.gmra.mxu0 %v581
      %v665 = vpop.f32.mrf.mxu0
      %v666 = vadd.f32 %v559, %v665
      %v667 = vpop.f32.mrf.mxu0
      %v668 = vpop.f32.mrf.mxu0
      %v669 = vadd.f32 %v562, %v668
      %v670 = vpop.f32.mrf.mxu0
      %671 = vdwg.mxu0
      %vm672 = vcmask 1040384
      %vm673 = vcmask 1042434
      %vm674 = vmor %vm672, %vm673
      %vm675 = vcmask 1044484
      %vm676 = vmor %vm674, %vm675
      %vm677 = vcmask 1046534
      %vm678 = vmor %vm676, %vm677
      %v679 = vrot.slane %v352, 7
      %v680 = vrot.slane %v679, 2
      %v681 = vrot.slane %v353, 7
      %v682 = vsel %vm678, %v680, %v681
      %v683 = vrot.slane %v360, 7
      %v684 = vrot.slane %v683, 2
      %v685 = vrot.slane %v361, 7
      %v686 = vsel %vm678, %v684, %v685
      %v687 = vrot.slane %v368, 7
      %v688 = vrot.slane %v687, 2
      %v689 = vrot.slane %v369, 7
      %v690 = vsel %vm678, %v688, %v689
      %v691 = vrot.slane %v376, 7
      %v692 = vrot.slane %v691, 2
      %v693 = vrot.slane %v377, 7
      %v694 = vsel %vm678, %v692, %v693
      %s695 = scalar_lea.vmem %s4, 128
      %v696 = vld [vmem:[%s695] sm:$0xf]
      %v697 = vld [vmem:[%s695 + $0x4] sm:$0xf]
      %v698 = vld [vmem:[%s695 + $0x8] sm:$0xf]
      %v699 = vld [vmem:[%s695 + $0xc] sm:$0xf]
      %v700 = vld [vmem:[%s695 + $0x10] sm:$0xf]
      %v701 = vld [vmem:[%s695 + $0x14] sm:$0xf]
      %v702 = vld [vmem:[%s695 + $0x18] sm:$0xf]
      %v703 = vld [vmem:[%s695 + $0x1c] sm:$0xf]
      %v704 = vld [vmem:[%s695 + $0x20] sm:$0xf]
      %v705 = vld [vmem:[%s695 + $0x24] sm:$0xf]
      %v706 = vld [vmem:[%s695 + $0x28] sm:$0xf]
      %v707 = vld [vmem:[%s695 + $0x2c] sm:$0xf]
      %v708 = vld [vmem:[%s695 + $0x30] sm:$0xf]
      %v709 = vld [vmem:[%s695 + $0x34] sm:$0xf]
      %v710 = vld [vmem:[%s695 + $0x38] sm:$0xf]
      %v711 = vld [vmem:[%s695 + $0x3c] sm:$0xf]
      %v712 = vcombine.low %v682, %v686
      %v713 = vcombine.low %v690, %v694
      %v715 = vunpack.c.l.s4 1983009808
      %v716 = vunpack.c.0.s8 %v715
      %v717 = vlaneseq
      %v718 = vshrl.u32 %v717, 7
      %v719 = vsub.s32 %v716, %v718
      %v720 = vrot.slane %v712, %v719
      %v722 = vunpack.c.l.s4 1983009808
      %v723 = vunpack.c.0.s8 %v722
      %v724 = vlaneseq
      %v725 = vshrl.u32 %v724, 7
      %v726 = vsub.s32 %v723, %v725
      %v727 = vrot.slane %v713, %v726
      %v728 = vcombine.low %v720, %v727
      %v746 = vunpack.c.l.b16 %v696
      %v747 = vunpack.c.l.b16 %v697
      %v748 = vunpack.c.l.b16 %v698
      %v749 = vunpack.c.l.b16 %v699
      %v750 = vunpack.c.l.b16 %v700
      %v751 = vunpack.c.l.b16 %v701
      %v752 = vunpack.c.l.b16 %v702
      %v753 = vunpack.c.l.b16 %v703
      %v754 = vunpack.c.l.b16 %v704
      %v755 = vunpack.c.l.b16 %v705
      %v756 = vunpack.c.l.b16 %v706
      %v757 = vunpack.c.l.b16 %v707
      %v758 = vunpack.c.l.b16 %v708
      %v759 = vunpack.c.l.b16 %v709
      %v760 = vunpack.c.l.b16 %v710
      %v761 = vunpack.c.l.b16 %v711
      %v762 = vpack.c.b16 %v747, %v746
      %v763 = vpack.c.b16 %v749, %v748
      %v764 = vpack.c.b16 %v751, %v750
      %v765 = vpack.c.b16 %v753, %v752
      %v766 = vpack.c.b16 %v755, %v754
      %v767 = vpack.c.b16 %v757, %v756
      %v768 = vpack.c.b16 %v759, %v758
      %v769 = vpack.c.b16 %v761, %v760
      %778 = vmatprep.subr.bf16.mxu0 0
      %779 = vmatpush1.bf16.msra.mxu0 %v769
      %780 = vmatprep.subr.bf16.mxu0 0
      %781 = vmatpush1.bf16.msra.mxu0 %v768
      %782 = vmatprep.subr.bf16.mxu0 0
      %783 = vmatpush1.bf16.msra.mxu0 %v767
      %784 = vmatprep.subr.bf16.mxu0 0
      %785 = vmatpush1.bf16.msra.mxu0 %v766
      %786 = vmatprep.subr.bf16.mxu0 0
      %787 = vmatpush1.bf16.msra.mxu0 %v765
      %788 = vmatprep.subr.bf16.mxu0 0
      %789 = vmatpush1.bf16.msra.mxu0 %v764
      %790 = vmatprep.subr.bf16.mxu0 0
      %791 = vmatpush1.bf16.msra.mxu0 %v763
      %792 = vmatprep.subr.bf16.mxu0 0
      %793 = vmatpush1.bf16.msra.mxu0 %v762
      %794 = vmatprep.subr.bf16.mxu0 0
      %795 = vmatpush2.bf16.msra.mxu0 0
      %796 = vmatprep.subr.bf16.mxu0 0
      %797 = vmatpush2.bf16.msra.mxu0 0
      %798 = vmatprep.subr.bf16.mxu0 0
      %799 = vmatpush2.bf16.msra.mxu0 0
      %800 = vmatprep.subr.bf16.mxu0 0
      %801 = vmatpush2.bf16.msra.mxu0 0
      %802 = vmatprep.subr.bf16.mxu0 0
      %803 = vmatpush2.bf16.msra.mxu0 0
      %804 = vmatprep.subr.bf16.mxu0 0
      %805 = vmatpush2.bf16.msra.mxu0 0
      %806 = vmatprep.subr.bf16.mxu0 0
      %807 = vmatpush2.bf16.msra.mxu0 0
      %808 = vmatprep.subr.bf16.mxu0 0
      %809 = vmatpush2.bf16.msra.mxu0 0
      %810 = vmatprep.mubr.bf16.mxu0 0
      %811 = vmatmul.mubr.bf16.gmra.mxu0 %v728
      %v812 = vpop.f32.mrf.mxu0
      %v813 = vadd.f32 0.0, %v812
      %v814 = vpop.f32.mrf.mxu0
      %v815 = vpop.f32.mrf.mxu0
      %v816 = vadd.f32 0.0, %v815
      %v817 = vpop.f32.mrf.mxu0
      %818 = vdwg.mxu0
      %v819 = vadd.f32 %v666, %v813
      %v820 = vadd.f32 %v669, %v816
      %s821 = scalar_lea.vmem %s4, 192
      %v822 = vld [vmem:[%s821] sm:$0xf]
      %v823 = vld [vmem:[%s821 + $0x4] sm:$0xf]
      %v824 = vld [vmem:[%s821 + $0x8] sm:$0xf]
      %v825 = vld [vmem:[%s821 + $0xc] sm:$0xf]
      %v826 = vld [vmem:[%s821 + $0x10] sm:$0xf]
      %v827 = vld [vmem:[%s821 + $0x14] sm:$0xf]
      %v828 = vld [vmem:[%s821 + $0x18] sm:$0xf]
      %v829 = vld [vmem:[%s821 + $0x1c] sm:$0xf]
      %v830 = vld [vmem:[%s821 + $0x20] sm:$0xf]
      %v831 = vld [vmem:[%s821 + $0x24] sm:$0xf]
      %v832 = vld [vmem:[%s821 + $0x28] sm:$0xf]
      %v833 = vld [vmem:[%s821 + $0x2c] sm:$0xf]
      %v834 = vld [vmem:[%s821 + $0x30] sm:$0xf]
      %v835 = vld [vmem:[%s821 + $0x34] sm:$0xf]
      %v836 = vld [vmem:[%s821 + $0x38] sm:$0xf]
      %v837 = vld [vmem:[%s821 + $0x3c] sm:$0xf]
      %v839 = vcombine.low %v321, %v322
      %v840 = vcombine.low %v323, %v324
      %v842 = vunpack.c.l.s4 1983009808
      %v843 = vunpack.c.0.s8 %v842
      %v844 = vlaneseq
      %v845 = vshrl.u32 %v844, 7
      %v846 = vsub.s32 %v843, %v845
      %v847 = vrot.slane %v839, %v846
      %v849 = vunpack.c.l.s4 1983009808
      %v850 = vunpack.c.0.s8 %v849
      %v851 = vlaneseq
      %v852 = vshrl.u32 %v851, 7
      %v853 = vsub.s32 %v850, %v852
      %v854 = vrot.slane %v840, %v853
      %v855 = vcombine.low %v847, %v854
      %v873 = vunpack.c.l.b16 %v822
      %v874 = vunpack.c.l.b16 %v823
      %v875 = vunpack.c.l.b16 %v824
      %v876 = vunpack.c.l.b16 %v825
      %v877 = vunpack.c.l.b16 %v826
      %v878 = vunpack.c.l.b16 %v827
      %v879 = vunpack.c.l.b16 %v828
      %v880 = vunpack.c.l.b16 %v829
      %v881 = vunpack.c.l.b16 %v830
      %v882 = vunpack.c.l.b16 %v831
      %v883 = vunpack.c.l.b16 %v832
      %v884 = vunpack.c.l.b16 %v833
      %v885 = vunpack.c.l.b16 %v834
      %v886 = vunpack.c.l.b16 %v835
      %v887 = vunpack.c.l.b16 %v836
      %v888 = vunpack.c.l.b16 %v837
      %v889 = vpack.c.b16 %v874, %v873
      %v890 = vpack.c.b16 %v876, %v875
      %v891 = vpack.c.b16 %v878, %v877
      %v892 = vpack.c.b16 %v880, %v879
      %v893 = vpack.c.b16 %v882, %v881
      %v894 = vpack.c.b16 %v884, %v883
      %v895 = vpack.c.b16 %v886, %v885
      %v896 = vpack.c.b16 %v888, %v887
      %905 = vmatprep.subr.bf16.mxu0 0
      %906 = vmatpush1.bf16.msra.mxu0 %v896
      %907 = vmatprep.subr.bf16.mxu0 0
      %908 = vmatpush1.bf16.msra.mxu0 %v895
      %909 = vmatprep.subr.bf16.mxu0 0
      %910 = vmatpush1.bf16.msra.mxu0 %v894
      %911 = vmatprep.subr.bf16.mxu0 0
      %912 = vmatpush1.bf16.msra.mxu0 %v893
      %913 = vmatprep.subr.bf16.mxu0 0
      %914 = vmatpush1.bf16.msra.mxu0 %v892
      %915 = vmatprep.subr.bf16.mxu0 0
      %916 = vmatpush1.bf16.msra.mxu0 %v891
      %917 = vmatprep.subr.bf16.mxu0 0
      %918 = vmatpush1.bf16.msra.mxu0 %v890
      %919 = vmatprep.subr.bf16.mxu0 0
      %920 = vmatpush1.bf16.msra.mxu0 %v889
      %921 = vmatprep.subr.bf16.mxu0 0
      %922 = vmatpush2.bf16.msra.mxu0 0
      %923 = vmatprep.subr.bf16.mxu0 0
      %924 = vmatpush2.bf16.msra.mxu0 0
      %925 = vmatprep.subr.bf16.mxu0 0
      %926 = vmatpush2.bf16.msra.mxu0 0
      %927 = vmatprep.subr.bf16.mxu0 0
      %928 = vmatpush2.bf16.msra.mxu0 0
      %929 = vmatprep.subr.bf16.mxu0 0
      %930 = vmatpush2.bf16.msra.mxu0 0
      %931 = vmatprep.subr.bf16.mxu0 0
      %932 = vmatpush2.bf16.msra.mxu0 0
      %933 = vmatprep.subr.bf16.mxu0 0
      %934 = vmatpush2.bf16.msra.mxu0 0
      %935 = vmatprep.subr.bf16.mxu0 0
      %936 = vmatpush2.bf16.msra.mxu0 0
      %937 = vmatprep.mubr.bf16.mxu0 0
      %938 = vmatmul.mubr.bf16.gmra.mxu0 %v855
      %v939 = vpop.f32.mrf.mxu0
      %v940 = vadd.f32 0.0, %v939
      %v941 = vpop.f32.mrf.mxu0
      %v942 = vpop.f32.mrf.mxu0
      %v943 = vadd.f32 0.0, %v942
      %v944 = vpop.f32.mrf.mxu0
      %945 = vdwg.mxu0
      %v946 = vadd.f32 %v819, %v940
      %v947 = vadd.f32 %v820, %v943
      %v949 = vunpack.c.l.s4 1983009808
      %v950 = vunpack.c.0.s8 %v949
      %v951 = vlaneseq
      %v952 = vshrl.u32 %v951, 7
      %v953 = vsub.s32 %v950, %v952
      %v954 = vrot.slane %v324, %v953
      %v955 = vcombine.high %v954, %v954
      %v957 = vshrl.u32 %v954, 16
      %v959 = vrot.slane %v957, 6
      %v960 = vshll.u32 %v954, 16
      %v962 = vrot.slane %v960, 7
      %v963 = vor.u32 %v959, %v962
      %v964 = vrot.slane %v963, 2
      %v966 = vshll.u32 %v955, 16
      %v968 = vrot.slane %v966, 7
      %v969 = vsel %vm384, %v964, %v968
      %s970 = scalar_lea.vmem %s4, 256
      %v971 = vld [vmem:[%s970] sm:$0xf]
      %v972 = vld [vmem:[%s970 + $0x4] sm:$0xf]
      %v973 = vld [vmem:[%s970 + $0x8] sm:$0xf]
      %v974 = vld [vmem:[%s970 + $0xc] sm:$0xf]
      %v975 = vld [vmem:[%s970 + $0x10] sm:$0xf]
      %v976 = vld [vmem:[%s970 + $0x14] sm:$0xf]
      %v977 = vld [vmem:[%s970 + $0x18] sm:$0xf]
      %v978 = vld [vmem:[%s970 + $0x1c] sm:$0xf]
      %v979 = vld [vmem:[%s970 + $0x20] sm:$0xf]
      %v980 = vld [vmem:[%s970 + $0x24] sm:$0xf]
      %v981 = vld [vmem:[%s970 + $0x28] sm:$0xf]
      %v982 = vld [vmem:[%s970 + $0x2c] sm:$0xf]
      %v983 = vld [vmem:[%s970 + $0x30] sm:$0xf]
      %v984 = vld [vmem:[%s970 + $0x34] sm:$0xf]
      %v985 = vld [vmem:[%s970 + $0x38] sm:$0xf]
      %v986 = vld [vmem:[%s970 + $0x3c] sm:$0xf]
      %v987 = vcombine.low %v412, %v426
      %v988 = vcombine.low %v440, %v969
      %v990 = vunpack.c.l.s4 1983009808
      %v991 = vunpack.c.0.s8 %v990
      %v992 = vlaneseq
      %v993 = vshrl.u32 %v992, 7
      %v994 = vsub.s32 %v991, %v993
      %v995 = vrot.slane %v987, %v994
      %v997 = vunpack.c.l.s4 1983009808
      %v998 = vunpack.c.0.s8 %v997
      %v999 = vlaneseq
      %v1000 = vshrl.u32 %v999, 7
      %v1001 = vsub.s32 %v998, %v1000
      %v1002 = vrot.slane %v988, %v1001
      %v1003 = vcombine.low %v995, %v1002
      %v1021 = vunpack.c.l.b16 %v971
      %v1022 = vunpack.c.l.b16 %v972
      %v1023 = vunpack.c.l.b16 %v973
      %v1024 = vunpack.c.l.b16 %v974
      %v1025 = vunpack.c.l.b16 %v975
      %v1026 = vunpack.c.l.b16 %v976
      %v1027 = vunpack.c.l.b16 %v977
      %v1028 = vunpack.c.l.b16 %v978
      %v1029 = vunpack.c.l.b16 %v979
      %v1030 = vunpack.c.l.b16 %v980
      %v1031 = vunpack.c.l.b16 %v981
      %v1032 = vunpack.c.l.b16 %v982
      %v1033 = vunpack.c.l.b16 %v983
      %v1034 = vunpack.c.l.b16 %v984
      %v1035 = vunpack.c.l.b16 %v985
      %v1036 = vunpack.c.l.b16 %v986
      %v1037 = vpack.c.b16 %v1022, %v1021
      %v1038 = vpack.c.b16 %v1024, %v1023
      %v1039 = vpack.c.b16 %v1026, %v1025
      %v1040 = vpack.c.b16 %v1028, %v1027
      %v1041 = vpack.c.b16 %v1030, %v1029
      %v1042 = vpack.c.b16 %v1032, %v1031
      %v1043 = vpack.c.b16 %v1034, %v1033
      %v1044 = vpack.c.b16 %v1036, %v1035
      %1053 = vmatprep.subr.bf16.mxu0 0
      %1054 = vmatpush1.bf16.msra.mxu0 %v1044
      %1055 = vmatprep.subr.bf16.mxu0 0
      %1056 = vmatpush1.bf16.msra.mxu0 %v1043
      %1057 = vmatprep.subr.bf16.mxu0 0
      %1058 = vmatpush1.bf16.msra.mxu0 %v1042
      %1059 = vmatprep.subr.bf16.mxu0 0
      %1060 = vmatpush1.bf16.msra.mxu0 %v1041
      %1061 = vmatprep.subr.bf16.mxu0 0
      %1062 = vmatpush1.bf16.msra.mxu0 %v1040
      %1063 = vmatprep.subr.bf16.mxu0 0
      %1064 = vmatpush1.bf16.msra.mxu0 %v1039
      %1065 = vmatprep.subr.bf16.mxu0 0
      %1066 = vmatpush1.bf16.msra.mxu0 %v1038
      %1067 = vmatprep.subr.bf16.mxu0 0
      %1068 = vmatpush1.bf16.msra.mxu0 %v1037
      %1069 = vmatprep.subr.bf16.mxu0 0
      %1070 = vmatpush2.bf16.msra.mxu0 0
      %1071 = vmatprep.subr.bf16.mxu0 0
      %1072 = vmatpush2.bf16.msra.mxu0 0
      %1073 = vmatprep.subr.bf16.mxu0 0
      %1074 = vmatpush2.bf16.msra.mxu0 0
      %1075 = vmatprep.subr.bf16.mxu0 0
      %1076 = vmatpush2.bf16.msra.mxu0 0
      %1077 = vmatprep.subr.bf16.mxu0 0
      %1078 = vmatpush2.bf16.msra.mxu0 0
      %1079 = vmatprep.subr.bf16.mxu0 0
      %1080 = vmatpush2.bf16.msra.mxu0 0
      %1081 = vmatprep.subr.bf16.mxu0 0
      %1082 = vmatpush2.bf16.msra.mxu0 0
      %1083 = vmatprep.subr.bf16.mxu0 0
      %1084 = vmatpush2.bf16.msra.mxu0 0
      %1085 = vmatprep.mubr.bf16.mxu0 0
      %1086 = vmatmul.mubr.bf16.gmra.mxu0 %v1003
      %v1087 = vpop.f32.mrf.mxu0
      %v1088 = vadd.f32 0.0, %v1087
      %v1089 = vpop.f32.mrf.mxu0
      %v1090 = vpop.f32.mrf.mxu0
      %v1091 = vadd.f32 0.0, %v1090
      %v1092 = vpop.f32.mrf.mxu0
      %1093 = vdwg.mxu0
      %v1094 = vadd.f32 %v946, %v1088
      %v1095 = vadd.f32 %v947, %v1091
      %v1096 = vrot.slane %v954, 7
      %v1097 = vrot.slane %v1096, 2
      %v1098 = vrot.slane %v955, 7
      %v1099 = vsel %vm678, %v1097, %v1098
      %s1100 = scalar_lea.vmem %s4, 320
      %v1101 = vld [vmem:[%s1100] sm:$0xf]
      %v1102 = vld [vmem:[%s1100 + $0x4] sm:$0xf]
      %v1103 = vld [vmem:[%s1100 + $0x8] sm:$0xf]
      %v1104 = vld [vmem:[%s1100 + $0xc] sm:$0xf]
      %v1105 = vld [vmem:[%s1100 + $0x10] sm:$0xf]
      %v1106 = vld [vmem:[%s1100 + $0x14] sm:$0xf]
      %v1107 = vld [vmem:[%s1100 + $0x18] sm:$0xf]
      %v1108 = vld [vmem:[%s1100 + $0x1c] sm:$0xf]
      %v1109 = vld [vmem:[%s1100 + $0x20] sm:$0xf]
      %v1110 = vld [vmem:[%s1100 + $0x24] sm:$0xf]
      %v1111 = vld [vmem:[%s1100 + $0x28] sm:$0xf]
      %v1112 = vld [vmem:[%s1100 + $0x2c] sm:$0xf]
      %v1113 = vld [vmem:[%s1100 + $0x30] sm:$0xf]
      %v1114 = vld [vmem:[%s1100 + $0x34] sm:$0xf]
      %v1115 = vld [vmem:[%s1100 + $0x38] sm:$0xf]
      %v1116 = vld [vmem:[%s1100 + $0x3c] sm:$0xf]
      %v1117 = vcombine.low %v686, %v690
      %v1118 = vcombine.low %v694, %v1099
      %v1120 = vunpack.c.l.s4 1983009808
      %v1121 = vunpack.c.0.s8 %v1120
      %v1122 = vlaneseq
      %v1123 = vshrl.u32 %v1122, 7
      %v1124 = vsub.s32 %v1121, %v1123
      %v1125 = vrot.slane %v1117, %v1124
      %v1127 = vunpack.c.l.s4 1983009808
      %v1128 = vunpack.c.0.s8 %v1127
      %v1129 = vlaneseq
      %v1130 = vshrl.u32 %v1129, 7
      %v1131 = vsub.s32 %v1128, %v1130
      %v1132 = vrot.slane %v1118, %v1131
      %v1133 = vcombine.low %v1125, %v1132
      %v1151 = vunpack.c.l.b16 %v1101
      %v1152 = vunpack.c.l.b16 %v1102
      %v1153 = vunpack.c.l.b16 %v1103
      %v1154 = vunpack.c.l.b16 %v1104
      %v1155 = vunpack.c.l.b16 %v1105
      %v1156 = vunpack.c.l.b16 %v1106
      %v1157 = vunpack.c.l.b16 %v1107
      %v1158 = vunpack.c.l.b16 %v1108
      %v1159 = vunpack.c.l.b16 %v1109
      %v1160 = vunpack.c.l.b16 %v1110
      %v1161 = vunpack.c.l.b16 %v1111
      %v1162 = vunpack.c.l.b16 %v1112
      %v1163 = vunpack.c.l.b16 %v1113
      %v1164 = vunpack.c.l.b16 %v1114
      %v1165 = vunpack.c.l.b16 %v1115
      %v1166 = vunpack.c.l.b16 %v1116
      %v1167 = vpack.c.b16 %v1152, %v1151
      %v1168 = vpack.c.b16 %v1154, %v1153
      %v1169 = vpack.c.b16 %v1156, %v1155
      %v1170 = vpack.c.b16 %v1158, %v1157
      %v1171 = vpack.c.b16 %v1160, %v1159
      %v1172 = vpack.c.b16 %v1162, %v1161
      %v1173 = vpack.c.b16 %v1164, %v1163
      %v1174 = vpack.c.b16 %v1166, %v1165
      %1183 = vmatprep.subr.bf16.mxu0 0
      %1184 = vmatpush1.bf16.msra.mxu0 %v1174
      %1185 = vmatprep.subr.bf16.mxu0 0
      %1186 = vmatpush1.bf16.msra.mxu0 %v1173
      %1187 = vmatprep.subr.bf16.mxu0 0
      %1188 = vmatpush1.bf16.msra.mxu0 %v1172
      %1189 = vmatprep.subr.bf16.mxu0 0
      %1190 = vmatpush1.bf16.msra.mxu0 %v1171
      %1191 = vmatprep.subr.bf16.mxu0 0
      %1192 = vmatpush1.bf16.msra.mxu0 %v1170
      %1193 = vmatprep.subr.bf16.mxu0 0
      %1194 = vmatpush1.bf16.msra.mxu0 %v1169
      %1195 = vmatprep.subr.bf16.mxu0 0
      %1196 = vmatpush1.bf16.msra.mxu0 %v1168
      %1197 = vmatprep.subr.bf16.mxu0 0
      %1198 = vmatpush1.bf16.msra.mxu0 %v1167
      %1199 = vmatprep.subr.bf16.mxu0 0
      %1200 = vmatpush2.bf16.msra.mxu0 0
      %1201 = vmatprep.subr.bf16.mxu0 0
      %1202 = vmatpush2.bf16.msra.mxu0 0
      %1203 = vmatprep.subr.bf16.mxu0 0
      %1204 = vmatpush2.bf16.msra.mxu0 0
      %1205 = vmatprep.subr.bf16.mxu0 0
      %1206 = vmatpush2.bf16.msra.mxu0 0
      %1207 = vmatprep.subr.bf16.mxu0 0
      %1208 = vmatpush2.bf16.msra.mxu0 0
      %1209 = vmatprep.subr.bf16.mxu0 0
      %1210 = vmatpush2.bf16.msra.mxu0 0
      %1211 = vmatprep.subr.bf16.mxu0 0
      %1212 = vmatpush2.bf16.msra.mxu0 0
      %1213 = vmatprep.subr.bf16.mxu0 0
      %1214 = vmatpush2.bf16.msra.mxu0 0
      %1215 = vmatprep.mubr.bf16.mxu0 0
      %1216 = vmatmul.mubr.bf16.gmra.mxu0 %v1133
      %v1217 = vpop.f32.mrf.mxu0
      %v1218 = vadd.f32 0.0, %v1217
      %v1219 = vpop.f32.mrf.mxu0
      %v1220 = vpop.f32.mrf.mxu0
      %v1221 = vadd.f32 0.0, %v1220
      %v1222 = vpop.f32.mrf.mxu0
      %1223 = vdwg.mxu0
      %v1224 = vadd.f32 %v1094, %v1218
      %v1225 = vadd.f32 %v1095, %v1221
      %s1226 = scalar_lea.vmem %s4, 384
      %v1227 = vld [vmem:[%s1226] sm:$0xf]
      %v1228 = vld [vmem:[%s1226 + $0x4] sm:$0xf]
      %v1229 = vld [vmem:[%s1226 + $0x8] sm:$0xf]
      %v1230 = vld [vmem:[%s1226 + $0xc] sm:$0xf]
      %v1231 = vld [vmem:[%s1226 + $0x10] sm:$0xf]
      %v1232 = vld [vmem:[%s1226 + $0x14] sm:$0xf]
      %v1233 = vld [vmem:[%s1226 + $0x18] sm:$0xf]
      %v1234 = vld [vmem:[%s1226 + $0x1c] sm:$0xf]
      %v1235 = vld [vmem:[%s1226 + $0x20] sm:$0xf]
      %v1236 = vld [vmem:[%s1226 + $0x24] sm:$0xf]
      %v1237 = vld [vmem:[%s1226 + $0x28] sm:$0xf]
      %v1238 = vld [vmem:[%s1226 + $0x2c] sm:$0xf]
      %v1239 = vld [vmem:[%s1226 + $0x30] sm:$0xf]
      %v1240 = vld [vmem:[%s1226 + $0x34] sm:$0xf]
      %v1241 = vld [vmem:[%s1226 + $0x38] sm:$0xf]
      %v1242 = vld [vmem:[%s1226 + $0x3c] sm:$0xf]
      %v1244 = vcombine.low %v324, %v325
      %v1246 = vunpack.c.l.s4 1983009808
      %v1247 = vunpack.c.0.s8 %v1246
      %v1248 = vlaneseq
      %v1249 = vshrl.u32 %v1248, 7
      %v1250 = vsub.s32 %v1247, %v1249
      %v1251 = vrot.slane %v1244, %v1250
      %v1252 = vcombine.low %v580, %v1251
      %v1270 = vunpack.c.l.b16 %v1227
      %v1271 = vunpack.c.l.b16 %v1228
      %v1272 = vunpack.c.l.b16 %v1229
      %v1273 = vunpack.c.l.b16 %v1230
      %v1274 = vunpack.c.l.b16 %v1231
      %v1275 = vunpack.c.l.b16 %v1232
      %v1276 = vunpack.c.l.b16 %v1233
      %v1277 = vunpack.c.l.b16 %v1234
      %v1278 = vunpack.c.l.b16 %v1235
      %v1279 = vunpack.c.l.b16 %v1236
      %v1280 = vunpack.c.l.b16 %v1237
      %v1281 = vunpack.c.l.b16 %v1238
      %v1282 = vunpack.c.l.b16 %v1239
      %v1283 = vunpack.c.l.b16 %v1240
      %v1284 = vunpack.c.l.b16 %v1241
      %v1285 = vunpack.c.l.b16 %v1242
      %v1286 = vpack.c.b16 %v1271, %v1270
      %v1287 = vpack.c.b16 %v1273, %v1272
      %v1288 = vpack.c.b16 %v1275, %v1274
      %v1289 = vpack.c.b16 %v1277, %v1276
      %v1290 = vpack.c.b16 %v1279, %v1278
      %v1291 = vpack.c.b16 %v1281, %v1280
      %v1292 = vpack.c.b16 %v1283, %v1282
      %v1293 = vpack.c.b16 %v1285, %v1284
      %1302 = vmatprep.subr.bf16.mxu0 0
      %1303 = vmatpush1.bf16.msra.mxu0 %v1293
      %1304 = vmatprep.subr.bf16.mxu0 0
      %1305 = vmatpush1.bf16.msra.mxu0 %v1292
      %1306 = vmatprep.subr.bf16.mxu0 0
      %1307 = vmatpush1.bf16.msra.mxu0 %v1291
      %1308 = vmatprep.subr.bf16.mxu0 0
      %1309 = vmatpush1.bf16.msra.mxu0 %v1290
      %1310 = vmatprep.subr.bf16.mxu0 0
      %1311 = vmatpush1.bf16.msra.mxu0 %v1289
      %1312 = vmatprep.subr.bf16.mxu0 0
      %1313 = vmatpush1.bf16.msra.mxu0 %v1288
      %1314 = vmatprep.subr.bf16.mxu0 0
      %1315 = vmatpush1.bf16.msra.mxu0 %v1287
      %1316 = vmatprep.subr.bf16.mxu0 0
      %1317 = vmatpush1.bf16.msra.mxu0 %v1286
      %1318 = vmatprep.subr.bf16.mxu0 0
      %1319 = vmatpush2.bf16.msra.mxu0 0
      %1320 = vmatprep.subr.bf16.mxu0 0
      %1321 = vmatpush2.bf16.msra.mxu0 0
      %1322 = vmatprep.subr.bf16.mxu0 0
      %1323 = vmatpush2.bf16.msra.mxu0 0
      %1324 = vmatprep.subr.bf16.mxu0 0
      %1325 = vmatpush2.bf16.msra.mxu0 0
      %1326 = vmatprep.subr.bf16.mxu0 0
      %1327 = vmatpush2.bf16.msra.mxu0 0
      %1328 = vmatprep.subr.bf16.mxu0 0
      %1329 = vmatpush2.bf16.msra.mxu0 0
      %1330 = vmatprep.subr.bf16.mxu0 0
      %1331 = vmatpush2.bf16.msra.mxu0 0
      %1332 = vmatprep.subr.bf16.mxu0 0
      %1333 = vmatpush2.bf16.msra.mxu0 0
      %1334 = vmatprep.mubr.bf16.mxu0 0
      %1335 = vmatmul.mubr.bf16.gmra.mxu0 %v1252
      %v1336 = vpop.f32.mrf.mxu0
      %v1337 = vadd.f32 0.0, %v1336
      %v1338 = vpop.f32.mrf.mxu0
      %v1339 = vpop.f32.mrf.mxu0
      %v1340 = vadd.f32 0.0, %v1339
      %v1341 = vpop.f32.mrf.mxu0
      %1342 = vdwg.mxu0
      %v1343 = vadd.f32 %v1224, %v1337
      %v1344 = vadd.f32 %v1225, %v1340
      %v1346 = vunpack.c.l.s4 1983009808
      %v1347 = vunpack.c.0.s8 %v1346
      %v1348 = vlaneseq
      %v1349 = vshrl.u32 %v1348, 7
      %v1350 = vsub.s32 %v1347, %v1349
      %v1351 = vrot.slane %v325, %v1350
      %v1352 = vcombine.high %v1351, %v1351
      %v1354 = vshrl.u32 %v1351, 16
      %v1356 = vrot.slane %v1354, 6
      %v1357 = vshll.u32 %v1351, 16
      %v1359 = vrot.slane %v1357, 7
      %v1360 = vor.u32 %v1356, %v1359
      %v1361 = vrot.slane %v1360, 2
      %v1363 = vshll.u32 %v1352, 16
      %v1365 = vrot.slane %v1363, 7
      %v1366 = vsel %vm384, %v1361, %v1365
      %s1367 = scalar_lea.vmem %s4, 448
      %v1368 = vld [vmem:[%s1367] sm:$0xf]
      %v1369 = vld [vmem:[%s1367 + $0x4] sm:$0xf]
      %v1370 = vld [vmem:[%s1367 + $0x8] sm:$0xf]
      %v1371 = vld [vmem:[%s1367 + $0xc] sm:$0xf]
      %v1372 = vld [vmem:[%s1367 + $0x10] sm:$0xf]
      %v1373 = vld [vmem:[%s1367 + $0x14] sm:$0xf]
      %v1374 = vld [vmem:[%s1367 + $0x18] sm:$0xf]
      %v1375 = vld [vmem:[%s1367 + $0x1c] sm:$0xf]
      %v1376 = vld [vmem:[%s1367 + $0x20] sm:$0xf]
      %v1377 = vld [vmem:[%s1367 + $0x24] sm:$0xf]
      %v1378 = vld [vmem:[%s1367 + $0x28] sm:$0xf]
      %v1379 = vld [vmem:[%s1367 + $0x2c] sm:$0xf]
      %v1380 = vld [vmem:[%s1367 + $0x30] sm:$0xf]
      %v1381 = vld [vmem:[%s1367 + $0x34] sm:$0xf]
      %v1382 = vld [vmem:[%s1367 + $0x38] sm:$0xf]
      %v1383 = vld [vmem:[%s1367 + $0x3c] sm:$0xf]
      %v1384 = vcombine.low %v969, %v1366
      %v1386 = vunpack.c.l.s4 1983009808
      %v1387 = vunpack.c.0.s8 %v1386
      %v1388 = vlaneseq
      %v1389 = vshrl.u32 %v1388, 7
      %v1390 = vsub.s32 %v1387, %v1389
      %v1391 = vrot.slane %v1384, %v1390
      %v1392 = vcombine.low %v473, %v1391
      %v1410 = vunpack.c.l.b16 %v1368
      %v1411 = vunpack.c.l.b16 %v1369
      %v1412 = vunpack.c.l.b16 %v1370
      %v1413 = vunpack.c.l.b16 %v1371
      %v1414 = vunpack.c.l.b16 %v1372
      %v1415 = vunpack.c.l.b16 %v1373
      %v1416 = vunpack.c.l.b16 %v1374
      %v1417 = vunpack.c.l.b16 %v1375
      %v1418 = vunpack.c.l.b16 %v1376
      %v1419 = vunpack.c.l.b16 %v1377
      %v1420 = vunpack.c.l.b16 %v1378
      %v1421 = vunpack.c.l.b16 %v1379
      %v1422 = vunpack.c.l.b16 %v1380
      %v1423 = vunpack.c.l.b16 %v1381
      %v1424 = vunpack.c.l.b16 %v1382
      %v1425 = vunpack.c.l.b16 %v1383
      %v1426 = vpack.c.b16 %v1411, %v1410
      %v1427 = vpack.c.b16 %v1413, %v1412
      %v1428 = vpack.c.b16 %v1415, %v1414
      %v1429 = vpack.c.b16 %v1417, %v1416
      %v1430 = vpack.c.b16 %v1419, %v1418
      %v1431 = vpack.c.b16 %v1421, %v1420
      %v1432 = vpack.c.b16 %v1423, %v1422
      %v1433 = vpack.c.b16 %v1425, %v1424
      %1442 = vmatprep.subr.bf16.mxu0 0
      %1443 = vmatpush1.bf16.msra.mxu0 %v1433
      %1444 = vmatprep.subr.bf16.mxu0 0
      %1445 = vmatpush1.bf16.msra.mxu0 %v1432
      %1446 = vmatprep.subr.bf16.mxu0 0
      %1447 = vmatpush1.bf16.msra.mxu0 %v1431
      %1448 = vmatprep.subr.bf16.mxu0 0
      %1449 = vmatpush1.bf16.msra.mxu0 %v1430
      %1450 = vmatprep.subr.bf16.mxu0 0
      %1451 = vmatpush1.bf16.msra.mxu0 %v1429
      %1452 = vmatprep.subr.bf16.mxu0 0
      %1453 = vmatpush1.bf16.msra.mxu0 %v1428
      %1454 = vmatprep.subr.bf16.mxu0 0
      %1455 = vmatpush1.bf16.msra.mxu0 %v1427
      %1456 = vmatprep.subr.bf16.mxu0 0
      %1457 = vmatpush1.bf16.msra.mxu0 %v1426
      %1458 = vmatprep.subr.bf16.mxu0 0
      %1459 = vmatpush2.bf16.msra.mxu0 0
      %1460 = vmatprep.subr.bf16.mxu0 0
      %1461 = vmatpush2.bf16.msra.mxu0 0
      %1462 = vmatprep.subr.bf16.mxu0 0
      %1463 = vmatpush2.bf16.msra.mxu0 0
      %1464 = vmatprep.subr.bf16.mxu0 0
      %1465 = vmatpush2.bf16.msra.mxu0 0
      %1466 = vmatprep.subr.bf16.mxu0 0
      %1467 = vmatpush2.bf16.msra.mxu0 0
      %1468 = vmatprep.subr.bf16.mxu0 0
      %1469 = vmatpush2.bf16.msra.mxu0 0
      %1470 = vmatprep.subr.bf16.mxu0 0
      %1471 = vmatpush2.bf16.msra.mxu0 0
      %1472 = vmatprep.subr.bf16.mxu0 0
      %1473 = vmatpush2.bf16.msra.mxu0 0
      %1474 = vmatprep.mubr.bf16.mxu0 0
      %1475 = vmatmul.mubr.bf16.gmra.mxu0 %v1392
      %v1476 = vpop.f32.mrf.mxu0
      %v1477 = vadd.f32 0.0, %v1476
      %v1478 = vpop.f32.mrf.mxu0
      %v1479 = vpop.f32.mrf.mxu0
      %v1480 = vadd.f32 0.0, %v1479
      %v1481 = vpop.f32.mrf.mxu0
      %1482 = vdwg.mxu0
      %v1483 = vadd.f32 %v1343, %v1477
      %v1484 = vadd.f32 %v1344, %v1480
      %v1485 = vrot.slane %v1351, 7
      %v1486 = vrot.slane %v1485, 2
      %v1487 = vrot.slane %v1352, 7
      %v1488 = vsel %vm678, %v1486, %v1487
      %s1489 = scalar_lea.vmem %s4, 512
      %v1490 = vld [vmem:[%s1489] sm:$0xf]
      %v1491 = vld [vmem:[%s1489 + $0x4] sm:$0xf]
      %v1492 = vld [vmem:[%s1489 + $0x8] sm:$0xf]
      %v1493 = vld [vmem:[%s1489 + $0xc] sm:$0xf]
      %v1494 = vld [vmem:[%s1489 + $0x10] sm:$0xf]
      %v1495 = vld [vmem:[%s1489 + $0x14] sm:$0xf]
      %v1496 = vld [vmem:[%s1489 + $0x18] sm:$0xf]
      %v1497 = vld [vmem:[%s1489 + $0x1c] sm:$0xf]
      %v1498 = vld [vmem:[%s1489 + $0x20] sm:$0xf]
      %v1499 = vld [vmem:[%s1489 + $0x24] sm:$0xf]
      %v1500 = vld [vmem:[%s1489 + $0x28] sm:$0xf]
      %v1501 = vld [vmem:[%s1489 + $0x2c] sm:$0xf]
      %v1502 = vld [vmem:[%s1489 + $0x30] sm:$0xf]
      %v1503 = vld [vmem:[%s1489 + $0x34] sm:$0xf]
      %v1504 = vld [vmem:[%s1489 + $0x38] sm:$0xf]
      %v1505 = vld [vmem:[%s1489 + $0x3c] sm:$0xf]
      %v1506 = vcombine.low %v1099, %v1488
      %v1508 = vunpack.c.l.s4 1983009808
      %v1509 = vunpack.c.0.s8 %v1508
      %v1510 = vlaneseq
      %v1511 = vshrl.u32 %v1510, 7
      %v1512 = vsub.s32 %v1509, %v1511
      %v1513 = vrot.slane %v1506, %v1512
      %v1514 = vcombine.low %v727, %v1513
      %v1532 = vunpack.c.l.b16 %v1490
      %v1533 = vunpack.c.l.b16 %v1491
      %v1534 = vunpack.c.l.b16 %v1492
      %v1535 = vunpack.c.l.b16 %v1493
      %v1536 = vunpack.c.l.b16 %v1494
      %v1537 = vunpack.c.l.b16 %v1495
      %v1538 = vunpack.c.l.b16 %v1496
      %v1539 = vunpack.c.l.b16 %v1497
      %v1540 = vunpack.c.l.b16 %v1498
      %v1541 = vunpack.c.l.b16 %v1499
      %v1542 = vunpack.c.l.b16 %v1500
      %v1543 = vunpack.c.l.b16 %v1501
      %v1544 = vunpack.c.l.b16 %v1502
      %v1545 = vunpack.c.l.b16 %v1503
      %v1546 = vunpack.c.l.b16 %v1504
      %v1547 = vunpack.c.l.b16 %v1505
      %v1548 = vpack.c.b16 %v1533, %v1532
      %v1549 = vpack.c.b16 %v1535, %v1534
      %v1550 = vpack.c.b16 %v1537, %v1536
      %v1551 = vpack.c.b16 %v1539, %v1538
      %v1552 = vpack.c.b16 %v1541, %v1540
      %v1553 = vpack.c.b16 %v1543, %v1542
      %v1554 = vpack.c.b16 %v1545, %v1544
      %v1555 = vpack.c.b16 %v1547, %v1546
      %1564 = vmatprep.subr.bf16.mxu0 0
      %1565 = vmatpush1.bf16.msra.mxu0 %v1555
      %1566 = vmatprep.subr.bf16.mxu0 0
      %1567 = vmatpush1.bf16.msra.mxu0 %v1554
      %1568 = vmatprep.subr.bf16.mxu0 0
      %1569 = vmatpush1.bf16.msra.mxu0 %v1553
      %1570 = vmatprep.subr.bf16.mxu0 0
      %1571 = vmatpush1.bf16.msra.mxu0 %v1552
      %1572 = vmatprep.subr.bf16.mxu0 0
      %1573 = vmatpush1.bf16.msra.mxu0 %v1551
      %1574 = vmatprep.subr.bf16.mxu0 0
      %1575 = vmatpush1.bf16.msra.mxu0 %v1550
      %1576 = vmatprep.subr.bf16.mxu0 0
      %1577 = vmatpush1.bf16.msra.mxu0 %v1549
      %1578 = vmatprep.subr.bf16.mxu0 0
      %1579 = vmatpush1.bf16.msra.mxu0 %v1548
      %1580 = vmatprep.subr.bf16.mxu0 0
      %1581 = vmatpush2.bf16.msra.mxu0 0
      %1582 = vmatprep.subr.bf16.mxu0 0
      %1583 = vmatpush2.bf16.msra.mxu0 0
      %1584 = vmatprep.subr.bf16.mxu0 0
      %1585 = vmatpush2.bf16.msra.mxu0 0
      %1586 = vmatprep.subr.bf16.mxu0 0
      %1587 = vmatpush2.bf16.msra.mxu0 0
      %1588 = vmatprep.subr.bf16.mxu0 0
      %1589 = vmatpush2.bf16.msra.mxu0 0
      %1590 = vmatprep.subr.bf16.mxu0 0
      %1591 = vmatpush2.bf16.msra.mxu0 0
      %1592 = vmatprep.subr.bf16.mxu0 0
      %1593 = vmatpush2.bf16.msra.mxu0 0
      %1594 = vmatprep.subr.bf16.mxu0 0
      %1595 = vmatpush2.bf16.msra.mxu0 0
      %1596 = vmatprep.mubr.bf16.mxu0 0
      %1597 = vmatmul.mubr.bf16.gmra.mxu0 %v1514
      %v1598 = vpop.f32.mrf.mxu0
      %v1599 = vadd.f32 0.0, %v1598
      %v1600 = vpop.f32.mrf.mxu0
      %v1601 = vpop.f32.mrf.mxu0
      %v1602 = vadd.f32 0.0, %v1601
      %v1603 = vpop.f32.mrf.mxu0
      %1604 = vdwg.mxu0
      %v1605 = vadd.f32 %v1483, %v1599
      %v1606 = vadd.f32 %v1484, %v1602
      %v1609 = vcombine.high %v1605, %v1605
      %v1610 = vcombine.high %v1606, %v1606
      %v1613 = vpack.c.bf16 %v1605, %v1605
      %v1614 = vpack.c.bf16 %v1609, %v1609
      %v1615 = vpack.c.bf16 %v1606, %v1606
      %v1616 = vpack.c.bf16 %v1610, %v1610
      %1617 = vst [vmem:[%s258] sm:$0x3] %v1613
      %1618 = vst [vmem:[%s258 + $0x2] sm:$0x3] %v1614
      %1619 = vst [vmem:[%s258 + $0x4] sm:$0x3] %v1615
      %1620 = vst [vmem:[%s258 + $0x6] sm:$0x3] %v1616
      %v1621 = vadd.f32 %v1605, %v1606
      %v1622 = vrot.slane %v1621, 4
      %v1623 = vadd.f32 %v1621, %v1622
      %v1624 = vrot.slane %v1623, 2
      %v1625 = vadd.f32 %v1623, %v1624
      %v1626 = vrot.slane %v1625, 1
      %v1627 = vadd.f32 %v1625, %v1626
      %1628 = vst [vmem:[%s262] sm:$0x1] %v1627
      %v1629 = vmul.f32 %v1605, %v1605
      %v1630 = vmul.f32 %v1606, %v1606
      %v1631 = vadd.f32 %v1629, %v1630
      %v1632 = vrot.slane %v1631, 4
      %v1633 = vadd.f32 %v1631, %v1632
      %v1634 = vrot.slane %v1633, 2
      %v1635 = vadd.f32 %v1633, %v1634
      %v1636 = vrot.slane %v1635, 1
      %v1637 = vadd.f32 %v1635, %v1636
      %1638 = vst [vmem:[%s262 + $0x1] sm:$0x1] %v1637
      %p1639 = scmp.lt.s32.totalorder %s18, 1
      %s1640 = scalar_select %p1639, %s18, 1
      %s1641 = smul.addr %s1640, 4
      %s1642 = smul.addr %s1641, 2
      %s1643 = scalar_lea.vmem %s5, %s1642
      %p1644 = scmp.lt.s32.totalorder %s18, 1
      %s1645 = scalar_select %p1644, %s18, 1
      %s1646 = smul.addr %s1645, 2
      %s1647 = scalar_lea.vmem %s6, %s1646
      // Predicated region
      $region41: #{down_forward.4} parent=39 // pred_check
        %p1648 = pneg %p146
      $region42: #{down_forward.4} parent=39 // pred_check_branch
        %1650 = sbr.rel (%p1648) target = $region44
      $region43: #{down_forward.4} parent=39 // pred_region
        _
      $region44: #{down_forward.4} parent=39 // pred_fallthru
        _
      // Predicated region
      $region45: #{down_forward.4} parent=39 // pred_check
        %p1651 = pneg %p172
      $region46: #{down_forward.4} parent=39 // pred_check_branch
        %1653 = sbr.rel (%p1651) target = $region48
      $region47: #{down_forward.4} parent=39 // pred_region
        _
      $region48: #{down_forward.4} parent=39 // pred_fallthru
        _
    $region40: #{down_forward.4} parent=5 // pred_fallthru
      _
    %p1654 = scmp.le.s32.totalorder 2, %s13
    // Predicated region
    $region49: #{down_forward.4} parent=5 // pred_check
      %p1655 = pneg %p1654
    $region50: #{down_forward.4} parent=5 // pred_check_branch
      %1657 = sbr.rel (%p1655) target = $region52
    $region51: #{down_forward.4} parent=5 // pred_region
      %s1658 = ssub.s32 %s13, 2
      // Predicated region
      $region53: #{down_forward.4} parent=51 // pred_check
        %p1659 = pneg %p152
      $region54: #{down_forward.4} parent=51 // pred_check_branch
        %1661 = sbr.rel (%p1659) target = $region56
      $region55: #{down_forward.4} parent=51 // pred_region
        %p1662 = scmp.lt.s32.totalorder %s19, 1
        %s1663 = scalar_select %p1662, %s19, 1
        %s1664 = smul.addr %s1663, 4
        %s1665 = smul.addr %s1664, 2
        %s1666 = scalar_lea.vmem %s5, %s1665
      $region56: #{down_forward.4} parent=51 // pred_fallthru
        _
      // Predicated region
      $region57: #{down_forward.4} parent=51 // pred_check
        %p1667 = pneg %p178
      $region58: #{down_forward.4} parent=51 // pred_check_branch
        %1669 = sbr.rel (%p1667) target = $region60
      $region59: #{down_forward.4} parent=51 // pred_region
        %p1670 = scmp.lt.s32.totalorder %s19, 1
        %s1671 = scalar_select %p1670, %s19, 1
        %s1672 = smul.addr %s1671, 2
        %s1673 = scalar_lea.vmem %s6, %s1672
      $region60: #{down_forward.4} parent=51 // pred_fallthru
        _
    $region52: #{down_forward.4} parent=5 // pred_fallthru
      _
  $region6: #{down_forward.4} parent=0 // loop_footer
    %s17 = sadd.s32 1, %s13
  $region7: #{down_forward.4} parent=0 // loop_footer_branch
    %12 = sbr.rel target = $region3
  $region8: #{down_forward.4} parent=0 // loop_exit
    _

</llo_original>
